<compile_context>
chip_gen: v7x
topology: tpu7x:2x2x1
jax: 0.10.0
libtpu: 0.0.40
codegen_flags: <defaults>
</compile_context>

<pallas_src>
import math
from functools import partial

import jax
import jax.numpy as jnp
from jax import lax
from jax.experimental import pallas as pl
from jax.experimental.pallas import tpu as pltpu

# ---- small synthetic BERT config (stands in for bert-base-uncased) ----------
VOCAB = 100
HIDDEN = 32
NUM_HEADS = 4
HEAD_DIM = HIDDEN // NUM_HEADS
NUM_LAYERS = 2
INTERMEDIATE = 64
MAX_POS = 16
TYPE_VOCAB = 2
NUM_LABELS = 2
LN_EPS = 1e-12

# MXU operand dtype: bf16 operands, f32 accumulation (preferred_element_type).
MATMUL_DTYPE = jnp.bfloat16

_VMEM = pl.BlockSpec(memory_space=pltpu.MemorySpace.VMEM)


# ----------------------------- in-kernel helpers ------------------------------
def _ln(x, g, b):
    """LayerNorm over the last (lane) axis, f32 statistics."""
    mu = jnp.mean(x, axis=-1, keepdims=True)
    var = jnp.mean(jnp.square(x - mu), axis=-1, keepdims=True)
    return (x - mu) * jax.lax.rsqrt(var + LN_EPS) * g + b


def _gelu_tanh(x):
    """tanh-approximation GELU (EUP tanh instead of a VALU erf polynomial)."""
    c = math.sqrt(2.0 / math.pi)
    return 0.5 * x * (1.0 + jnp.tanh(c * (x + 0.044715 * x * x * x)))


# ----------------------------- Pallas kernels --------------------------------
def _embed_ln_kernel(word_ref, pos_ref, type_ref, g_ref, b_ref, o_ref):
    # fused: word_emb + pos_emb + type_emb -> LayerNorm (broadcast adds only).
    x = (word_ref[...]                                   # (B, S, H)
         + pos_ref[...][None, :, :]                      # (1, S, H) bcast over B
         + type_ref[...][None, :, :])                    # (1, 1, H) bcast over B, S
    o_ref[...] = _ln(x, g_ref[...], b_ref[...]).astype(o_ref.dtype)


def _encoder_layer_kernel(x_ref, mask_ref,
                          qkv_w_ref, qkv_b_ref,
                          ao_w_ref, ao_b_ref, ao_g_ref, ao_beta_ref,
                          f1_w_ref, f1_b_ref, f2_w_ref, f2_b_ref,
                          fg_ref, fb_ref,
                          *rest, with_head):
    if with_head:
        (pool_w_ref, pool_b_ref, cls_w_ref, cls_b_ref,
         out_ref, prob_ref, logits_ref) = rest
    else:
        out_ref, prob_ref = rest

    x = x_ref[0]                                         # (S, H) f32, this batch row
    mask = mask_ref[0]                                   # (1, S) additive mask

    # ---- fused Q/K/V projection: one MXU matmul (N = 3*HIDDEN), bf16 ops ----
    qkv = jnp.dot(x.astype(MATMUL_DTYPE), qkv_w_ref[...],
                  preferred_element_type=jnp.float32) + qkv_b_ref[...]

    scale = 1.0 / math.sqrt(HEAD_DIM)
    ctx_heads = []
    for h in range(NUM_HEADS):   # small per-sequence unroll; batch is a grid axis
        c0 = h * HEAD_DIM
        q_h = qkv[:, c0:c0 + HEAD_DIM].astype(MATMUL_DTYPE)
        k_h = qkv[:, HIDDEN + c0:HIDDEN + c0 + HEAD_DIM].astype(MATMUL_DTYPE)
        v_h = qkv[:, 2 * HIDDEN + c0:2 * HIDDEN + c0 + HEAD_DIM].astype(MATMUL_DTYPE)

        # q @ k^T via dot_general contracting last dims -> no XLU transpose
        s = lax.dot_general(q_h, k_h, (((1,), (1,)), ((), ())),
                            preferred_element_type=jnp.float32) * scale
        s = s + mask                                     # mask over keys
        s = s - jnp.max(s, axis=-1, keepdims=True)
        p = jnp.exp(s)
        p = p / jnp.sum(p, axis=-1, keepdims=True)       # exact softmax (rows sum to 1)
        prob_ref[0, h, :, :] = p.astype(prob_ref.dtype)  # attention probs out
        ctx_heads.append(jnp.dot(p.astype(MATMUL_DTYPE), v_h,
                                 preferred_element_type=jnp.float32))

    # merge heads as one lane-dense value (no masked per-head scratch stores)
    ctx = jnp.concatenate(ctx_heads, axis=-1)            # (S, H) f32

    # ---- attention output projection + residual + LayerNorm ----
    attn_out = jnp.dot(ctx.astype(MATMUL_DTYPE), ao_w_ref[...],
                       preferred_element_type=jnp.float32) + ao_b_ref[...]
    x1 = _ln(attn_out + x, ao_g_ref[...], ao_beta_ref[...])

    # ---- FFN (tanh-GELU) + residual + LayerNorm ----
    inter = jnp.dot(x1.astype(MATMUL_DTYPE), f1_w_ref[...],
                    preferred_element_type=jnp.float32) + f1_b_ref[...]
    inter = _gelu_tanh(inter)
    ffn_out = jnp.dot(inter.astype(MATMUL_DTYPE), f2_w_ref[...],
                      preferred_element_type=jnp.float32) + f2_b_ref[...]
    x2 = _ln(ffn_out + x1, fg_ref[...], fb_ref[...])
    out_ref[0] = x2.astype(out_ref.dtype)

    if with_head:
        # fused pooler(tanh) + classifier on this sequence's [CLS] row
        cls = x2[0:1, :].astype(MATMUL_DTYPE)            # (1, H)
        pooled = jnp.tanh(jnp.dot(cls, pool_w_ref[...],
                                  preferred_element_type=jnp.float32)
                          + pool_b_ref[...])
        logits = jnp.dot(pooled.astype(MATMUL_DTYPE), cls_w_ref[...],
                         preferred_element_type=jnp.float32) + cls_b_ref[...]
        # dropout (classifier-internal + outer self.dropout) -> identity at inference
        logits_ref[0] = logits.astype(logits_ref.dtype)


# ----------------------------- parameters ------------------------------------
def init_params(key):
    keys = iter(jax.random.split(key, 64))

    def nrm(shape):
        return 0.02 * jax.random.normal(next(keys), shape, jnp.float32)

    def dense(fan_in, fan_out):
        return {"w": nrm((fan_in, fan_out)), "b": jnp.zeros((fan_out,), jnp.float32)}

    params = {
        "word_emb": nrm((VOCAB, HIDDEN)),
        "pos_emb": nrm((MAX_POS, HIDDEN)),
        "type_emb": nrm((TYPE_VOCAB, HIDDEN)),
        "emb_ln_g": jnp.ones((HIDDEN,), jnp.float32),
        "emb_ln_b": jnp.zeros((HIDDEN,), jnp.float32),
        "layers": [],
        "pooler": dense(HIDDEN, HIDDEN),
        "cls": dense(HIDDEN, NUM_LABELS),
    }
    for _ in range(NUM_LAYERS):
        params["layers"].append({
            "qkv": dense(HIDDEN, 3 * HIDDEN),      # pre-fused Q/K/V projection
            "ao": dense(HIDDEN, HIDDEN),
            "ao_ln_g": jnp.ones((HIDDEN,), jnp.float32),
            "ao_ln_b": jnp.zeros((HIDDEN,), jnp.float32),
            "ffn1": dense(HIDDEN, INTERMEDIATE),
            "ffn2": dense(INTERMEDIATE, HIDDEN),
            "ffn_ln_g": jnp.ones((HIDDEN,), jnp.float32),
            "ffn_ln_b": jnp.zeros((HIDDEN,), jnp.float32),
        })
    return params


# ----------------------------- encoder-layer launcher -------------------------
def _resident(shape):
    """Weight BlockSpec: full array, constant index_map -> resident across grid."""
    zeros = (0,) * len(shape)
    return pl.BlockSpec(shape, lambda b: zeros)


def _layer_call(x, addmask, layer, params, with_head, B, S):
    mm = lambda w: w.astype(MATMUL_DTYPE)      # bf16 MXU operands
    row = lambda v: v.reshape(1, -1)           # f32 biases / LN params as (1, X)

    in_specs = [
        pl.BlockSpec((1, S, HIDDEN), lambda b: (b, 0, 0)),        # x (per batch row)
        pl.BlockSpec((1, 1, S), lambda b: (b, 0, 0)),             # additive mask
        _resident((HIDDEN, 3 * HIDDEN)), _resident((1, 3 * HIDDEN)),
        _resident((HIDDEN, HIDDEN)), _resident((1, HIDDEN)),
        _resident((1, HIDDEN)), _resident((1, HIDDEN)),
        _resident((HIDDEN, INTERMEDIATE)), _resident((1, INTERMEDIATE)),
        _resident((INTERMEDIATE, HIDDEN)), _resident((1, HIDDEN)),
        _resident((1, HIDDEN)), _resident((1, HIDDEN)),
    ]
    args = [
        x, addmask,
        mm(layer["qkv"]["w"]), row(layer["qkv"]["b"]),
        mm(layer["ao"]["w"]), row(layer["ao"]["b"]),
        row(layer["ao_ln_g"]), row(layer["ao_ln_b"]),
        mm(layer["ffn1"]["w"]), row(layer["ffn1"]["b"]),
        mm(layer["ffn2"]["w"]), row(layer["ffn2"]["b"]),
        row(layer["ffn_ln_g"]), row(layer["ffn_ln_b"]),
    ]
    out_shape = [
        jax.ShapeDtypeStruct((B, S, HIDDEN), jnp.float32),
        jax.ShapeDtypeStruct((B, NUM_HEADS, S, S), jnp.float32),
    ]
    out_specs = [
        pl.BlockSpec((1, S, HIDDEN), lambda b: (b, 0, 0)),
        pl.BlockSpec((1, NUM_HEADS, S, S), lambda b: (b, 0, 0, 0)),
    ]
    if with_head:
        in_specs += [_resident((HIDDEN, HIDDEN)), _resident((1, HIDDEN)),
                     _resident((HIDDEN, NUM_LABELS)), _resident((1, NUM_LABELS))]
        args += [mm(params["pooler"]["w"]), row(params["pooler"]["b"]),
                 mm(params["cls"]["w"]), row(params["cls"]["b"])]
        out_shape.append(jax.ShapeDtypeStruct((B, 1, NUM_LABELS), jnp.float32))
        out_specs.append(pl.BlockSpec((1, 1, NUM_LABELS), lambda b: (b, 0, 0)))

    flops = B * (2 * S * HIDDEN * 3 * HIDDEN            # fused QKV
                 + 4 * NUM_HEADS * S * S * HEAD_DIM     # scores + context
                 + 2 * S * HIDDEN * HIDDEN              # attn output proj
                 + 4 * S * HIDDEN * INTERMEDIATE)       # FFN1 + FFN2
    transcendentals = B * (NUM_HEADS * S * S + S * INTERMEDIATE)
    weight_bytes = 2 * (3 * HIDDEN * HIDDEN + HIDDEN * HIDDEN
                        + 2 * HIDDEN * INTERMEDIATE)
    bytes_accessed = (4 * (2 * B * S * HIDDEN + B * NUM_HEADS * S * S + B * S)
                      + weight_bytes)

    return pl.pallas_call(
        partial(_encoder_layer_kernel, with_head=with_head),
        grid=(B,),
        out_shape=tuple(out_shape),
        in_specs=in_specs,
        out_specs=tuple(out_specs),
        compiler_params=pltpu.CompilerParams(
            dimension_semantics=("parallel",),          # megacore sharding on v7x
            vmem_limit_bytes=32 * 1024 * 1024),
        cost_estimate=pl.CostEstimate(flops=int(flops),
                                      transcendentals=int(transcendentals),
                                      bytes_accessed=int(bytes_accessed)),
    )(*args)


# ----------------------------- forward pass -----------------------------------
def bert_classifier_forward(params, input_ids, attention_mask):
    B, S = input_ids.shape

    # token gather stays in XLA (glue); sum + LayerNorm fused in-kernel.
    word = params["word_emb"][input_ids]                               # (B, S, H)
    x = pl.pallas_call(
        _embed_ln_kernel,
        out_shape=jax.ShapeDtypeStruct((B, S, HIDDEN), jnp.float32),
        in_specs=[_VMEM] * 5,
        out_specs=_VMEM,
    )(word,
      params["pos_emb"][:S],
      params["type_emb"][0:1],          # token_type_ids default to 0 in this forward
      params["emb_ln_g"].reshape(1, HIDDEN),
      params["emb_ln_b"].reshape(1, HIDDEN))

    # BERT-style additive mask: 0 where attended, -10000 where masked
    addmask = ((1.0 - attention_mask.astype(jnp.float32)) * -10000.0
               ).reshape(B, 1, S)

    attentions = []
    logits3 = None
    n_layers = len(params["layers"])
    for li, layer in enumerate(params["layers"]):
        last = (li == n_layers - 1)
        outs = _layer_call(x, addmask, layer, params, last, B, S)
        if last:
            x, probs, logits3 = outs
        else:
            x, probs = outs
        attentions.append(probs)

    logits = logits3.reshape(B, NUM_LABELS)
    return logits, tuple(attentions)


# ----------------------------------- main -------------------------------------
if __name__ == "__main__":
    key = jax.random.PRNGKey(0)
    kp, ki = jax.random.split(key)
    params = init_params(kp)

    B, S = 2, 8
    input_ids = jax.random.randint(ki, (B, S), 0, VOCAB, dtype=jnp.int32)
    attention_mask = jnp.ones((B, S), dtype=jnp.int32)

    fwd = jax.jit(bert_classifier_forward)
    logits, attentions = fwd(params, input_ids, attention_mask)
    jax.block_until_ready((logits, attentions))

    assert logits.shape == (B, NUM_LABELS)
    assert len(attentions) == NUM_LAYERS
    assert attentions[0].shape == (B, NUM_HEADS, S, S)
    assert bool(jnp.all(jnp.isfinite(logits)))
    print("KERNEL_OK")
</pallas_src>

<mosaic_0001>
module attributes {stable_mosaic.version = 11 : i64} {
  func.func @_embed_ln_kernel(%arg0: memref<2x8x32xf32, #tpu.memory_space<vmem>>, %arg1: memref<8x32xf32, #tpu.memory_space<vmem>>, %arg2: memref<1x32xf32, #tpu.memory_space<vmem>>, %arg3: memref<1x32xf32, #tpu.memory_space<vmem>>, %arg4: memref<1x32xf32, #tpu.memory_space<vmem>>, %arg5: memref<2x8x32xf32, #tpu.memory_space<vmem>>) attributes {dimension_semantics = [], scalar_prefetch = 0 : i64, scratch_operands = 0 : i64, tpu.core_type = #tpu.core_type<tc>} {
    %c0 = arith.constant 0 : index
    %c0_0 = arith.constant 0 : index
    %c0_1 = arith.constant 0 : index
    %0 = vector.load %arg0[%c0, %c0_0, %c0_1] : memref<2x8x32xf32, #tpu.memory_space<vmem>>, vector<2x8x32xf32>
    %c0_2 = arith.constant 0 : index
    %c0_3 = arith.constant 0 : index
    %1 = vector.load %arg1[%c0_2, %c0_3] : memref<8x32xf32, #tpu.memory_space<vmem>>, vector<8x32xf32>
    %2 = vector.shape_cast %1 : vector<8x32xf32> to vector<1x8x32xf32>
    %3 = vector.broadcast %2 : vector<1x8x32xf32> to vector<2x8x32xf32>
    %4 = arith.addf %0, %3 : vector<2x8x32xf32>
    %c0_4 = arith.constant 0 : index
    %c0_5 = arith.constant 0 : index
    %5 = vector.load %arg2[%c0_4, %c0_5] : memref<1x32xf32, #tpu.memory_space<vmem>>, vector<1x32xf32>
    %6 = vector.shape_cast %5 : vector<1x32xf32> to vector<1x1x32xf32>
    %7 = vector.broadcast %6 : vector<1x1x32xf32> to vector<2x8x32xf32>
    %8 = arith.addf %4, %7 : vector<2x8x32xf32>
    %c0_6 = arith.constant 0 : index
    %c0_7 = arith.constant 0 : index
    %9 = vector.load %arg3[%c0_6, %c0_7] : memref<1x32xf32, #tpu.memory_space<vmem>>, vector<1x32xf32>
    %c0_8 = arith.constant 0 : index
    %c0_9 = arith.constant 0 : index
    %10 = vector.load %arg4[%c0_8, %c0_9] : memref<1x32xf32, #tpu.memory_space<vmem>>, vector<1x32xf32>
    %cst = arith.constant dense<0.000000e+00> : vector<2x8xf32>
    %11 = vector.multi_reduction <add>, %8, %cst [2] : vector<2x8x32xf32> to vector<2x8xf32>
    %12 = vector.shape_cast %11 : vector<2x8xf32> to vector<2x8x1xf32>
    %cst_10 = arith.constant 3.200000e+01 : f32
    %13 = vector.broadcast %cst_10 : f32 to vector<2x8x1xf32>
    %14 = arith.divf %12, %13 : vector<2x8x1xf32>
    %15 = vector.broadcast %14 : vector<2x8x1xf32> to vector<2x8x32xf32>
    %16 = arith.subf %8, %15 : vector<2x8x32xf32>
    %17 = arith.mulf %16, %16 : vector<2x8x32xf32>
    %cst_11 = arith.constant dense<0.000000e+00> : vector<2x8xf32>
    %18 = vector.multi_reduction <add>, %17, %cst_11 [2] : vector<2x8x32xf32> to vector<2x8xf32>
    %19 = vector.shape_cast %18 : vector<2x8xf32> to vector<2x8x1xf32>
    %cst_12 = arith.constant 3.200000e+01 : f32
    %20 = vector.broadcast %cst_12 : f32 to vector<2x8x1xf32>
    %21 = arith.divf %19, %20 : vector<2x8x1xf32>
    %22 = vector.broadcast %14 : vector<2x8x1xf32> to vector<2x8x32xf32>
    %23 = arith.subf %8, %22 : vector<2x8x32xf32>
    %cst_13 = arith.constant 9.99999996E-13 : f32
    %24 = vector.broadcast %cst_13 : f32 to vector<2x8x1xf32>
    %25 = arith.addf %21, %24 : vector<2x8x1xf32>
    %26 = math.rsqrt %25 : vector<2x8x1xf32>
    %27 = vector.broadcast %26 : vector<2x8x1xf32> to vector<2x8x32xf32>
    %28 = arith.mulf %23, %27 : vector<2x8x32xf32>
    %29 = vector.shape_cast %9 : vector<1x32xf32> to vector<1x1x32xf32>
    %30 = vector.broadcast %29 : vector<1x1x32xf32> to vector<2x8x32xf32>
    %31 = arith.mulf %28, %30 : vector<2x8x32xf32>
    %32 = vector.shape_cast %10 : vector<1x32xf32> to vector<1x1x32xf32>
    %33 = vector.broadcast %32 : vector<1x1x32xf32> to vector<2x8x32xf32>
    %34 = arith.addf %31, %33 : vector<2x8x32xf32>
    %c0_14 = arith.constant 0 : index
    %c0_15 = arith.constant 0 : index
    %c0_16 = arith.constant 0 : index
    %35 = vector.load %arg5[%c0_14, %c0_15, %c0_16] : memref<2x8x32xf32, #tpu.memory_space<vmem>>, vector<2x8x32xf32>
    tpu.vector_store %arg5[%c0_14, %c0_15, %c0_16], %34 {strides = array<i32>} : memref<2x8x32xf32, #tpu.memory_space<vmem>>, vector<2x8x32xf32>,
    return
  }
}

module attributes {stable_mosaic.version = 11 : i64} {
  func.func @_encoder_layer_kernel(%arg0: i32, %arg1: memref<1x8x32xf32, #tpu.memory_space<vmem>>, %arg2: memref<1x1x8xf32, #tpu.memory_space<vmem>>, %arg3: memref<32x96xbf16, #tpu.memory_space<vmem>>, %arg4: memref<1x96xf32, #tpu.memory_space<vmem>>, %arg5: memref<32x32xbf16, #tpu.memory_space<vmem>>, %arg6: memref<1x32xf32, #tpu.memory_space<vmem>>, %arg7: memref<1x32xf32, #tpu.memory_space<vmem>>, %arg8: memref<1x32xf32, #tpu.memory_space<vmem>>, %arg9: memref<32x64xbf16, #tpu.memory_space<vmem>>, %arg10: memref<1x64xf32, #tpu.memory_space<vmem>>, %arg11: memref<64x32xbf16, #tpu.memory_space<vmem>>, %arg12: memref<1x32xf32, #tpu.memory_space<vmem>>, %arg13: memref<1x32xf32, #tpu.memory_space<vmem>>, %arg14: memref<1x32xf32, #tpu.memory_space<vmem>>, %arg15: memref<1x8x32xf32, #tpu.memory_space<vmem>>, %arg16: memref<1x4x8x8xf32, #tpu.memory_space<vmem>>) attributes {dimension_semantics = [#tpu.dimension_semantics<parallel>], iteration_bounds = array<i64: 2>, scalar_prefetch = 0 : i64, scratch_operands = 0 : i64, tpu.core_type = #tpu.core_type<tc>, window_params = [{transform_indices = @transform_0, window_bounds = array<i64: 1, 8, 32>}, {transform_indices = @transform_1, window_bounds = array<i64: 1, 1, 8>}, {pipeline_mode = #tpu.pipeline_mode<synchronous>, transform_indices = @transform_2, window_bounds = array<i64: 32, 96>}, {pipeline_mode = #tpu.pipeline_mode<synchronous>, transform_indices = @transform_3, window_bounds = array<i64: 1, 96>}, {pipeline_mode = #tpu.pipeline_mode<synchronous>, transform_indices = @transform_4, window_bounds = array<i64: 32, 32>}, {pipeline_mode = #tpu.pipeline_mode<synchronous>, transform_indices = @transform_5, window_bounds = array<i64: 1, 32>}, {pipeline_mode = #tpu.pipeline_mode<synchronous>, transform_indices = @transform_6, window_bounds = array<i64: 1, 32>}, {pipeline_mode = #tpu.pipeline_mode<synchronous>, transform_indices = @transform_7, window_bounds = array<i64: 1, 32>}, {pipeline_mode = #tpu.pipeline_mode<synchronous>, transform_indices = @transform_8, window_bounds = array<i64: 32, 64>}, {pipeline_mode = #tpu.pipeline_mode<synchronous>, transform_indices = @transform_9, window_bounds = array<i64: 1, 64>}, {pipeline_mode = #tpu.pipeline_mode<synchronous>, transform_indices = @transform_10, window_bounds = array<i64: 64, 32>}, {pipeline_mode = #tpu.pipeline_mode<synchronous>, transform_indices = @transform_11, window_bounds = array<i64: 1, 32>}, {pipeline_mode = #tpu.pipeline_mode<synchronous>, transform_indices = @transform_12, window_bounds = array<i64: 1, 32>}, {pipeline_mode = #tpu.pipeline_mode<synchronous>, transform_indices = @transform_13, window_bounds = array<i64: 1, 32>}, {transform_indices = @transform_14, window_bounds = array<i64: 1, 8, 32>}, {transform_indices = @transform_15, window_bounds = array<i64: 1, 4, 8, 8>}]} {
    %c0 = arith.constant 0 : index
    %c0_0 = arith.constant 0 : index
    %c0_1 = arith.constant 0 : index
    %0 = vector.load %arg1[%c0, %c0_0, %c0_1] : memref<1x8x32xf32, #tpu.memory_space<vmem>>, vector<1x8x32xf32>
    %1 = vector.shape_cast %0 : vector<1x8x32xf32> to vector<8x32xf32>
    %c0_2 = arith.constant 0 : index
    %c0_3 = arith.constant 0 : index
    %c0_4 = arith.constant 0 : index
    %2 = vector.load %arg2[%c0_2, %c0_3, %c0_4] : memref<1x1x8xf32, #tpu.memory_space<vmem>>, vector<1x1x8xf32>
    %3 = vector.shape_cast %2 : vector<1x1x8xf32> to vector<1x8xf32>
    %4 = arith.truncf %1 : vector<8x32xf32> to vector<8x32xbf16>
    %c0_5 = arith.constant 0 : index
    %c0_6 = arith.constant 0 : index
    %5 = vector.load %arg3[%c0_5, %c0_6] : memref<32x96xbf16, #tpu.memory_space<vmem>>, vector<32x96xbf16>
    %cst = arith.constant dense<0.000000e+00> : vector<8x96xf32>
    %6 = tpu.matmul %4, %5, %cst {dimension_numbers = #tpu.dot_dimension_numbers<[1], [0], [0], [1], [0, 0, 1, 1], [], []>} : vector<8x32xbf16>, vector<32x96xbf16>, vector<8x96xf32> -> vector<8x96xf32>
    %c0_7 = arith.constant 0 : index
    %c0_8 = arith.constant 0 : index
    %7 = vector.load %arg4[%c0_7, %c0_8] : memref<1x96xf32, #tpu.memory_space<vmem>>, vector<1x96xf32>
    %8 = vector.broadcast %7 : vector<1x96xf32> to vector<8x96xf32>
    %9 = arith.addf %6, %8 : vector<8x96xf32>
    %10 = vector.extract_strided_slice %9 {offsets = [0, 0], sizes = [8, 8], strides = [1, 1]} : vector<8x96xf32> to vector<8x8xf32>
    %11 = arith.truncf %10 : vector<8x8xf32> to vector<8x8xbf16>
    %12 = vector.extract_strided_slice %9 {offsets = [0, 32], sizes = [8, 8], strides = [1, 1]} : vector<8x96xf32> to vector<8x8xf32>
    %13 = arith.truncf %12 : vector<8x8xf32> to vector<8x8xbf16>
    %14 = vector.extract_strided_slice %9 {offsets = [0, 64], sizes = [8, 8], strides = [1, 1]} : vector<8x96xf32> to vector<8x8xf32>
    %15 = arith.truncf %14 : vector<8x8xf32> to vector<8x8xbf16>
    %cst_9 = arith.constant dense<0.000000e+00> : vector<8x8xf32>
    %16 = tpu.matmul %11, %13, %cst_9 {dimension_numbers = #tpu.dot_dimension_numbers<[1], [1], [0], [0], [0, 0, 1, 0], [], []>} : vector<8x8xbf16>, vector<8x8xbf16>, vector<8x8xf32> -> vector<8x8xf32>
    %cst_10 = arith.constant 0.353553385 : f32
    %17 = vector.broadcast %cst_10 : f32 to vector<8x8xf32>
    %18 = arith.mulf %16, %17 : vector<8x8xf32>
    %19 = vector.broadcast %3 : vector<1x8xf32> to vector<8x8xf32>
    %20 = arith.addf %18, %19 : vector<8x8xf32>
    %cst_11 = arith.constant dense<0xFF800000> : vector<8xf32>
    %21 = vector.multi_reduction <maximumf>, %20, %cst_11 [1] : vector<8x8xf32> to vector<8xf32>
    %22 = vector.shape_cast %21 : vector<8xf32> to vector<8x1xf32>
    %23 = vector.broadcast %22 : vector<8x1xf32> to vector<8x8xf32>
    %24 = arith.subf %20, %23 : vector<8x8xf32>
    %25 = math.exp %24 : vector<8x8xf32>
    %cst_12 = arith.constant dense<0.000000e+00> : vector<8xf32>
    %26 = vector.multi_reduction <add>, %25, %cst_12 [1] : vector<8x8xf32> to vector<8xf32>
    %27 = vector.shape_cast %26 : vector<8xf32> to vector<8x1xf32>
    %28 = vector.broadcast %27 : vector<8x1xf32> to vector<8x8xf32>
    %29 = arith.divf %25, %28 : vector<8x8xf32>
    %c0_13 = arith.constant 0 : index
    %c0_14 = arith.constant 0 : index
    %c0_15 = arith.constant 0 : index
    %c0_16 = arith.constant 0 : index
    %30 = vector.load %arg16[%c0_13, %c0_14, %c0_15, %c0_16] : memref<1x4x8x8xf32, #tpu.memory_space<vmem>>, vector<1x1x8x8xf32>
    %31 = vector.shape_cast %30 : vector<1x1x8x8xf32> to vector<8x8xf32>
    %32 = vector.shape_cast %29 : vector<8x8xf32> to vector<1x1x8x8xf32>
    tpu.vector_store %arg16[%c0_13, %c0_14, %c0_15, %c0_16], %32 {strides = array<i32>} : memref<1x4x8x8xf32, #tpu.memory_space<vmem>>, vector<1x1x8x8xf32>,
    %33 = arith.truncf %29 : vector<8x8xf32> to vector<8x8xbf16>
    %cst_17 = arith.constant dense<0.000000e+00> : vector<8x8xf32>
    %34 = tpu.matmul %33, %15, %cst_17 {dimension_numbers = #tpu.dot_dimension_numbers<[1], [0], [0], [1], [0, 0, 1, 1], [], []>} : vector<8x8xbf16>, vector<8x8xbf16>, vector<8x8xf32> -> vector<8x8xf32>
    %35 = vector.extract_strided_slice %9 {offsets = [0, 8], sizes = [8, 8], strides = [1, 1]} : vector<8x96xf32> to vector<8x8xf32>
    %36 = arith.truncf %35 : vector<8x8xf32> to vector<8x8xbf16>
    %37 = vector.extract_strided_slice %9 {offsets = [0, 40], sizes = [8, 8], strides = [1, 1]} : vector<8x96xf32> to vector<8x8xf32>
    %38 = arith.truncf %37 : vector<8x8xf32> to vector<8x8xbf16>
    %39 = vector.extract_strided_slice %9 {offsets = [0, 72], sizes = [8, 8], strides = [1, 1]} : vector<8x96xf32> to vector<8x8xf32>
    %40 = arith.truncf %39 : vector<8x8xf32> to vector<8x8xbf16>
    %cst_18 = arith.constant dense<0.000000e+00> : vector<8x8xf32>
    %41 = tpu.matmul %36, %38, %cst_18 {dimension_numbers = #tpu.dot_dimension_numbers<[1], [1], [0], [0], [0, 0, 1, 0], [], []>} : vector<8x8xbf16>, vector<8x8xbf16>, vector<8x8xf32> -> vector<8x8xf32>
    %cst_19 = arith.constant 0.353553385 : f32
    %42 = vector.broadcast %cst_19 : f32 to vector<8x8xf32>
    %43 = arith.mulf %41, %42 : vector<8x8xf32>
    %44 = vector.broadcast %3 : vector<1x8xf32> to vector<8x8xf32>
    %45 = arith.addf %43, %44 : vector<8x8xf32>
    %cst_20 = arith.constant dense<0xFF800000> : vector<8xf32>
    %46 = vector.multi_reduction <maximumf>, %45, %cst_20 [1] : vector<8x8xf32> to vector<8xf32>
    %47 = vector.shape_cast %46 : vector<8xf32> to vector<8x1xf32>
    %48 = vector.broadcast %47 : vector<8x1xf32> to vector<8x8xf32>
    %49 = arith.subf %45, %48 : vector<8x8xf32>
    %50 = math.exp %49 : vector<8x8xf32>
    %cst_21 = arith.constant dense<0.000000e+00> : vector<8xf32>
    %51 = vector.multi_reduction <add>, %50, %cst_21 [1] : vector<8x8xf32> to vector<8xf32>
    %52 = vector.shape_cast %51 : vector<8xf32> to vector<8x1xf32>
    %53 = vector.broadcast %52 : vector<8x1xf32> to vector<8x8xf32>
    %54 = arith.divf %50, %53 : vector<8x8xf32>
    %c0_22 = arith.constant 0 : index
    %c1 = arith.constant 1 : index
    %c0_23 = arith.constant 0 : index
    %c0_24 = arith.constant 0 : index
    %55 = vector.load %arg16[%c0_22, %c1, %c0_23, %c0_24] : memref<1x4x8x8xf32, #tpu.memory_space<vmem>>, vector<1x1x8x8xf32>
    %56 = vector.shape_cast %55 : vector<1x1x8x8xf32> to vector<8x8xf32>
    %57 = vector.shape_cast %54 : vector<8x8xf32> to vector<1x1x8x8xf32>
    tpu.vector_store %arg16[%c0_22, %c1, %c0_23, %c0_24], %57 {strides = array<i32>} : memref<1x4x8x8xf32, #tpu.memory_space<vmem>>, vector<1x1x8x8xf32>,
    %58 = arith.truncf %54 : vector<8x8xf32> to vector<8x8xbf16>
    %cst_25 = arith.constant dense<0.000000e+00> : vector<8x8xf32>
    %59 = tpu.matmul %58, %40, %cst_25 {dimension_numbers = #tpu.dot_dimension_numbers<[1], [0], [0], [1], [0, 0, 1, 1], [], []>} : vector<8x8xbf16>, vector<8x8xbf16>, vector<8x8xf32> -> vector<8x8xf32>
    %60 = vector.extract_strided_slice %9 {offsets = [0, 16], sizes = [8, 8], strides = [1, 1]} : vector<8x96xf32> to vector<8x8xf32>
    %61 = arith.truncf %60 : vector<8x8xf32> to vector<8x8xbf16>
    %62 = vector.extract_strided_slice %9 {offsets = [0, 48], sizes = [8, 8], strides = [1, 1]} : vector<8x96xf32> to vector<8x8xf32>
    %63 = arith.truncf %62 : vector<8x8xf32> to vector<8x8xbf16>
    %64 = vector.extract_strided_slice %9 {offsets = [0, 80], sizes = [8, 8], strides = [1, 1]} : vector<8x96xf32> to vector<8x8xf32>
    %65 = arith.truncf %64 : vector<8x8xf32> to vector<8x8xbf16>
    %cst_26 = arith.constant dense<0.000000e+00> : vector<8x8xf32>
    %66 = tpu.matmul %61, %63, %cst_26 {dimension_numbers = #tpu.dot_dimension_numbers<[1], [1], [0], [0], [0, 0, 1, 0], [], []>} : vector<8x8xbf16>, vector<8x8xbf16>, vector<8x8xf32> -> vector<8x8xf32>
    %cst_27 = arith.constant 0.353553385 : f32
    %67 = vector.broadcast %cst_27 : f32 to vector<8x8xf32>
    %68 = arith.mulf %66, %67 : vector<8x8xf32>
    %69 = vector.broadcast %3 : vector<1x8xf32> to vector<8x8xf32>
    %70 = arith.addf %68, %69 : vector<8x8xf32>
    %cst_28 = arith.constant dense<0xFF800000> : vector<8xf32>
    %71 = vector.multi_reduction <maximumf>, %70, %cst_28 [1] : vector<8x8xf32> to vector<8xf32>
    %72 = vector.shape_cast %71 : vector<8xf32> to vector<8x1xf32>
    %73 = vector.broadcast %72 : vector<8x1xf32> to vector<8x8xf32>
    %74 = arith.subf %70, %73 : vector<8x8xf32>
    %75 = math.exp %74 : vector<8x8xf32>
    %cst_29 = arith.constant dense<0.000000e+00> : vector<8xf32>
    %76 = vector.multi_reduction <add>, %75, %cst_29 [1] : vector<8x8xf32> to vector<8xf32>
    %77 = vector.shape_cast %76 : vector<8xf32> to vector<8x1xf32>
    %78 = vector.broadcast %77 : vector<8x1xf32> to vector<8x8xf32>
    %79 = arith.divf %75, %78 : vector<8x8xf32>
    %c0_30 = arith.constant 0 : index
    %c2 = arith.constant 2 : index
    %c0_31 = arith.constant 0 : index
    %c0_32 = arith.constant 0 : index
    %80 = vector.load %arg16[%c0_30, %c2, %c0_31, %c0_32] : memref<1x4x8x8xf32, #tpu.memory_space<vmem>>, vector<1x1x8x8xf32>
    %81 = vector.shape_cast %80 : vector<1x1x8x8xf32> to vector<8x8xf32>
    %82 = vector.shape_cast %79 : vector<8x8xf32> to vector<1x1x8x8xf32>
    tpu.vector_store %arg16[%c0_30, %c2, %c0_31, %c0_32], %82 {strides = array<i32>} : memref<1x4x8x8xf32, #tpu.memory_space<vmem>>, vector<1x1x8x8xf32>,
    %83 = arith.truncf %79 : vector<8x8xf32> to vector<8x8xbf16>
    %cst_33 = arith.constant dense<0.000000e+00> : vector<8x8xf32>
    %84 = tpu.matmul %83, %65, %cst_33 {dimension_numbers = #tpu.dot_dimension_numbers<[1], [0], [0], [1], [0, 0, 1, 1], [], []>} : vector<8x8xbf16>, vector<8x8xbf16>, vector<8x8xf32> -> vector<8x8xf32>
    %85 = vector.extract_strided_slice %9 {offsets = [0, 24], sizes = [8, 8], strides = [1, 1]} : vector<8x96xf32> to vector<8x8xf32>
    %86 = arith.truncf %85 : vector<8x8xf32> to vector<8x8xbf16>
    %87 = vector.extract_strided_slice %9 {offsets = [0, 56], sizes = [8, 8], strides = [1, 1]} : vector<8x96xf32> to vector<8x8xf32>
    %88 = arith.truncf %87 : vector<8x8xf32> to vector<8x8xbf16>
    %89 = vector.extract_strided_slice %9 {offsets = [0, 88], sizes = [8, 8], strides = [1, 1]} : vector<8x96xf32> to vector<8x8xf32>
    %90 = arith.truncf %89 : vector<8x8xf32> to vector<8x8xbf16>
    %cst_34 = arith.constant dense<0.000000e+00> : vector<8x8xf32>
    %91 = tpu.matmul %86, %88, %cst_34 {dimension_numbers = #tpu.dot_dimension_numbers<[1], [1], [0], [0], [0, 0, 1, 0], [], []>} : vector<8x8xbf16>, vector<8x8xbf16>, vector<8x8xf32> -> vector<8x8xf32>
    %cst_35 = arith.constant 0.353553385 : f32
    %92 = vector.broadcast %cst_35 : f32 to vector<8x8xf32>
    %93 = arith.mulf %91, %92 : vector<8x8xf32>
    %94 = vector.broadcast %3 : vector<1x8xf32> to vector<8x8xf32>
    %95 = arith.addf %93, %94 : vector<8x8xf32>
    %cst_36 = arith.constant dense<0xFF800000> : vector<8xf32>
    %96 = vector.multi_reduction <maximumf>, %95, %cst_36 [1] : vector<8x8xf32> to vector<8xf32>
    %97 = vector.shape_cast %96 : vector<8xf32> to vector<8x1xf32>
    %98 = vector.broadcast %97 : vector<8x1xf32> to vector<8x8xf32>
    %99 = arith.subf %95, %98 : vector<8x8xf32>
    %100 = math.exp %99 : vector<8x8xf32>
    %cst_37 = arith.constant dense<0.000000e+00> : vector<8xf32>
    %101 = vector.multi_reduction <add>, %100, %cst_37 [1] : vector<8x8xf32> to vector<8xf32>
    %102 = vector.shape_cast %101 : vector<8xf32> to vector<8x1xf32>
    %103 = vector.broadcast %102 : vector<8x1xf32> to vector<8x8xf32>
    %104 = arith.divf %100, %103 : vector<8x8xf32>
    %c0_38 = arith.constant 0 : index
    %c3 = arith.constant 3 : index
    %c0_39 = arith.constant 0 : index
    %c0_40 = arith.constant 0 : index
    %105 = vector.load %arg16[%c0_38, %c3, %c0_39, %c0_40] : memref<1x4x8x8xf32, #tpu.memory_space<vmem>>, vector<1x1x8x8xf32>
    %106 = vector.shape_cast %105 : vector<1x1x8x8xf32> to vector<8x8xf32>
    %107 = vector.shape_cast %104 : vector<8x8xf32> to vector<1x1x8x8xf32>
    tpu.vector_store %arg16[%c0_38, %c3, %c0_39, %c0_40], %107 {strides = array<i32>} : memref<1x4x8x8xf32, #tpu.memory_space<vmem>>, vector<1x1x8x8xf32>,
    %108 = arith.truncf %104 : vector<8x8xf32> to vector<8x8xbf16>
    %cst_41 = arith.constant dense<0.000000e+00> : vector<8x8xf32>
    %109 = tpu.matmul %108, %90, %cst_41 {dimension_numbers = #tpu.dot_dimension_numbers<[1], [0], [0], [1], [0, 0, 1, 1], [], []>} : vector<8x8xbf16>, vector<8x8xbf16>, vector<8x8xf32> -> vector<8x8xf32>
    %110 = tpu.concatenate %34, %59, %84, %109 in 1 : vector<8x8xf32>, vector<8x8xf32>, vector<8x8xf32>, vector<8x8xf32> -> vector<8x32xf32>
    %111 = arith.truncf %110 : vector<8x32xf32> to vector<8x32xbf16>
    %c0_42 = arith.constant 0 : index
    %c0_43 = arith.constant 0 : index
    %112 = vector.load %arg5[%c0_42, %c0_43] : memref<32x32xbf16, #tpu.memory_space<vmem>>, vector<32x32xbf16>
    %cst_44 = arith.constant dense<0.000000e+00> : vector<8x32xf32>
    %113 = tpu.matmul %111, %112, %cst_44 {dimension_numbers = #tpu.dot_dimension_numbers<[1], [0], [0], [1], [0, 0, 1, 1], [], []>} : vector<8x32xbf16>, vector<32x32xbf16>, vector<8x32xf32> -> vector<8x32xf32>
    %c0_45 = arith.constant 0 : index
    %c0_46 = arith.constant 0 : index
    %114 = vector.load %arg6[%c0_45, %c0_46] : memref<1x32xf32, #tpu.memory_space<vmem>>, vector<1x32xf32>
    %115 = vector.broadcast %114 : vector<1x32xf32> to vector<8x32xf32>
    %116 = arith.addf %113, %115 : vector<8x32xf32>
    %117 = arith.addf %116, %1 : vector<8x32xf32>
    %c0_47 = arith.constant 0 : index
    %c0_48 = arith.constant 0 : index
    %118 = vector.load %arg7[%c0_47, %c0_48] : memref<1x32xf32, #tpu.memory_space<vmem>>, vector<1x32xf32>
    %c0_49 = arith.constant 0 : index
    %c0_50 = arith.constant 0 : index
    %119 = vector.load %arg8[%c0_49, %c0_50] : memref<1x32xf32, #tpu.memory_space<vmem>>, vector<1x32xf32>
    %cst_51 = arith.constant dense<0.000000e+00> : vector<8xf32>
    %120 = vector.multi_reduction <add>, %117, %cst_51 [1] : vector<8x32xf32> to vector<8xf32>
    %121 = vector.shape_cast %120 : vector<8xf32> to vector<8x1xf32>
    %cst_52 = arith.constant 3.200000e+01 : f32
    %122 = vector.broadcast %cst_52 : f32 to vector<8x1xf32>
    %123 = arith.divf %121, %122 : vector<8x1xf32>
    %124 = vector.broadcast %123 : vector<8x1xf32> to vector<8x32xf32>
    %125 = arith.subf %117, %124 : vector<8x32xf32>
    %126 = arith.mulf %125, %125 : vector<8x32xf32>
    %cst_53 = arith.constant dense<0.000000e+00> : vector<8xf32>
    %127 = vector.multi_reduction <add>, %126, %cst_53 [1] : vector<8x32xf32> to vector<8xf32>
    %128 = vector.shape_cast %127 : vector<8xf32> to vector<8x1xf32>
    %cst_54 = arith.constant 3.200000e+01 : f32
    %129 = vector.broadcast %cst_54 : f32 to vector<8x1xf32>
    %130 = arith.divf %128, %129 : vector<8x1xf32>
    %131 = vector.broadcast %123 : vector<8x1xf32> to vector<8x32xf32>
    %132 = arith.subf %117, %131 : vector<8x32xf32>
    %cst_55 = arith.constant 9.99999996E-13 : f32
    %133 = vector.broadcast %cst_55 : f32 to vector<8x1xf32>
    %134 = arith.addf %130, %133 : vector<8x1xf32>
    %135 = math.rsqrt %134 : vector<8x1xf32>
    %136 = vector.broadcast %135 : vector<8x1xf32> to vector<8x32xf32>
    %137 = arith.mulf %132, %136 : vector<8x32xf32>
    %138 = vector.broadcast %118 : vector<1x32xf32> to vector<8x32xf32>
    %139 = arith.mulf %137, %138 : vector<8x32xf32>
    %140 = vector.broadcast %119 : vector<1x32xf32> to vector<8x32xf32>
    %141 = arith.addf %139, %140 : vector<8x32xf32>
    %142 = arith.truncf %141 : vector<8x32xf32> to vector<8x32xbf16>
    %c0_56 = arith.constant 0 : index
    %c0_57 = arith.constant 0 : index
    %143 = vector.load %arg9[%c0_56, %c0_57] : memref<32x64xbf16, #tpu.memory_space<vmem>>, vector<32x64xbf16>
    %cst_58 = arith.constant dense<0.000000e+00> : vector<8x64xf32>
    %144 = tpu.matmul %142, %143, %cst_58 {dimension_numbers = #tpu.dot_dimension_numbers<[1], [0], [0], [1], [0, 0, 1, 1], [], []>} : vector<8x32xbf16>, vector<32x64xbf16>, vector<8x64xf32> -> vector<8x64xf32>
    %c0_59 = arith.constant 0 : index
    %c0_60 = arith.constant 0 : index
    %145 = vector.load %arg10[%c0_59, %c0_60] : memref<1x64xf32, #tpu.memory_space<vmem>>, vector<1x64xf32>
    %146 = vector.broadcast %145 : vector<1x64xf32> to vector<8x64xf32>
    %147 = arith.addf %144, %146 : vector<8x64xf32>
    %cst_61 = arith.constant 5.000000e-01 : f32
    %148 = vector.broadcast %cst_61 : f32 to vector<8x64xf32>
    %149 = arith.mulf %148, %147 : vector<8x64xf32>
    %cst_62 = arith.constant 4.471500e-02 : f32
    %150 = vector.broadcast %cst_62 : f32 to vector<8x64xf32>
    %151 = arith.mulf %150, %147 : vector<8x64xf32>
    %152 = arith.mulf %151, %147 : vector<8x64xf32>
    %153 = arith.mulf %152, %147 : vector<8x64xf32>
    %154 = arith.addf %147, %153 : vector<8x64xf32>
    %cst_63 = arith.constant 0.797884583 : f32
    %155 = vector.broadcast %cst_63 : f32 to vector<8x64xf32>
    %156 = arith.mulf %155, %154 : vector<8x64xf32>
    %157 = math.tanh %156 : vector<8x64xf32>
    %cst_64 = arith.constant 1.000000e+00 : f32
    %158 = vector.broadcast %cst_64 : f32 to vector<8x64xf32>
    %159 = arith.addf %158, %157 : vector<8x64xf32>
    %160 = arith.mulf %149, %159 : vector<8x64xf32>
    %161 = arith.truncf %160 : vector<8x64xf32> to vector<8x64xbf16>
    %c0_65 = arith.constant 0 : index
    %c0_66 = arith.constant 0 : index
    %162 = vector.load %arg11[%c0_65, %c0_66] : memref<64x32xbf16, #tpu.memory_space<vmem>>, vector<64x32xbf16>
    %cst_67 = arith.constant dense<0.000000e+00> : vector<8x32xf32>
    %163 = tpu.matmul %161, %162, %cst_67 {dimension_numbers = #tpu.dot_dimension_numbers<[1], [0], [0], [1], [0, 0, 1, 1], [], []>} : vector<8x64xbf16>, vector<64x32xbf16>, vector<8x32xf32> -> vector<8x32xf32>
    %c0_68 = arith.constant 0 : index
    %c0_69 = arith.constant 0 : index
    %164 = vector.load %arg12[%c0_68, %c0_69] : memref<1x32xf32, #tpu.memory_space<vmem>>, vector<1x32xf32>
    %165 = vector.broadcast %164 : vector<1x32xf32> to vector<8x32xf32>
    %166 = arith.addf %163, %165 : vector<8x32xf32>
    %167 = arith.addf %166, %141 : vector<8x32xf32>
    %c0_70 = arith.constant 0 : index
    %c0_71 = arith.constant 0 : index
    %168 = vector.load %arg13[%c0_70, %c0_71] : memref<1x32xf32, #tpu.memory_space<vmem>>, vector<1x32xf32>
    %c0_72 = arith.constant 0 : index
    %c0_73 = arith.constant 0 : index
    %169 = vector.load %arg14[%c0_72, %c0_73] : memref<1x32xf32, #tpu.memory_space<vmem>>, vector<1x32xf32>
    %cst_74 = arith.constant dense<0.000000e+00> : vector<8xf32>
    %170 = vector.multi_reduction <add>, %167, %cst_74 [1] : vector<8x32xf32> to vector<8xf32>
    %171 = vector.shape_cast %170 : vector<8xf32> to vector<8x1xf32>
    %cst_75 = arith.constant 3.200000e+01 : f32
    %172 = vector.broadcast %cst_75 : f32 to vector<8x1xf32>
    %173 = arith.divf %171, %172 : vector<8x1xf32>
    %174 = vector.broadcast %173 : vector<8x1xf32> to vector<8x32xf32>
    %175 = arith.subf %167, %174 : vector<8x32xf32>
    %176 = arith.mulf %175, %175 : vector<8x32xf32>
    %cst_76 = arith.constant dense<0.000000e+00> : vector<8xf32>
    %177 = vector.multi_reduction <add>, %176, %cst_76 [1] : vector<8x32xf32> to vector<8xf32>
    %178 = vector.shape_cast %177 : vector<8xf32> to vector<8x1xf32>
    %cst_77 = arith.constant 3.200000e+01 : f32
    %179 = vector.broadcast %cst_77 : f32 to vector<8x1xf32>
    %180 = arith.divf %178, %179 : vector<8x1xf32>
    %181 = vector.broadcast %173 : vector<8x1xf32> to vector<8x32xf32>
    %182 = arith.subf %167, %181 : vector<8x32xf32>
    %cst_78 = arith.constant 9.99999996E-13 : f32
    %183 = vector.broadcast %cst_78 : f32 to vector<8x1xf32>
    %184 = arith.addf %180, %183 : vector<8x1xf32>
    %185 = math.rsqrt %184 : vector<8x1xf32>
    %186 = vector.broadcast %185 : vector<8x1xf32> to vector<8x32xf32>
    %187 = arith.mulf %182, %186 : vector<8x32xf32>
    %188 = vector.broadcast %168 : vector<1x32xf32> to vector<8x32xf32>
    %189 = arith.mulf %187, %188 : vector<8x32xf32>
    %190 = vector.broadcast %169 : vector<1x32xf32> to vector<8x32xf32>
    %191 = arith.addf %189, %190 : vector<8x32xf32>
    %c0_79 = arith.constant 0 : index
    %c0_80 = arith.constant 0 : index
    %c0_81 = arith.constant 0 : index
    %192 = vector.load %arg15[%c0_79, %c0_80, %c0_81] : memref<1x8x32xf32, #tpu.memory_space<vmem>>, vector<1x8x32xf32>
    %193 = vector.shape_cast %192 : vector<1x8x32xf32> to vector<8x32xf32>
    %194 = vector.shape_cast %191 : vector<8x32xf32> to vector<1x8x32xf32>
    tpu.vector_store %arg15[%c0_79, %c0_80, %c0_81], %194 {strides = array<i32>} : memref<1x8x32xf32, #tpu.memory_space<vmem>>, vector<1x8x32xf32>,
    return
  }
  func.func @transform_0(%arg0: i32) -> (i32, i32, i32) {
    %c0_i32 = arith.constant 0 : i32
    %c0_i32_0 = arith.constant 0 : i32
    %c0_i32_1 = arith.constant 0 : i32
    return %arg0, %c0_i32, %c0_i32_0 : i32, i32, i32
  }
  func.func @transform_1(%arg0: i32) -> (i32, i32, i32) {
    %c0_i32 = arith.constant 0 : i32
    %c0_i32_0 = arith.constant 0 : i32
    %c0_i32_1 = arith.constant 0 : i32
    return %arg0, %c0_i32, %c0_i32_0 : i32, i32, i32
  }
  func.func @transform_2(%arg0: i32) -> (i32, i32) {
    %c0_i32 = arith.constant 0 : i32
    %c0_i32_0 = arith.constant 0 : i32
    %c0_i32_1 = arith.constant 0 : i32
    return %c0_i32, %c0_i32_0 : i32, i32
  }
  func.func @transform_3(%arg0: i32) -> (i32, i32) {
    %c0_i32 = arith.constant 0 : i32
    %c0_i32_0 = arith.constant 0 : i32
    %c0_i32_1 = arith.constant 0 : i32
    return %c0_i32, %c0_i32_0 : i32, i32
  }
  func.func @transform_4(%arg0: i32) -> (i32, i32) {
    %c0_i32 = arith.constant 0 : i32
    %c0_i32_0 = arith.constant 0 : i32
    %c0_i32_1 = arith.constant 0 : i32
    return %c0_i32, %c0_i32_0 : i32, i32
  }
  func.func @transform_5(%arg0: i32) -> (i32, i32) {
    %c0_i32 = arith.constant 0 : i32
    %c0_i32_0 = arith.constant 0 : i32
    %c0_i32_1 = arith.constant 0 : i32
    return %c0_i32, %c0_i32_0 : i32, i32
  }
  func.func @transform_6(%arg0: i32) -> (i32, i32) {
    %c0_i32 = arith.constant 0 : i32
    %c0_i32_0 = arith.constant 0 : i32
    %c0_i32_1 = arith.constant 0 : i32
    return %c0_i32, %c0_i32_0 : i32, i32
  }
  func.func @transform_7(%arg0: i32) -> (i32, i32) {
    %c0_i32 = arith.constant 0 : i32
    %c0_i32_0 = arith.constant 0 : i32
    %c0_i32_1 = arith.constant 0 : i32
    return %c0_i32, %c0_i32_0 : i32, i32
  }
  func.func @transform_8(%arg0: i32) -> (i32, i32) {
    %c0_i32 = arith.constant 0 : i32
    %c0_i32_0 = arith.constant 0 : i32
    %c0_i32_1 = arith.constant 0 : i32
    return %c0_i32, %c0_i32_0 : i32, i32
  }
  func.func @transform_9(%arg0: i32) -> (i32, i32) {
    %c0_i32 = arith.constant 0 : i32
    %c0_i32_0 = arith.constant 0 : i32
    %c0_i32_1 = arith.constant 0 : i32
    return %c0_i32, %c0_i32_0 : i32, i32
  }
  func.func @transform_10(%arg0: i32) -> (i32, i32) {
    %c0_i32 = arith.constant 0 : i32
    %c0_i32_0 = arith.constant 0 : i32
    %c0_i32_1 = arith.constant 0 : i32
    return %c0_i32, %c0_i32_0 : i32, i32
  }
  func.func @transform_11(%arg0: i32) -> (i32, i32) {
    %c0_i32 = arith.constant 0 : i32
    %c0_i32_0 = arith.constant 0 : i32
    %c0_i32_1 = arith.constant 0 : i32
    return %c0_i32, %c0_i32_0 : i32, i32
  }
  func.func @transform_12(%arg0: i32) -> (i32, i32) {
    %c0_i32 = arith.constant 0 : i32
    %c0_i32_0 = arith.constant 0 : i32
    %c0_i32_1 = arith.constant 0 : i32
    return %c0_i32, %c0_i32_0 : i32, i32
  }
  func.func @transform_13(%arg0: i32) -> (i32, i32) {
    %c0_i32 = arith.constant 0 : i32
    %c0_i32_0 = arith.constant 0 : i32
    %c0_i32_1 = arith.constant 0 : i32
    return %c0_i32, %c0_i32_0 : i32, i32
  }
  func.func @transform_14(%arg0: i32) -> (i32, i32, i32) {
    %c0_i32 = arith.constant 0 : i32
    %c0_i32_0 = arith.constant 0 : i32
    %c0_i32_1 = arith.constant 0 : i32
    return %arg0, %c0_i32, %c0_i32_0 : i32, i32, i32
  }
  func.func @transform_15(%arg0: i32) -> (i32, i32, i32, i32) {
    %c0_i32 = arith.constant 0 : i32
    %c0_i32_0 = arith.constant 0 : i32
    %c0_i32_1 = arith.constant 0 : i32
    %c0_i32_2 = arith.constant 0 : i32
    return %arg0, %c0_i32, %c0_i32_0, %c0_i32_1 : i32, i32, i32, i32
  }
}

module attributes {stable_mosaic.version = 11 : i64} {
  func.func @_encoder_layer_kernel(%arg0: i32, %arg1: memref<1x8x32xf32, #tpu.memory_space<vmem>>, %arg2: memref<1x1x8xf32, #tpu.memory_space<vmem>>, %arg3: memref<32x96xbf16, #tpu.memory_space<vmem>>, %arg4: memref<1x96xf32, #tpu.memory_space<vmem>>, %arg5: memref<32x32xbf16, #tpu.memory_space<vmem>>, %arg6: memref<1x32xf32, #tpu.memory_space<vmem>>, %arg7: memref<1x32xf32, #tpu.memory_space<vmem>>, %arg8: memref<1x32xf32, #tpu.memory_space<vmem>>, %arg9: memref<32x64xbf16, #tpu.memory_space<vmem>>, %arg10: memref<1x64xf32, #tpu.memory_space<vmem>>, %arg11: memref<64x32xbf16, #tpu.memory_space<vmem>>, %arg12: memref<1x32xf32, #tpu.memory_space<vmem>>, %arg13: memref<1x32xf32, #tpu.memory_space<vmem>>, %arg14: memref<1x32xf32, #tpu.memory_space<vmem>>, %arg15: memref<32x32xbf16, #tpu.memory_space<vmem>>, %arg16: memref<1x32xf32, #tpu.memory_space<vmem>>, %arg17: memref<32x2xbf16, #tpu.memory_space<vmem>>, %arg18: memref<1x2xf32, #tpu.memory_space<vmem>>, %arg19: memref<1x8x32xf32, #tpu.memory_space<vmem>>, %arg20: memref<1x4x8x8xf32, #tpu.memory_space<vmem>>, %arg21: memref<1x1x2xf32, #tpu.memory_space<vmem>>) attributes {dimension_semantics = [#tpu.dimension_semantics<parallel>], iteration_bounds = array<i64: 2>, scalar_prefetch = 0 : i64, scratch_operands = 0 : i64, tpu.core_type = #tpu.core_type<tc>, window_params = [{transform_indices = @transform_0, window_bounds = array<i64: 1, 8, 32>}, {transform_indices = @transform_1, window_bounds = array<i64: 1, 1, 8>}, {pipeline_mode = #tpu.pipeline_mode<synchronous>, transform_indices = @transform_2, window_bounds = array<i64: 32, 96>}, {pipeline_mode = #tpu.pipeline_mode<synchronous>, transform_indices = @transform_3, window_bounds = array<i64: 1, 96>}, {pipeline_mode = #tpu.pipeline_mode<synchronous>, transform_indices = @transform_4, window_bounds = array<i64: 32, 32>}, {pipeline_mode = #tpu.pipeline_mode<synchronous>, transform_indices = @transform_5, window_bounds = array<i64: 1, 32>}, {pipeline_mode = #tpu.pipeline_mode<synchronous>, transform_indices = @transform_6, window_bounds = array<i64: 1, 32>}, {pipeline_mode = #tpu.pipeline_mode<synchronous>, transform_indices = @transform_7, window_bounds = array<i64: 1, 32>}, {pipeline_mode = #tpu.pipeline_mode<synchronous>, transform_indices = @transform_8, window_bounds = array<i64: 32, 64>}, {pipeline_mode = #tpu.pipeline_mode<synchronous>, transform_indices = @transform_9, window_bounds = array<i64: 1, 64>}, {pipeline_mode = #tpu.pipeline_mode<synchronous>, transform_indices = @transform_10, window_bounds = array<i64: 64, 32>}, {pipeline_mode = #tpu.pipeline_mode<synchronous>, transform_indices = @transform_11, window_bounds = array<i64: 1, 32>}, {pipeline_mode = #tpu.pipeline_mode<synchronous>, transform_indices = @transform_12, window_bounds = array<i64: 1, 32>}, {pipeline_mode = #tpu.pipeline_mode<synchronous>, transform_indices = @transform_13, window_bounds = array<i64: 1, 32>}, {pipeline_mode = #tpu.pipeline_mode<synchronous>, transform_indices = @transform_14, window_bounds = array<i64: 32, 32>}, {pipeline_mode = #tpu.pipeline_mode<synchronous>, transform_indices = @transform_15, window_bounds = array<i64: 1, 32>}, {pipeline_mode = #tpu.pipeline_mode<synchronous>, transform_indices = @transform_16, window_bounds = array<i64: 32, 2>}, {pipeline_mode = #tpu.pipeline_mode<synchronous>, transform_indices = @transform_17, window_bounds = array<i64: 1, 2>}, {transform_indices = @transform_18, window_bounds = array<i64: 1, 8, 32>}, {transform_indices = @transform_19, window_bounds = array<i64: 1, 4, 8, 8>}, {transform_indices = @transform_20, window_bounds = array<i64: 1, 1, 2>}]} {
    %c0 = arith.constant 0 : index
    %c0_0 = arith.constant 0 : index
    %c0_1 = arith.constant 0 : index
    %0 = vector.load %arg1[%c0, %c0_0, %c0_1] : memref<1x8x32xf32, #tpu.memory_space<vmem>>, vector<1x8x32xf32>
    %1 = vector.shape_cast %0 : vector<1x8x32xf32> to vector<8x32xf32>
    %c0_2 = arith.constant 0 : index
    %c0_3 = arith.constant 0 : index
    %c0_4 = arith.constant 0 : index
    %2 = vector.load %arg2[%c0_2, %c0_3, %c0_4] : memref<1x1x8xf32, #tpu.memory_space<vmem>>, vector<1x1x8xf32>
    %3 = vector.shape_cast %2 : vector<1x1x8xf32> to vector<1x8xf32>
    %4 = arith.truncf %1 : vector<8x32xf32> to vector<8x32xbf16>
    %c0_5 = arith.constant 0 : index
    %c0_6 = arith.constant 0 : index
    %5 = vector.load %arg3[%c0_5, %c0_6] : memref<32x96xbf16, #tpu.memory_space<vmem>>, vector<32x96xbf16>
    %cst = arith.constant dense<0.000000e+00> : vector<8x96xf32>
    %6 = tpu.matmul %4, %5, %cst {dimension_numbers = #tpu.dot_dimension_numbers<[1], [0], [0], [1], [0, 0, 1, 1], [], []>} : vector<8x32xbf16>, vector<32x96xbf16>, vector<8x96xf32> -> vector<8x96xf32>
    %c0_7 = arith.constant 0 : index
    %c0_8 = arith.constant 0 : index
    %7 = vector.load %arg4[%c0_7, %c0_8] : memref<1x96xf32, #tpu.memory_space<vmem>>, vector<1x96xf32>
    %8 = vector.broadcast %7 : vector<1x96xf32> to vector<8x96xf32>
    %9 = arith.addf %6, %8 : vector<8x96xf32>
    %10 = vector.extract_strided_slice %9 {offsets = [0, 0], sizes = [8, 8], strides = [1, 1]} : vector<8x96xf32> to vector<8x8xf32>
    %11 = arith.truncf %10 : vector<8x8xf32> to vector<8x8xbf16>
    %12 = vector.extract_strided_slice %9 {offsets = [0, 32], sizes = [8, 8], strides = [1, 1]} : vector<8x96xf32> to vector<8x8xf32>
    %13 = arith.truncf %12 : vector<8x8xf32> to vector<8x8xbf16>
    %14 = vector.extract_strided_slice %9 {offsets = [0, 64], sizes = [8, 8], strides = [1, 1]} : vector<8x96xf32> to vector<8x8xf32>
    %15 = arith.truncf %14 : vector<8x8xf32> to vector<8x8xbf16>
    %cst_9 = arith.constant dense<0.000000e+00> : vector<8x8xf32>
    %16 = tpu.matmul %11, %13, %cst_9 {dimension_numbers = #tpu.dot_dimension_numbers<[1], [1], [0], [0], [0, 0, 1, 0], [], []>} : vector<8x8xbf16>, vector<8x8xbf16>, vector<8x8xf32> -> vector<8x8xf32>
    %cst_10 = arith.constant 0.353553385 : f32
    %17 = vector.broadcast %cst_10 : f32 to vector<8x8xf32>
    %18 = arith.mulf %16, %17 : vector<8x8xf32>
    %19 = vector.broadcast %3 : vector<1x8xf32> to vector<8x8xf32>
    %20 = arith.addf %18, %19 : vector<8x8xf32>
    %cst_11 = arith.constant dense<0xFF800000> : vector<8xf32>
    %21 = vector.multi_reduction <maximumf>, %20, %cst_11 [1] : vector<8x8xf32> to vector<8xf32>
    %22 = vector.shape_cast %21 : vector<8xf32> to vector<8x1xf32>
    %23 = vector.broadcast %22 : vector<8x1xf32> to vector<8x8xf32>
    %24 = arith.subf %20, %23 : vector<8x8xf32>
    %25 = math.exp %24 : vector<8x8xf32>
    %cst_12 = arith.constant dense<0.000000e+00> : vector<8xf32>
    %26 = vector.multi_reduction <add>, %25, %cst_12 [1] : vector<8x8xf32> to vector<8xf32>
    %27 = vector.shape_cast %26 : vector<8xf32> to vector<8x1xf32>
    %28 = vector.broadcast %27 : vector<8x1xf32> to vector<8x8xf32>
    %29 = arith.divf %25, %28 : vector<8x8xf32>
    %c0_13 = arith.constant 0 : index
    %c0_14 = arith.constant 0 : index
    %c0_15 = arith.constant 0 : index
    %c0_16 = arith.constant 0 : index
    %30 = vector.load %arg20[%c0_13, %c0_14, %c0_15, %c0_16] : memref<1x4x8x8xf32, #tpu.memory_space<vmem>>, vector<1x1x8x8xf32>
    %31 = vector.shape_cast %30 : vector<1x1x8x8xf32> to vector<8x8xf32>
    %32 = vector.shape_cast %29 : vector<8x8xf32> to vector<1x1x8x8xf32>
    tpu.vector_store %arg20[%c0_13, %c0_14, %c0_15, %c0_16], %32 {strides = array<i32>} : memref<1x4x8x8xf32, #tpu.memory_space<vmem>>, vector<1x1x8x8xf32>,
    %33 = arith.truncf %29 : vector<8x8xf32> to vector<8x8xbf16>
    %cst_17 = arith.constant dense<0.000000e+00> : vector<8x8xf32>
    %34 = tpu.matmul %33, %15, %cst_17 {dimension_numbers = #tpu.dot_dimension_numbers<[1], [0], [0], [1], [0, 0, 1, 1], [], []>} : vector<8x8xbf16>, vector<8x8xbf16>, vector<8x8xf32> -> vector<8x8xf32>
    %35 = vector.extract_strided_slice %9 {offsets = [0, 8], sizes = [8, 8], strides = [1, 1]} : vector<8x96xf32> to vector<8x8xf32>
    %36 = arith.truncf %35 : vector<8x8xf32> to vector<8x8xbf16>
    %37 = vector.extract_strided_slice %9 {offsets = [0, 40], sizes = [8, 8], strides = [1, 1]} : vector<8x96xf32> to vector<8x8xf32>
    %38 = arith.truncf %37 : vector<8x8xf32> to vector<8x8xbf16>
    %39 = vector.extract_strided_slice %9 {offsets = [0, 72], sizes = [8, 8], strides = [1, 1]} : vector<8x96xf32> to vector<8x8xf32>
    %40 = arith.truncf %39 : vector<8x8xf32> to vector<8x8xbf16>
    %cst_18 = arith.constant dense<0.000000e+00> : vector<8x8xf32>
    %41 = tpu.matmul %36, %38, %cst_18 {dimension_numbers = #tpu.dot_dimension_numbers<[1], [1], [0], [0], [0, 0, 1, 0], [], []>} : vector<8x8xbf16>, vector<8x8xbf16>, vector<8x8xf32> -> vector<8x8xf32>
    %cst_19 = arith.constant 0.353553385 : f32
    %42 = vector.broadcast %cst_19 : f32 to vector<8x8xf32>
    %43 = arith.mulf %41, %42 : vector<8x8xf32>
    %44 = vector.broadcast %3 : vector<1x8xf32> to vector<8x8xf32>
    %45 = arith.addf %43, %44 : vector<8x8xf32>
    %cst_20 = arith.constant dense<0xFF800000> : vector<8xf32>
    %46 = vector.multi_reduction <maximumf>, %45, %cst_20 [1] : vector<8x8xf32> to vector<8xf32>
    %47 = vector.shape_cast %46 : vector<8xf32> to vector<8x1xf32>
    %48 = vector.broadcast %47 : vector<8x1xf32> to vector<8x8xf32>
    %49 = arith.subf %45, %48 : vector<8x8xf32>
    %50 = math.exp %49 : vector<8x8xf32>
    %cst_21 = arith.constant dense<0.000000e+00> : vector<8xf32>
    %51 = vector.multi_reduction <add>, %50, %cst_21 [1] : vector<8x8xf32> to vector<8xf32>
    %52 = vector.shape_cast %51 : vector<8xf32> to vector<8x1xf32>
    %53 = vector.broadcast %52 : vector<8x1xf32> to vector<8x8xf32>
    %54 = arith.divf %50, %53 : vector<8x8xf32>
    %c0_22 = arith.constant 0 : index
    %c1 = arith.constant 1 : index
    %c0_23 = arith.constant 0 : index
    %c0_24 = arith.constant 0 : index
    %55 = vector.load %arg20[%c0_22, %c1, %c0_23, %c0_24] : memref<1x4x8x8xf32, #tpu.memory_space<vmem>>, vector<1x1x8x8xf32>
    %56 = vector.shape_cast %55 : vector<1x1x8x8xf32> to vector<8x8xf32>
    %57 = vector.shape_cast %54 : vector<8x8xf32> to vector<1x1x8x8xf32>
    tpu.vector_store %arg20[%c0_22, %c1, %c0_23, %c0_24], %57 {strides = array<i32>} : memref<1x4x8x8xf32, #tpu.memory_space<vmem>>, vector<1x1x8x8xf32>,
    %58 = arith.truncf %54 : vector<8x8xf32> to vector<8x8xbf16>
    %cst_25 = arith.constant dense<0.000000e+00> : vector<8x8xf32>
    %59 = tpu.matmul %58, %40, %cst_25 {dimension_numbers = #tpu.dot_dimension_numbers<[1], [0], [0], [1], [0, 0, 1, 1], [], []>} : vector<8x8xbf16>, vector<8x8xbf16>, vector<8x8xf32> -> vector<8x8xf32>
    %60 = vector.extract_strided_slice %9 {offsets = [0, 16], sizes = [8, 8], strides = [1, 1]} : vector<8x96xf32> to vector<8x8xf32>
    %61 = arith.truncf %60 : vector<8x8xf32> to vector<8x8xbf16>
    %62 = vector.extract_strided_slice %9 {offsets = [0, 48], sizes = [8, 8], strides = [1, 1]} : vector<8x96xf32> to vector<8x8xf32>
    %63 = arith.truncf %62 : vector<8x8xf32> to vector<8x8xbf16>
    %64 = vector.extract_strided_slice %9 {offsets = [0, 80], sizes = [8, 8], strides = [1, 1]} : vector<8x96xf32> to vector<8x8xf32>
    %65 = arith.truncf %64 : vector<8x8xf32> to vector<8x8xbf16>
    %cst_26 = arith.constant dense<0.000000e+00> : vector<8x8xf32>
    %66 = tpu.matmul %61, %63, %cst_26 {dimension_numbers = #tpu.dot_dimension_numbers<[1], [1], [0], [0], [0, 0, 1, 0], [], []>} : vector<8x8xbf16>, vector<8x8xbf16>, vector<8x8xf32> -> vector<8x8xf32>
    %cst_27 = arith.constant 0.353553385 : f32
    %67 = vector.broadcast %cst_27 : f32 to vector<8x8xf32>
    %68 = arith.mulf %66, %67 : vector<8x8xf32>
    %69 = vector.broadcast %3 : vector<1x8xf32> to vector<8x8xf32>
    %70 = arith.addf %68, %69 : vector<8x8xf32>
    %cst_28 = arith.constant dense<0xFF800000> : vector<8xf32>
    %71 = vector.multi_reduction <maximumf>, %70, %cst_28 [1] : vector<8x8xf32> to vector<8xf32>
    %72 = vector.shape_cast %71 : vector<8xf32> to vector<8x1xf32>
    %73 = vector.broadcast %72 : vector<8x1xf32> to vector<8x8xf32>
    %74 = arith.subf %70, %73 : vector<8x8xf32>
    %75 = math.exp %74 : vector<8x8xf32>
    %cst_29 = arith.constant dense<0.000000e+00> : vector<8xf32>
    %76 = vector.multi_reduction <add>, %75, %cst_29 [1] : vector<8x8xf32> to vector<8xf32>
    %77 = vector.shape_cast %76 : vector<8xf32> to vector<8x1xf32>
    %78 = vector.broadcast %77 : vector<8x1xf32> to vector<8x8xf32>
    %79 = arith.divf %75, %78 : vector<8x8xf32>
    %c0_30 = arith.constant 0 : index
    %c2 = arith.constant 2 : index
    %c0_31 = arith.constant 0 : index
    %c0_32 = arith.constant 0 : index
    %80 = vector.load %arg20[%c0_30, %c2, %c0_31, %c0_32] : memref<1x4x8x8xf32, #tpu.memory_space<vmem>>, vector<1x1x8x8xf32>
    %81 = vector.shape_cast %80 : vector<1x1x8x8xf32> to vector<8x8xf32>
    %82 = vector.shape_cast %79 : vector<8x8xf32> to vector<1x1x8x8xf32>
    tpu.vector_store %arg20[%c0_30, %c2, %c0_31, %c0_32], %82 {strides = array<i32>} : memref<1x4x8x8xf32, #tpu.memory_space<vmem>>, vector<1x1x8x8xf32>,
    %83 = arith.truncf %79 : vector<8x8xf32> to vector<8x8xbf16>
    %cst_33 = arith.constant dense<0.000000e+00> : vector<8x8xf32>
    %84 = tpu.matmul %83, %65, %cst_33 {dimension_numbers = #tpu.dot_dimension_numbers<[1], [0], [0], [1], [0, 0, 1, 1], [], []>} : vector<8x8xbf16>, vector<8x8xbf16>, vector<8x8xf32> -> vector<8x8xf32>
    %85 = vector.extract_strided_slice %9 {offsets = [0, 24], sizes = [8, 8], strides = [1, 1]} : vector<8x96xf32> to vector<8x8xf32>
    %86 = arith.truncf %85 : vector<8x8xf32> to vector<8x8xbf16>
    %87 = vector.extract_strided_slice %9 {offsets = [0, 56], sizes = [8, 8], strides = [1, 1]} : vector<8x96xf32> to vector<8x8xf32>
    %88 = arith.truncf %87 : vector<8x8xf32> to vector<8x8xbf16>
    %89 = vector.extract_strided_slice %9 {offsets = [0, 88], sizes = [8, 8], strides = [1, 1]} : vector<8x96xf32> to vector<8x8xf32>
    %90 = arith.truncf %89 : vector<8x8xf32> to vector<8x8xbf16>
    %cst_34 = arith.constant dense<0.000000e+00> : vector<8x8xf32>
    %91 = tpu.matmul %86, %88, %cst_34 {dimension_numbers = #tpu.dot_dimension_numbers<[1], [1], [0], [0], [0, 0, 1, 0], [], []>} : vector<8x8xbf16>, vector<8x8xbf16>, vector<8x8xf32> -> vector<8x8xf32>
    %cst_35 = arith.constant 0.353553385 : f32
    %92 = vector.broadcast %cst_35 : f32 to vector<8x8xf32>
    %93 = arith.mulf %91, %92 : vector<8x8xf32>
    %94 = vector.broadcast %3 : vector<1x8xf32> to vector<8x8xf32>
    %95 = arith.addf %93, %94 : vector<8x8xf32>
    %cst_36 = arith.constant dense<0xFF800000> : vector<8xf32>
    %96 = vector.multi_reduction <maximumf>, %95, %cst_36 [1] : vector<8x8xf32> to vector<8xf32>
    %97 = vector.shape_cast %96 : vector<8xf32> to vector<8x1xf32>
    %98 = vector.broadcast %97 : vector<8x1xf32> to vector<8x8xf32>
    %99 = arith.subf %95, %98 : vector<8x8xf32>
    %100 = math.exp %99 : vector<8x8xf32>
    %cst_37 = arith.constant dense<0.000000e+00> : vector<8xf32>
    %101 = vector.multi_reduction <add>, %100, %cst_37 [1] : vector<8x8xf32> to vector<8xf32>
    %102 = vector.shape_cast %101 : vector<8xf32> to vector<8x1xf32>
    %103 = vector.broadcast %102 : vector<8x1xf32> to vector<8x8xf32>
    %104 = arith.divf %100, %103 : vector<8x8xf32>
    %c0_38 = arith.constant 0 : index
    %c3 = arith.constant 3 : index
    %c0_39 = arith.constant 0 : index
    %c0_40 = arith.constant 0 : index
    %105 = vector.load %arg20[%c0_38, %c3, %c0_39, %c0_40] : memref<1x4x8x8xf32, #tpu.memory_space<vmem>>, vector<1x1x8x8xf32>
    %106 = vector.shape_cast %105 : vector<1x1x8x8xf32> to vector<8x8xf32>
    %107 = vector.shape_cast %104 : vector<8x8xf32> to vector<1x1x8x8xf32>
    tpu.vector_store %arg20[%c0_38, %c3, %c0_39, %c0_40], %107 {strides = array<i32>} : memref<1x4x8x8xf32, #tpu.memory_space<vmem>>, vector<1x1x8x8xf32>,
    %108 = arith.truncf %104 : vector<8x8xf32> to vector<8x8xbf16>
    %cst_41 = arith.constant dense<0.000000e+00> : vector<8x8xf32>
    %109 = tpu.matmul %108, %90, %cst_41 {dimension_numbers = #tpu.dot_dimension_numbers<[1], [0], [0], [1], [0, 0, 1, 1], [], []>} : vector<8x8xbf16>, vector<8x8xbf16>, vector<8x8xf32> -> vector<8x8xf32>
    %110 = tpu.concatenate %34, %59, %84, %109 in 1 : vector<8x8xf32>, vector<8x8xf32>, vector<8x8xf32>, vector<8x8xf32> -> vector<8x32xf32>
    %111 = arith.truncf %110 : vector<8x32xf32> to vector<8x32xbf16>
    %c0_42 = arith.constant 0 : index
    %c0_43 = arith.constant 0 : index
    %112 = vector.load %arg5[%c0_42, %c0_43] : memref<32x32xbf16, #tpu.memory_space<vmem>>, vector<32x32xbf16>
    %cst_44 = arith.constant dense<0.000000e+00> : vector<8x32xf32>
    %113 = tpu.matmul %111, %112, %cst_44 {dimension_numbers = #tpu.dot_dimension_numbers<[1], [0], [0], [1], [0, 0, 1, 1], [], []>} : vector<8x32xbf16>, vector<32x32xbf16>, vector<8x32xf32> -> vector<8x32xf32>
    %c0_45 = arith.constant 0 : index
    %c0_46 = arith.constant 0 : index
    %114 = vector.load %arg6[%c0_45, %c0_46] : memref<1x32xf32, #tpu.memory_space<vmem>>, vector<1x32xf32>
    %115 = vector.broadcast %114 : vector<1x32xf32> to vector<8x32xf32>
    %116 = arith.addf %113, %115 : vector<8x32xf32>
    %117 = arith.addf %116, %1 : vector<8x32xf32>
    %c0_47 = arith.constant 0 : index
    %c0_48 = arith.constant 0 : index
    %118 = vector.load %arg7[%c0_47, %c0_48] : memref<1x32xf32, #tpu.memory_space<vmem>>, vector<1x32xf32>
    %c0_49 = arith.constant 0 : index
    %c0_50 = arith.constant 0 : index
    %119 = vector.load %arg8[%c0_49, %c0_50] : memref<1x32xf32, #tpu.memory_space<vmem>>, vector<1x32xf32>
    %cst_51 = arith.constant dense<0.000000e+00> : vector<8xf32>
    %120 = vector.multi_reduction <add>, %117, %cst_51 [1] : vector<8x32xf32> to vector<8xf32>
    %121 = vector.shape_cast %120 : vector<8xf32> to vector<8x1xf32>
    %cst_52 = arith.constant 3.200000e+01 : f32
    %122 = vector.broadcast %cst_52 : f32 to vector<8x1xf32>
    %123 = arith.divf %121, %122 : vector<8x1xf32>
    %124 = vector.broadcast %123 : vector<8x1xf32> to vector<8x32xf32>
    %125 = arith.subf %117, %124 : vector<8x32xf32>
    %126 = arith.mulf %125, %125 : vector<8x32xf32>
    %cst_53 = arith.constant dense<0.000000e+00> : vector<8xf32>
    %127 = vector.multi_reduction <add>, %126, %cst_53 [1] : vector<8x32xf32> to vector<8xf32>
    %128 = vector.shape_cast %127 : vector<8xf32> to vector<8x1xf32>
    %cst_54 = arith.constant 3.200000e+01 : f32
    %129 = vector.broadcast %cst_54 : f32 to vector<8x1xf32>
    %130 = arith.divf %128, %129 : vector<8x1xf32>
    %131 = vector.broadcast %123 : vector<8x1xf32> to vector<8x32xf32>
    %132 = arith.subf %117, %131 : vector<8x32xf32>
    %cst_55 = arith.constant 9.99999996E-13 : f32
    %133 = vector.broadcast %cst_55 : f32 to vector<8x1xf32>
    %134 = arith.addf %130, %133 : vector<8x1xf32>
    %135 = math.rsqrt %134 : vector<8x1xf32>
    %136 = vector.broadcast %135 : vector<8x1xf32> to vector<8x32xf32>
    %137 = arith.mulf %132, %136 : vector<8x32xf32>
    %138 = vector.broadcast %118 : vector<1x32xf32> to vector<8x32xf32>
    %139 = arith.mulf %137, %138 : vector<8x32xf32>
    %140 = vector.broadcast %119 : vector<1x32xf32> to vector<8x32xf32>
    %141 = arith.addf %139, %140 : vector<8x32xf32>
    %142 = arith.truncf %141 : vector<8x32xf32> to vector<8x32xbf16>
    %c0_56 = arith.constant 0 : index
    %c0_57 = arith.constant 0 : index
    %143 = vector.load %arg9[%c0_56, %c0_57] : memref<32x64xbf16, #tpu.memory_space<vmem>>, vector<32x64xbf16>
    %cst_58 = arith.constant dense<0.000000e+00> : vector<8x64xf32>
    %144 = tpu.matmul %142, %143, %cst_58 {dimension_numbers = #tpu.dot_dimension_numbers<[1], [0], [0], [1], [0, 0, 1, 1], [], []>} : vector<8x32xbf16>, vector<32x64xbf16>, vector<8x64xf32> -> vector<8x64xf32>
    %c0_59 = arith.constant 0 : index
    %c0_60 = arith.constant 0 : index
    %145 = vector.load %arg10[%c0_59, %c0_60] : memref<1x64xf32, #tpu.memory_space<vmem>>, vector<1x64xf32>
    %146 = vector.broadcast %145 : vector<1x64xf32> to vector<8x64xf32>
    %147 = arith.addf %144, %146 : vector<8x64xf32>
    %cst_61 = arith.constant 5.000000e-01 : f32
    %148 = vector.broadcast %cst_61 : f32 to vector<8x64xf32>
    %149 = arith.mulf %148, %147 : vector<8x64xf32>
    %cst_62 = arith.constant 4.471500e-02 : f32
    %150 = vector.broadcast %cst_62 : f32 to vector<8x64xf32>
    %151 = arith.mulf %150, %147 : vector<8x64xf32>
    %152 = arith.mulf %151, %147 : vector<8x64xf32>
    %153 = arith.mulf %152, %147 : vector<8x64xf32>
    %154 = arith.addf %147, %153 : vector<8x64xf32>
    %cst_63 = arith.constant 0.797884583 : f32
    %155 = vector.broadcast %cst_63 : f32 to vector<8x64xf32>
    %156 = arith.mulf %155, %154 : vector<8x64xf32>
    %157 = math.tanh %156 : vector<8x64xf32>
    %cst_64 = arith.constant 1.000000e+00 : f32
    %158 = vector.broadcast %cst_64 : f32 to vector<8x64xf32>
    %159 = arith.addf %158, %157 : vector<8x64xf32>
    %160 = arith.mulf %149, %159 : vector<8x64xf32>
    %161 = arith.truncf %160 : vector<8x64xf32> to vector<8x64xbf16>
    %c0_65 = arith.constant 0 : index
    %c0_66 = arith.constant 0 : index
    %162 = vector.load %arg11[%c0_65, %c0_66] : memref<64x32xbf16, #tpu.memory_space<vmem>>, vector<64x32xbf16>
    %cst_67 = arith.constant dense<0.000000e+00> : vector<8x32xf32>
    %163 = tpu.matmul %161, %162, %cst_67 {dimension_numbers = #tpu.dot_dimension_numbers<[1], [0], [0], [1], [0, 0, 1, 1], [], []>} : vector<8x64xbf16>, vector<64x32xbf16>, vector<8x32xf32> -> vector<8x32xf32>
    %c0_68 = arith.constant 0 : index
    %c0_69 = arith.constant 0 : index
    %164 = vector.load %arg12[%c0_68, %c0_69] : memref<1x32xf32, #tpu.memory_space<vmem>>, vector<1x32xf32>
    %165 = vector.broadcast %164 : vector<1x32xf32> to vector<8x32xf32>
    %166 = arith.addf %163, %165 : vector<8x32xf32>
    %167 = arith.addf %166, %141 : vector<8x32xf32>
    %c0_70 = arith.constant 0 : index
    %c0_71 = arith.constant 0 : index
    %168 = vector.load %arg13[%c0_70, %c0_71] : memref<1x32xf32, #tpu.memory_space<vmem>>, vector<1x32xf32>
    %c0_72 = arith.constant 0 : index
    %c0_73 = arith.constant 0 : index
    %169 = vector.load %arg14[%c0_72, %c0_73] : memref<1x32xf32, #tpu.memory_space<vmem>>, vector<1x32xf32>
    %cst_74 = arith.constant dense<0.000000e+00> : vector<8xf32>
    %170 = vector.multi_reduction <add>, %167, %cst_74 [1] : vector<8x32xf32> to vector<8xf32>
    %171 = vector.shape_cast %170 : vector<8xf32> to vector<8x1xf32>
    %cst_75 = arith.constant 3.200000e+01 : f32
    %172 = vector.broadcast %cst_75 : f32 to vector<8x1xf32>
    %173 = arith.divf %171, %172 : vector<8x1xf32>
    %174 = vector.broadcast %173 : vector<8x1xf32> to vector<8x32xf32>
    %175 = arith.subf %167, %174 : vector<8x32xf32>
    %176 = arith.mulf %175, %175 : vector<8x32xf32>
    %cst_76 = arith.constant dense<0.000000e+00> : vector<8xf32>
    %177 = vector.multi_reduction <add>, %176, %cst_76 [1] : vector<8x32xf32> to vector<8xf32>
    %178 = vector.shape_cast %177 : vector<8xf32> to vector<8x1xf32>
    %cst_77 = arith.constant 3.200000e+01 : f32
    %179 = vector.broadcast %cst_77 : f32 to vector<8x1xf32>
    %180 = arith.divf %178, %179 : vector<8x1xf32>
    %181 = vector.broadcast %173 : vector<8x1xf32> to vector<8x32xf32>
    %182 = arith.subf %167, %181 : vector<8x32xf32>
    %cst_78 = arith.constant 9.99999996E-13 : f32
    %183 = vector.broadcast %cst_78 : f32 to vector<8x1xf32>
    %184 = arith.addf %180, %183 : vector<8x1xf32>
    %185 = math.rsqrt %184 : vector<8x1xf32>
    %186 = vector.broadcast %185 : vector<8x1xf32> to vector<8x32xf32>
    %187 = arith.mulf %182, %186 : vector<8x32xf32>
    %188 = vector.broadcast %168 : vector<1x32xf32> to vector<8x32xf32>
    %189 = arith.mulf %187, %188 : vector<8x32xf32>
    %190 = vector.broadcast %169 : vector<1x32xf32> to vector<8x32xf32>
    %191 = arith.addf %189, %190 : vector<8x32xf32>
    %c0_79 = arith.constant 0 : index
    %c0_80 = arith.constant 0 : index
    %c0_81 = arith.constant 0 : index
    %192 = vector.load %arg19[%c0_79, %c0_80, %c0_81] : memref<1x8x32xf32, #tpu.memory_space<vmem>>, vector<1x8x32xf32>
    %193 = vector.shape_cast %192 : vector<1x8x32xf32> to vector<8x32xf32>
    %194 = vector.shape_cast %191 : vector<8x32xf32> to vector<1x8x32xf32>
    tpu.vector_store %arg19[%c0_79, %c0_80, %c0_81], %194 {strides = array<i32>} : memref<1x8x32xf32, #tpu.memory_space<vmem>>, vector<1x8x32xf32>,
    %195 = vector.extract_strided_slice %191 {offsets = [0, 0], sizes = [1, 32], strides = [1, 1]} : vector<8x32xf32> to vector<1x32xf32>
    %196 = arith.truncf %195 : vector<1x32xf32> to vector<1x32xbf16>
    %c0_82 = arith.constant 0 : index
    %c0_83 = arith.constant 0 : index
    %197 = vector.load %arg15[%c0_82, %c0_83] : memref<32x32xbf16, #tpu.memory_space<vmem>>, vector<32x32xbf16>
    %cst_84 = arith.constant dense<0.000000e+00> : vector<1x32xf32>
    %198 = tpu.matmul %196, %197, %cst_84 {dimension_numbers = #tpu.dot_dimension_numbers<[1], [0], [0], [1], [0, 0, 1, 1], [], []>} : vector<1x32xbf16>, vector<32x32xbf16>, vector<1x32xf32> -> vector<1x32xf32>
    %c0_85 = arith.constant 0 : index
    %c0_86 = arith.constant 0 : index
    %199 = vector.load %arg16[%c0_85, %c0_86] : memref<1x32xf32, #tpu.memory_space<vmem>>, vector<1x32xf32>
    %200 = arith.addf %198, %199 : vector<1x32xf32>
    %201 = math.tanh %200 : vector<1x32xf32>
    %202 = arith.truncf %201 : vector<1x32xf32> to vector<1x32xbf16>
    %c0_87 = arith.constant 0 : index
    %c0_88 = arith.constant 0 : index
    %203 = vector.load %arg17[%c0_87, %c0_88] : memref<32x2xbf16, #tpu.memory_space<vmem>>, vector<32x2xbf16>
    %cst_89 = arith.constant dense<0.000000e+00> : vector<1x2xf32>
    %204 = tpu.matmul %202, %203, %cst_89 {dimension_numbers = #tpu.dot_dimension_numbers<[1], [0], [0], [1], [0, 0, 1, 1], [], []>} : vector<1x32xbf16>, vector<32x2xbf16>, vector<1x2xf32> -> vector<1x2xf32>
    %c0_90 = arith.constant 0 : index
    %c0_91 = arith.constant 0 : index
    %205 = vector.load %arg18[%c0_90, %c0_91] : memref<1x2xf32, #tpu.memory_space<vmem>>, vector<1x2xf32>
    %206 = arith.addf %204, %205 : vector<1x2xf32>
    %c0_92 = arith.constant 0 : index
    %c0_93 = arith.constant 0 : index
    %c0_94 = arith.constant 0 : index
    %207 = vector.load %arg21[%c0_92, %c0_93, %c0_94] : memref<1x1x2xf32, #tpu.memory_space<vmem>>, vector<1x1x2xf32>
    %208 = vector.shape_cast %207 : vector<1x1x2xf32> to vector<1x2xf32>
    %209 = vector.shape_cast %206 : vector<1x2xf32> to vector<1x1x2xf32>
    tpu.vector_store %arg21[%c0_92, %c0_93, %c0_94], %209 {strides = array<i32>} : memref<1x1x2xf32, #tpu.memory_space<vmem>>, vector<1x1x2xf32>,
    return
  }
  func.func @transform_0(%arg0: i32) -> (i32, i32, i32) {
    %c0_i32 = arith.constant 0 : i32
    %c0_i32_0 = arith.constant 0 : i32
    %c0_i32_1 = arith.constant 0 : i32
    return %arg0, %c0_i32, %c0_i32_0 : i32, i32, i32
  }
  func.func @transform_1(%arg0: i32) -> (i32, i32, i32) {
    %c0_i32 = arith.constant 0 : i32
    %c0_i32_0 = arith.constant 0 : i32
    %c0_i32_1 = arith.constant 0 : i32
    return %arg0, %c0_i32, %c0_i32_0 : i32, i32, i32
  }
  func.func @transform_2(%arg0: i32) -> (i32, i32) {
    %c0_i32 = arith.constant 0 : i32
    %c0_i32_0 = arith.constant 0 : i32
    %c0_i32_1 = arith.constant 0 : i32
    return %c0_i32, %c0_i32_0 : i32, i32
  }
  func.func @transform_3(%arg0: i32) -> (i32, i32) {
    %c0_i32 = arith.constant 0 : i32
    %c0_i32_0 = arith.constant 0 : i32
    %c0_i32_1 = arith.constant 0 : i32
    return %c0_i32, %c0_i32_0 : i32, i32
  }
  func.func @transform_4(%arg0: i32) -> (i32, i32) {
    %c0_i32 = arith.constant 0 : i32
    %c0_i32_0 = arith.constant 0 : i32
    %c0_i32_1 = arith.constant 0 : i32
    return %c0_i32, %c0_i32_0 : i32, i32
  }
  func.func @transform_5(%arg0: i32) -> (i32, i32) {
    %c0_i32 = arith.constant 0 : i32
    %c0_i32_0 = arith.constant 0 : i32
    %c0_i32_1 = arith.constant 0 : i32
    return %c0_i32, %c0_i32_0 : i32, i32
  }
  func.func @transform_6(%arg0: i32) -> (i32, i32) {
    %c0_i32 = arith.constant 0 : i32
    %c0_i32_0 = arith.constant 0 : i32
    %c0_i32_1 = arith.constant 0 : i32
    return %c0_i32, %c0_i32_0 : i32, i32
  }
  func.func @transform_7(%arg0: i32) -> (i32, i32) {
    %c0_i32 = arith.constant 0 : i32
    %c0_i32_0 = arith.constant 0 : i32
    %c0_i32_1 = arith.constant 0 : i32
    return %c0_i32, %c0_i32_0 : i32, i32
  }
  func.func @transform_8(%arg0: i32) -> (i32, i32) {
    %c0_i32 = arith.constant 0 : i32
    %c0_i32_0 = arith.constant 0 : i32
    %c0_i32_1 = arith.constant 0 : i32
    return %c0_i32, %c0_i32_0 : i32, i32
  }
  func.func @transform_9(%arg0: i32) -> (i32, i32) {
    %c0_i32 = arith.constant 0 : i32
    %c0_i32_0 = arith.constant 0 : i32
    %c0_i32_1 = arith.constant 0 : i32
    return %c0_i32, %c0_i32_0 : i32, i32
  }
  func.func @transform_10(%arg0: i32) -> (i32, i32) {
    %c0_i32 = arith.constant 0 : i32
    %c0_i32_0 = arith.constant 0 : i32
    %c0_i32_1 = arith.constant 0 : i32
    return %c0_i32, %c0_i32_0 : i32, i32
  }
  func.func @transform_11(%arg0: i32) -> (i32, i32) {
    %c0_i32 = arith.constant 0 : i32
    %c0_i32_0 = arith.constant 0 : i32
    %c0_i32_1 = arith.constant 0 : i32
    return %c0_i32, %c0_i32_0 : i32, i32
  }
  func.func @transform_12(%arg0: i32) -> (i32, i32) {
    %c0_i32 = arith.constant 0 : i32
    %c0_i32_0 = arith.constant 0 : i32
    %c0_i32_1 = arith.constant 0 : i32
    return %c0_i32, %c0_i32_0 : i32, i32
  }
  func.func @transform_13(%arg0: i32) -> (i32, i32) {
    %c0_i32 = arith.constant 0 : i32
    %c0_i32_0 = arith.constant 0 : i32
    %c0_i32_1 = arith.constant 0 : i32
    return %c0_i32, %c0_i32_0 : i32, i32
  }
  func.func @transform_14(%arg0: i32) -> (i32, i32) {
    %c0_i32 = arith.constant 0 : i32
    %c0_i32_0 = arith.constant 0 : i32
    %c0_i32_1 = arith.constant 0 : i32
    return %c0_i32, %c0_i32_0 : i32, i32
  }
  func.func @transform_15(%arg0: i32) -> (i32, i32) {
    %c0_i32 = arith.constant 0 : i32
    %c0_i32_0 = arith.constant 0 : i32
    %c0_i32_1 = arith.constant 0 : i32
    return %c0_i32, %c0_i32_0 : i32, i32
  }
  func.func @transform_16(%arg0: i32) -> (i32, i32) {
    %c0_i32 = arith.constant 0 : i32
    %c0_i32_0 = arith.constant 0 : i32
    %c0_i32_1 = arith.constant 0 : i32
    return %c0_i32, %c0_i32_0 : i32, i32
  }
  func.func @transform_17(%arg0: i32) -> (i32, i32) {
    %c0_i32 = arith.constant 0 : i32
    %c0_i32_0 = arith.constant 0 : i32
    %c0_i32_1 = arith.constant 0 : i32
    return %c0_i32, %c0_i32_0 : i32, i32
  }
  func.func @transform_18(%arg0: i32) -> (i32, i32, i32) {
    %c0_i32 = arith.constant 0 : i32
    %c0_i32_0 = arith.constant 0 : i32
    %c0_i32_1 = arith.constant 0 : i32
    return %arg0, %c0_i32, %c0_i32_0 : i32, i32, i32
  }
  func.func @transform_19(%arg0: i32) -> (i32, i32, i32, i32) {
    %c0_i32 = arith.constant 0 : i32
    %c0_i32_0 = arith.constant 0 : i32
    %c0_i32_1 = arith.constant 0 : i32
    %c0_i32_2 = arith.constant 0 : i32
    return %arg0, %c0_i32, %c0_i32_0, %c0_i32_1 : i32, i32, i32, i32
  }
  func.func @transform_20(%arg0: i32) -> (i32, i32, i32) {
    %c0_i32 = arith.constant 0 : i32
    %c0_i32_0 = arith.constant 0 : i32
    %c0_i32_1 = arith.constant 0 : i32
    return %arg0, %c0_i32, %c0_i32_0 : i32, i32, i32
  }
}

</mosaic_0001>

<llo_original>
// kernel: bert_classifier_forward.3
$region0: #{bert_classifier_forward.3}
  #allocation0 [shape = 'u32[]', space=smem, size = 0x4, offset = 0x4, fixed_abs, tag = 'smem constant byte address 0x4 - core index']
  #allocation1 [shape = 'u32[144,128]{1,0:T(1,128)}', space=vmem, size = 0x12000, scoped, tag = 'internal scratch']
  %s0 = inlined_call_operand.vmem [shape: f32[2,8,32], index: 0, kind: input, shape index: {}]
  %s1 = inlined_call_operand.vmem [shape: f32[8,32], index: 1, kind: input, shape index: {}]
  %s2 = inlined_call_operand.vmem [shape: f32[1,32], index: 2, kind: input, shape index: {}]
  %s3 = inlined_call_operand.vmem [shape: f32[1,32], index: 3, kind: input, shape index: {}]
  %s4 = inlined_call_operand.vmem [shape: f32[1,32], index: 4, kind: input, shape index: {}]
  %s5 = inlined_call_operand.vmem [shape: f32[2,8,32], index: 5, kind: output, shape index: {}]
  %s6 = sld [smem:[#allocation0]]
  $region30: #{bert_classifier_forward.3} parent=0
    _
  %s8 = ssub.s32 1, %s6
  %s9 = scalar_select 0, %s8, %s6
  // Predicated region
  $region2: #{bert_classifier_forward.3} parent=0 // pred_check
    _
  $region3: #{bert_classifier_forward.3} parent=0 // pred_check_branch
    %11 = sbr.rel (0) target = $region5
  $region4: #{bert_classifier_forward.3} parent=0 // pred_region
    _
  $region5: #{bert_classifier_forward.3} parent=0 // pred_fallthru
    _
  // Predicated region
  $region6: #{bert_classifier_forward.3} parent=0 // pred_check
    _
  $region7: #{bert_classifier_forward.3} parent=0 // pred_check_branch
    %13 = sbr.rel (0) target = $region9
  $region8: #{bert_classifier_forward.3} parent=0 // pred_region
    _
  $region9: #{bert_classifier_forward.3} parent=0 // pred_fallthru
    _
  // Predicated region
  $region10: #{bert_classifier_forward.3} parent=0 // pred_check
    _
  $region11: #{bert_classifier_forward.3} parent=0 // pred_check_branch
    %15 = sbr.rel (0) target = $region13
  $region12: #{bert_classifier_forward.3} parent=0 // pred_region
    _
  $region13: #{bert_classifier_forward.3} parent=0 // pred_fallthru
    _
  // Predicated region
  $region14: #{bert_classifier_forward.3} parent=0 // pred_check
    _
  $region15: #{bert_classifier_forward.3} parent=0 // pred_check_branch
    %17 = sbr.rel (0) target = $region17
  $region16: #{bert_classifier_forward.3} parent=0 // pred_region
    _
  $region17: #{bert_classifier_forward.3} parent=0 // pred_fallthru
    _
  // Predicated region
  $region18: #{bert_classifier_forward.3} parent=0 // pred_check
    _
  $region19: #{bert_classifier_forward.3} parent=0 // pred_check_branch
    %19 = sbr.rel (0) target = $region21
  $region20: #{bert_classifier_forward.3} parent=0 // pred_region
    _
  $region21: #{bert_classifier_forward.3} parent=0 // pred_fallthru
    _
  %v20 = vld [vmem:[%s0] sm:$0xff]
  %v21 = vld [vmem:[%s0 + $0x8] sm:$0xff]
  %v22 = vld [vmem:[%s1] sm:$0xff]
  %v23 = vadd.f32 %v20, %v22
  %v24 = vadd.f32 %v21, %v22
  %v25 = vld [vmem:[%s2] sm:$0x1]
  %v27 = vlaneseq
  %v28 = vshrl.u32 %v27, 7
  %v29 = vsub.s32 0, %v28
  %v30 = vrot.slane %v25, %v29
  %v32 = vadd.f32 %v23, %v30
  %v33 = vadd.f32 %v24, %v30
  %v34 = vld [vmem:[%s3] sm:$0x1]
  %v35 = vld [vmem:[%s4] sm:$0x1]
  %vm36 = vcmask 261120
  %v37 = vsel %vm36, %v32, 0.0
  %38 = vadd.xlane.f32.xlu0 %v37
  %v39 = vpop.xlane.xlu0 %38
  %v40 = vsel %vm36, %v33, 0.0
  %41 = vadd.xlane.f32.xlu0 %v40
  %v42 = vpop.xlane.xlu0 %41
  %v43 = vrcp.pop 32.0
  %v44 = vmul.f32 %v39, %v43
  %v45 = vmul.f32 %v42, %v43
  %v46 = vsub.f32 %v32, %v44
  %v47 = vsub.f32 %v33, %v45
  %v48 = vmul.f32 %v46, %v46
  %v49 = vmul.f32 %v47, %v47
  %v50 = vsel %vm36, %v48, 0.0
  %51 = vadd.xlane.f32.xlu0 %v50
  %v52 = vpop.xlane.xlu0 %51
  %v53 = vsel %vm36, %v49, 0.0
  %54 = vadd.xlane.f32.xlu0 %v53
  %v55 = vpop.xlane.xlu0 %54
  %v56 = vmul.f32 %v52, %v43
  %v57 = vmul.f32 %v55, %v43
  %v58 = vadd.f32 %v56, 1e-12
  %v59 = vadd.f32 %v57, 1e-12
  %v60 = vrsqrt.pop %v58
  %v61 = vrsqrt.pop %v59
  %v62 = vmul.f32 %v46, %v60
  %v63 = vmul.f32 %v47, %v61
  %v65 = vlaneseq
  %v66 = vshrl.u32 %v65, 7
  %v67 = vsub.s32 0, %v66
  %v68 = vrot.slane %v34, %v67
  %v70 = vmul.f32 %v62, %v68
  %v71 = vmul.f32 %v63, %v68
  %v73 = vlaneseq
  %v74 = vshrl.u32 %v73, 7
  %v75 = vsub.s32 0, %v74
  %v76 = vrot.slane %v35, %v75
  %v78 = vadd.f32 %v70, %v76
  %v79 = vadd.f32 %v71, %v76
  %80 = vst.msk [vmem:[%s5] sm:$0xff] %vm36, %v78
  %81 = vst.msk [vmem:[%s5 + $0x8] sm:$0xff] %vm36, %v79
  // Predicated region
  $region22: #{bert_classifier_forward.3} parent=0 // pred_check
    _
  $region23: #{bert_classifier_forward.3} parent=0 // pred_check_branch
    %83 = sbr.rel (0) target = $region25
  $region24: #{bert_classifier_forward.3} parent=0 // pred_region
    _
  $region25: #{bert_classifier_forward.3} parent=0 // pred_fallthru
    _
  // Predicated region
  $region26: #{bert_classifier_forward.3} parent=0 // pred_check
    _
  $region27: #{bert_classifier_forward.3} parent=0 // pred_check_branch
    %85 = sbr.rel (0) target = $region29
  $region28: #{bert_classifier_forward.3} parent=0 // pred_region
    _
  $region29: #{bert_classifier_forward.3} parent=0 // pred_fallthru
    _

// kernel: bert_classifier_forward.4
$region0: #{bert_classifier_forward.4}
  #allocation0 [shape = 'u32[]', space=smem, size = 0x4, offset = 0x4, fixed_abs, tag = 'smem constant byte address 0x4 - core index']
  #allocation1 [shape = 'u32[144,128]{1,0:T(1,128)}', space=vmem, size = 0x12000, scoped, tag = 'internal scratch']
  %s0 = inlined_call_operand.vmem [shape: f32[2,8,32], index: 0, kind: input, shape index: {}]
  %s1 = inlined_call_operand.vmem [shape: f32[2,1,8], index: 1, kind: input, shape index: {}]
  %s2 = inlined_call_operand.vmem [shape: bf16[32,96], index: 2, kind: input, shape index: {}]
  %s3 = inlined_call_operand.vmem [shape: f32[1,96], index: 3, kind: input, shape index: {}]
  %s4 = inlined_call_operand.vmem [shape: bf16[32,32], index: 4, kind: input, shape index: {}]
  %s5 = inlined_call_operand.vmem [shape: f32[1,32], index: 5, kind: input, shape index: {}]
  %s6 = inlined_call_operand.vmem [shape: f32[1,32], index: 6, kind: input, shape index: {}]
  %s7 = inlined_call_operand.vmem [shape: f32[1,32], index: 7, kind: input, shape index: {}]
  %s8 = inlined_call_operand.vmem [shape: bf16[32,64], index: 8, kind: input, shape index: {}]
  %s9 = inlined_call_operand.vmem [shape: f32[1,64], index: 9, kind: input, shape index: {}]
  %s10 = inlined_call_operand.vmem [shape: bf16[64,32], index: 10, kind: input, shape index: {}]
  %s11 = inlined_call_operand.vmem [shape: f32[1,32], index: 11, kind: input, shape index: {}]
  %s12 = inlined_call_operand.vmem [shape: f32[1,32], index: 12, kind: input, shape index: {}]
  %s13 = inlined_call_operand.vmem [shape: f32[1,32], index: 13, kind: input, shape index: {}]
  %s14 = inlined_call_operand.vmem [shape: f32[2,8,32], index: 14, kind: output, shape index: {0}]
  %s15 = inlined_call_operand.hbm [shape: f32[2,4,8,8], index: 15, kind: output, shape index: {1}]
  %16 = xla_tuple %s14, %s15
  %s17 = sld [smem:[#allocation0]]
  $region97: #{bert_classifier_forward.4} parent=0
    _
  %s19 = ssub.s32 1, %s17
  %s20 = scalar_select 0, %s19, %s17
  $region1: #{bert_classifier_forward.4} parent=0
    #allocation2 [shape = 'u8[32768]{0}', space=vmem, size = 0x8000, scoped, tag = 'output window, operand 1']
    #allocation3 [shape = 's32[2]{0}', space=sflag, size = 0x8, scoped, tag = 'scoped memory for bert_classifier_forward.4']
    %21 = vsyncpa [#allocation3], 0
    %s22 = scalar_lea.sflag [#allocation3], 1
    %23 = vsyncpa %s22, 0
    loop: start=0, step=1, limit=4
    $region2: #{bert_classifier_forward.4} parent=1 // loop_pre_header
      _
    $region3: #{bert_classifier_forward.4} parent=1 // loop_header
      %s25 = sphi 0, %s29
      %p26 = scmp.ge.s32.totalorder %s25, 4
      %s35 = sphi 0, %s37
      %s38 = sphi 0, %s35
      %s39 = sphi 0, %s38
      %s55 = sphi 0, %s39
      %s61 = sphi 0, %s63
      %s64 = sphi 0, %s61
      %s65 = sphi 0, %s64
      %s81 = sphi 0, %s65
      %s85 = sphi 0, %s85
      %s87 = sphi 0, %s85
      %s88 = sphi 0, %s87
      %s102 = sphi 0, %s88
      %s106 = sphi 0, %s106
      %s108 = sphi 0, %s106
      %s109 = sphi 0, %s108
      %s123 = sphi 0, %s109
      %s127 = sphi 0, %s127
      %s129 = sphi 0, %s127
      %s130 = sphi 0, %s129
      %s144 = sphi 0, %s130
      %s148 = sphi 0, %s148
      %s150 = sphi 0, %s148
      %s151 = sphi 0, %s150
      %s165 = sphi 0, %s151
      %s169 = sphi 0, %s169
      %s171 = sphi 0, %s169
      %s172 = sphi 0, %s171
      %s186 = sphi 0, %s172
      %s190 = sphi 0, %s190
      %s192 = sphi 0, %s190
      %s193 = sphi 0, %s192
      %s207 = sphi 0, %s193
      %s211 = sphi 0, %s211
      %s213 = sphi 0, %s211
      %s214 = sphi 0, %s213
      %s228 = sphi 0, %s214
      %s232 = sphi 0, %s232
      %s234 = sphi 0, %s232
      %s235 = sphi 0, %s234
      %s249 = sphi 0, %s235
      %s253 = sphi 0, %s253
      %s255 = sphi 0, %s253
      %s256 = sphi 0, %s255
      %s270 = sphi 0, %s256
      %s274 = sphi 0, %s274
      %s276 = sphi 0, %s274
      %s277 = sphi 0, %s276
      %s291 = sphi 0, %s277
      %s295 = sphi 0, %s295
      %s297 = sphi 0, %s295
      %s298 = sphi 0, %s297
      %s312 = sphi 0, %s298
      %s316 = sphi 0, %s316
      %s318 = sphi 0, %s316
      %s319 = sphi 0, %s318
      %s333 = sphi 0, %s319
      %s339 = sphi 0, %s341
      %s342 = sphi 0, %s339
      %s343 = sphi 0, %s342
      %s359 = sphi 0, %s343
      %s365 = sphi 0, %s367
      %s368 = sphi 0, %s365
      %s369 = sphi 0, %s368
      %s385 = sphi 0, %s369
    $region4: #{bert_classifier_forward.4} parent=1 // loop_header_branch
      %28 = sbr.rel (%p26) target = $region8
    $region5: #{bert_classifier_forward.4} parent=1 // loop_body
      %s30 = ssub.s32 %s25, 1
      %s31 = ssub.s32 %s25, 2
      %s32 = sadd.s32 %s25, 1
      %s33 = ssub.s32 %s25, %s32
      %p34 = scmp.eq.s32.totalorder %s33, 0
      %s36 = sadd.s32 %s35, 1
      %s37 = scalar_select %p34, %s35, %s36
      %p40 = pneg %p34
      %p41 = scmp.eq.s32.totalorder %s25, 1
      %p42 = por %p40, %p41
      %p43 = scmp.ne.s32.totalorder %s35, %s38
      %p44 = scmp.eq.s32.totalorder %s25, 0
      %p45 = por %p43, %p44
      %p46 = scmp.ne.s32.totalorder %s35, %s38
      %p47 = scmp.eq.s32.totalorder %s30, 1
      %p48 = por %p46, %p47
      %p49 = scmp.ne.s32.totalorder %s38, %s39
      %p50 = scmp.eq.s32.totalorder %s30, 0
      %p51 = por %p49, %p50
      %p52 = scmp.ne.s32.totalorder %s38, %s39
      %p53 = scmp.eq.s32.totalorder %s31, 1
      %p54 = por %p52, %p53
      %p56 = scmp.ne.s32.totalorder %s39, %s55
      %p57 = scmp.eq.s32.totalorder %s31, 0
      %p58 = por %p56, %p57
      %s59 = ssub.s32 %s25, %s32
      %p60 = scmp.eq.s32.totalorder %s59, 0
      %s62 = sadd.s32 %s61, 1
      %s63 = scalar_select %p60, %s61, %s62
      %p66 = pneg %p60
      %p67 = scmp.eq.s32.totalorder %s25, 1
      %p68 = por %p66, %p67
      %p69 = scmp.ne.s32.totalorder %s61, %s64
      %p70 = scmp.eq.s32.totalorder %s25, 0
      %p71 = por %p69, %p70
      %p72 = scmp.ne.s32.totalorder %s61, %s64
      %p73 = scmp.eq.s32.totalorder %s30, 1
      %p74 = por %p72, %p73
      %p75 = scmp.ne.s32.totalorder %s64, %s65
      %p76 = scmp.eq.s32.totalorder %s30, 0
      %p77 = por %p75, %p76
      %p78 = scmp.ne.s32.totalorder %s64, %s65
      %p79 = scmp.eq.s32.totalorder %s31, 1
      %p80 = por %p78, %p79
      %p82 = scmp.ne.s32.totalorder %s65, %s81
      %p83 = scmp.eq.s32.totalorder %s31, 0
      %p84 = por %p82, %p83
      %s86 = sadd.s32 %s85, 1
      %p89 = scmp.eq.s32.totalorder %s25, 1
      %p90 = scmp.ne.s32.totalorder %s85, %s87
      %p91 = scmp.eq.s32.totalorder %s25, 0
      %p92 = por %p90, %p91
      %p93 = scmp.ne.s32.totalorder %s85, %s87
      %p94 = scmp.eq.s32.totalorder %s30, 1
      %p95 = por %p93, %p94
      %p96 = scmp.ne.s32.totalorder %s87, %s88
      %p97 = scmp.eq.s32.totalorder %s30, 0
      %p98 = por %p96, %p97
      %p99 = scmp.ne.s32.totalorder %s87, %s88
      %p100 = scmp.eq.s32.totalorder %s31, 1
      %p101 = por %p99, %p100
      %p103 = scmp.ne.s32.totalorder %s88, %s102
      %p104 = scmp.eq.s32.totalorder %s31, 0
      %p105 = por %p103, %p104
      %s107 = sadd.s32 %s106, 1
      %p110 = scmp.eq.s32.totalorder %s25, 1
      %p111 = scmp.ne.s32.totalorder %s106, %s108
      %p112 = scmp.eq.s32.totalorder %s25, 0
      %p113 = por %p111, %p112
      %p114 = scmp.ne.s32.totalorder %s106, %s108
      %p115 = scmp.eq.s32.totalorder %s30, 1
      %p116 = por %p114, %p115
      %p117 = scmp.ne.s32.totalorder %s108, %s109
      %p118 = scmp.eq.s32.totalorder %s30, 0
      %p119 = por %p117, %p118
      %p120 = scmp.ne.s32.totalorder %s108, %s109
      %p121 = scmp.eq.s32.totalorder %s31, 1
      %p122 = por %p120, %p121
      %p124 = scmp.ne.s32.totalorder %s109, %s123
      %p125 = scmp.eq.s32.totalorder %s31, 0
      %p126 = por %p124, %p125
      %s128 = sadd.s32 %s127, 1
      %p131 = scmp.eq.s32.totalorder %s25, 1
      %p132 = scmp.ne.s32.totalorder %s127, %s129
      %p133 = scmp.eq.s32.totalorder %s25, 0
      %p134 = por %p132, %p133
      %p135 = scmp.ne.s32.totalorder %s127, %s129
      %p136 = scmp.eq.s32.totalorder %s30, 1
      %p137 = por %p135, %p136
      %p138 = scmp.ne.s32.totalorder %s129, %s130
      %p139 = scmp.eq.s32.totalorder %s30, 0
      %p140 = por %p138, %p139
      %p141 = scmp.ne.s32.totalorder %s129, %s130
      %p142 = scmp.eq.s32.totalorder %s31, 1
      %p143 = por %p141, %p142
      %p145 = scmp.ne.s32.totalorder %s130, %s144
      %p146 = scmp.eq.s32.totalorder %s31, 0
      %p147 = por %p145, %p146
      %s149 = sadd.s32 %s148, 1
      %p152 = scmp.eq.s32.totalorder %s25, 1
      %p153 = scmp.ne.s32.totalorder %s148, %s150
      %p154 = scmp.eq.s32.totalorder %s25, 0
      %p155 = por %p153, %p154
      %p156 = scmp.ne.s32.totalorder %s148, %s150
      %p157 = scmp.eq.s32.totalorder %s30, 1
      %p158 = por %p156, %p157
      %p159 = scmp.ne.s32.totalorder %s150, %s151
      %p160 = scmp.eq.s32.totalorder %s30, 0
      %p161 = por %p159, %p160
      %p162 = scmp.ne.s32.totalorder %s150, %s151
      %p163 = scmp.eq.s32.totalorder %s31, 1
      %p164 = por %p162, %p163
      %p166 = scmp.ne.s32.totalorder %s151, %s165
      %p167 = scmp.eq.s32.totalorder %s31, 0
      %p168 = por %p166, %p167
      %s170 = sadd.s32 %s169, 1
      %p173 = scmp.eq.s32.totalorder %s25, 1
      %p174 = scmp.ne.s32.totalorder %s169, %s171
      %p175 = scmp.eq.s32.totalorder %s25, 0
      %p176 = por %p174, %p175
      %p177 = scmp.ne.s32.totalorder %s169, %s171
      %p178 = scmp.eq.s32.totalorder %s30, 1
      %p179 = por %p177, %p178
      %p180 = scmp.ne.s32.totalorder %s171, %s172
      %p181 = scmp.eq.s32.totalorder %s30, 0
      %p182 = por %p180, %p181
      %p183 = scmp.ne.s32.totalorder %s171, %s172
      %p184 = scmp.eq.s32.totalorder %s31, 1
      %p185 = por %p183, %p184
      %p187 = scmp.ne.s32.totalorder %s172, %s186
      %p188 = scmp.eq.s32.totalorder %s31, 0
      %p189 = por %p187, %p188
      %s191 = sadd.s32 %s190, 1
      %p194 = scmp.eq.s32.totalorder %s25, 1
      %p195 = scmp.ne.s32.totalorder %s190, %s192
      %p196 = scmp.eq.s32.totalorder %s25, 0
      %p197 = por %p195, %p196
      %p198 = scmp.ne.s32.totalorder %s190, %s192
      %p199 = scmp.eq.s32.totalorder %s30, 1
      %p200 = por %p198, %p199
      %p201 = scmp.ne.s32.totalorder %s192, %s193
      %p202 = scmp.eq.s32.totalorder %s30, 0
      %p203 = por %p201, %p202
      %p204 = scmp.ne.s32.totalorder %s192, %s193
      %p205 = scmp.eq.s32.totalorder %s31, 1
      %p206 = por %p204, %p205
      %p208 = scmp.ne.s32.totalorder %s193, %s207
      %p209 = scmp.eq.s32.totalorder %s31, 0
      %p210 = por %p208, %p209
      %s212 = sadd.s32 %s211, 1
      %p215 = scmp.eq.s32.totalorder %s25, 1
      %p216 = scmp.ne.s32.totalorder %s211, %s213
      %p217 = scmp.eq.s32.totalorder %s25, 0
      %p218 = por %p216, %p217
      %p219 = scmp.ne.s32.totalorder %s211, %s213
      %p220 = scmp.eq.s32.totalorder %s30, 1
      %p221 = por %p219, %p220
      %p222 = scmp.ne.s32.totalorder %s213, %s214
      %p223 = scmp.eq.s32.totalorder %s30, 0
      %p224 = por %p222, %p223
      %p225 = scmp.ne.s32.totalorder %s213, %s214
      %p226 = scmp.eq.s32.totalorder %s31, 1
      %p227 = por %p225, %p226
      %p229 = scmp.ne.s32.totalorder %s214, %s228
      %p230 = scmp.eq.s32.totalorder %s31, 0
      %p231 = por %p229, %p230
      %s233 = sadd.s32 %s232, 1
      %p236 = scmp.eq.s32.totalorder %s25, 1
      %p237 = scmp.ne.s32.totalorder %s232, %s234
      %p238 = scmp.eq.s32.totalorder %s25, 0
      %p239 = por %p237, %p238
      %p240 = scmp.ne.s32.totalorder %s232, %s234
      %p241 = scmp.eq.s32.totalorder %s30, 1
      %p242 = por %p240, %p241
      %p243 = scmp.ne.s32.totalorder %s234, %s235
      %p244 = scmp.eq.s32.totalorder %s30, 0
      %p245 = por %p243, %p244
      %p246 = scmp.ne.s32.totalorder %s234, %s235
      %p247 = scmp.eq.s32.totalorder %s31, 1
      %p248 = por %p246, %p247
      %p250 = scmp.ne.s32.totalorder %s235, %s249
      %p251 = scmp.eq.s32.totalorder %s31, 0
      %p252 = por %p250, %p251
      %s254 = sadd.s32 %s253, 1
      %p257 = scmp.eq.s32.totalorder %s25, 1
      %p258 = scmp.ne.s32.totalorder %s253, %s255
      %p259 = scmp.eq.s32.totalorder %s25, 0
      %p260 = por %p258, %p259
      %p261 = scmp.ne.s32.totalorder %s253, %s255
      %p262 = scmp.eq.s32.totalorder %s30, 1
      %p263 = por %p261, %p262
      %p264 = scmp.ne.s32.totalorder %s255, %s256
      %p265 = scmp.eq.s32.totalorder %s30, 0
      %p266 = por %p264, %p265
      %p267 = scmp.ne.s32.totalorder %s255, %s256
      %p268 = scmp.eq.s32.totalorder %s31, 1
      %p269 = por %p267, %p268
      %p271 = scmp.ne.s32.totalorder %s256, %s270
      %p272 = scmp.eq.s32.totalorder %s31, 0
      %p273 = por %p271, %p272
      %s275 = sadd.s32 %s274, 1
      %p278 = scmp.eq.s32.totalorder %s25, 1
      %p279 = scmp.ne.s32.totalorder %s274, %s276
      %p280 = scmp.eq.s32.totalorder %s25, 0
      %p281 = por %p279, %p280
      %p282 = scmp.ne.s32.totalorder %s274, %s276
      %p283 = scmp.eq.s32.totalorder %s30, 1
      %p284 = por %p282, %p283
      %p285 = scmp.ne.s32.totalorder %s276, %s277
      %p286 = scmp.eq.s32.totalorder %s30, 0
      %p287 = por %p285, %p286
      %p288 = scmp.ne.s32.totalorder %s276, %s277
      %p289 = scmp.eq.s32.totalorder %s31, 1
      %p290 = por %p288, %p289
      %p292 = scmp.ne.s32.totalorder %s277, %s291
      %p293 = scmp.eq.s32.totalorder %s31, 0
      %p294 = por %p292, %p293
      %s296 = sadd.s32 %s295, 1
      %p299 = scmp.eq.s32.totalorder %s25, 1
      %p300 = scmp.ne.s32.totalorder %s295, %s297
      %p301 = scmp.eq.s32.totalorder %s25, 0
      %p302 = por %p300, %p301
      %p303 = scmp.ne.s32.totalorder %s295, %s297
      %p304 = scmp.eq.s32.totalorder %s30, 1
      %p305 = por %p303, %p304
      %p306 = scmp.ne.s32.totalorder %s297, %s298
      %p307 = scmp.eq.s32.totalorder %s30, 0
      %p308 = por %p306, %p307
      %p309 = scmp.ne.s32.totalorder %s297, %s298
      %p310 = scmp.eq.s32.totalorder %s31, 1
      %p311 = por %p309, %p310
      %p313 = scmp.ne.s32.totalorder %s298, %s312
      %p314 = scmp.eq.s32.totalorder %s31, 0
      %p315 = por %p313, %p314
      %s317 = sadd.s32 %s316, 1
      %p320 = scmp.eq.s32.totalorder %s25, 1
      %p321 = scmp.ne.s32.totalorder %s316, %s318
      %p322 = scmp.eq.s32.totalorder %s25, 0
      %p323 = por %p321, %p322
      %p324 = scmp.ne.s32.totalorder %s316, %s318
      %p325 = scmp.eq.s32.totalorder %s30, 1
      %p326 = por %p324, %p325
      %p327 = scmp.ne.s32.totalorder %s318, %s319
      %p328 = scmp.eq.s32.totalorder %s30, 0
      %p329 = por %p327, %p328
      %p330 = scmp.ne.s32.totalorder %s318, %s319
      %p331 = scmp.eq.s32.totalorder %s31, 1
      %p332 = por %p330, %p331
      %p334 = scmp.ne.s32.totalorder %s319, %s333
      %p335 = scmp.eq.s32.totalorder %s31, 0
      %p336 = por %p334, %p335
      %s337 = ssub.s32 %s25, %s32
      %p338 = scmp.eq.s32.totalorder %s337, 0
      %s340 = sadd.s32 %s339, 1
      %s341 = scalar_select %p338, %s339, %s340
      %p344 = pneg %p338
      %p345 = scmp.eq.s32.totalorder %s25, 1
      %p346 = por %p344, %p345
      %p347 = scmp.ne.s32.totalorder %s339, %s342
      %p348 = scmp.eq.s32.totalorder %s25, 0
      %p349 = por %p347, %p348
      %p350 = scmp.ne.s32.totalorder %s339, %s342
      %p351 = scmp.eq.s32.totalorder %s30, 1
      %p352 = por %p350, %p351
      %p353 = scmp.ne.s32.totalorder %s342, %s343
      %p354 = scmp.eq.s32.totalorder %s30, 0
      %p355 = por %p353, %p354
      %p356 = scmp.ne.s32.totalorder %s342, %s343
      %p357 = scmp.eq.s32.totalorder %s31, 1
      %p358 = por %p356, %p357
      %p360 = scmp.ne.s32.totalorder %s343, %s359
      %p361 = scmp.eq.s32.totalorder %s31, 0
      %p362 = por %p360, %p361
      %s363 = ssub.s32 %s25, %s32
      %p364 = scmp.eq.s32.totalorder %s363, 0
      %s366 = sadd.s32 %s365, 1
      %s367 = scalar_select %p364, %s365, %s366
      %p370 = pneg %p364
      %p371 = scmp.eq.s32.totalorder %s25, 1
      %p372 = por %p370, %p371
      %p373 = scmp.ne.s32.totalorder %s365, %s368
      %p374 = scmp.eq.s32.totalorder %s25, 0
      %p375 = por %p373, %p374
      %p376 = scmp.ne.s32.totalorder %s365, %s368
      %p377 = scmp.eq.s32.totalorder %s30, 1
      %p378 = por %p376, %p377
      %p379 = scmp.ne.s32.totalorder %s368, %s369
      %p380 = scmp.eq.s32.totalorder %s30, 0
      %p381 = por %p379, %p380
      %p382 = scmp.ne.s32.totalorder %s368, %s369
      %p383 = scmp.eq.s32.totalorder %s31, 1
      %p384 = por %p382, %p383
      %p386 = scmp.ne.s32.totalorder %s369, %s385
      %p387 = scmp.eq.s32.totalorder %s31, 0
      %p388 = por %p386, %p387
      %p389 = scmp.le.s32.totalorder 1, %s25
      %p390 = scmp.lt.s32.totalorder %s25, 3
      %p391 = pnand %p389, %p390
      %p392 = pneg %p391
      // Predicated region
      $region9: #{bert_classifier_forward.4} parent=5 // pred_check
        _
      $region10: #{bert_classifier_forward.4} parent=5 // pred_check_branch
        %394 = sbr.rel (%p391) target = $region12
      $region11: #{bert_classifier_forward.4} parent=5 // pred_region
        %s395 = ssub.s32 %s25, 1
        // Predicated region
        $region13: #{bert_classifier_forward.4} parent=11 // pred_check
          %p396 = pneg %p98
        $region14: #{bert_classifier_forward.4} parent=11 // pred_check_branch
          %398 = sbr.rel (%p396) target = $region16
        $region15: #{bert_classifier_forward.4} parent=11 // pred_region
          _
        $region16: #{bert_classifier_forward.4} parent=11 // pred_fallthru
          _
        // Predicated region
        $region17: #{bert_classifier_forward.4} parent=11 // pred_check
          %p399 = pneg %p119
        $region18: #{bert_classifier_forward.4} parent=11 // pred_check_branch
          %401 = sbr.rel (%p399) target = $region20
        $region19: #{bert_classifier_forward.4} parent=11 // pred_region
          _
        $region20: #{bert_classifier_forward.4} parent=11 // pred_fallthru
          _
        // Predicated region
        $region21: #{bert_classifier_forward.4} parent=11 // pred_check
          %p402 = pneg %p140
        $region22: #{bert_classifier_forward.4} parent=11 // pred_check_branch
          %404 = sbr.rel (%p402) target = $region24
        $region23: #{bert_classifier_forward.4} parent=11 // pred_region
          _
        $region24: #{bert_classifier_forward.4} parent=11 // pred_fallthru
          _
        // Predicated region
        $region25: #{bert_classifier_forward.4} parent=11 // pred_check
          %p405 = pneg %p161
        $region26: #{bert_classifier_forward.4} parent=11 // pred_check_branch
          %407 = sbr.rel (%p405) target = $region28
        $region27: #{bert_classifier_forward.4} parent=11 // pred_region
          _
        $region28: #{bert_classifier_forward.4} parent=11 // pred_fallthru
          _
        // Predicated region
        $region29: #{bert_classifier_forward.4} parent=11 // pred_check
          %p408 = pneg %p182
        $region30: #{bert_classifier_forward.4} parent=11 // pred_check_branch
          %410 = sbr.rel (%p408) target = $region32
        $region31: #{bert_classifier_forward.4} parent=11 // pred_region
          _
        $region32: #{bert_classifier_forward.4} parent=11 // pred_fallthru
          _
        // Predicated region
        $region33: #{bert_classifier_forward.4} parent=11 // pred_check
          %p411 = pneg %p203
        $region34: #{bert_classifier_forward.4} parent=11 // pred_check_branch
          %413 = sbr.rel (%p411) target = $region36
        $region35: #{bert_classifier_forward.4} parent=11 // pred_region
          _
        $region36: #{bert_classifier_forward.4} parent=11 // pred_fallthru
          _
        // Predicated region
        $region37: #{bert_classifier_forward.4} parent=11 // pred_check
          %p414 = pneg %p224
        $region38: #{bert_classifier_forward.4} parent=11 // pred_check_branch
          %416 = sbr.rel (%p414) target = $region40
        $region39: #{bert_classifier_forward.4} parent=11 // pred_region
          _
        $region40: #{bert_classifier_forward.4} parent=11 // pred_fallthru
          _
        // Predicated region
        $region41: #{bert_classifier_forward.4} parent=11 // pred_check
          %p417 = pneg %p245
        $region42: #{bert_classifier_forward.4} parent=11 // pred_check_branch
          %419 = sbr.rel (%p417) target = $region44
        $region43: #{bert_classifier_forward.4} parent=11 // pred_region
          _
        $region44: #{bert_classifier_forward.4} parent=11 // pred_fallthru
          _
        // Predicated region
        $region45: #{bert_classifier_forward.4} parent=11 // pred_check
          %p420 = pneg %p266
        $region46: #{bert_classifier_forward.4} parent=11 // pred_check_branch
          %422 = sbr.rel (%p420) target = $region48
        $region47: #{bert_classifier_forward.4} parent=11 // pred_region
          _
        $region48: #{bert_classifier_forward.4} parent=11 // pred_fallthru
          _
        // Predicated region
        $region49: #{bert_classifier_forward.4} parent=11 // pred_check
          %p423 = pneg %p287
        $region50: #{bert_classifier_forward.4} parent=11 // pred_check_branch
          %425 = sbr.rel (%p423) target = $region52
        $region51: #{bert_classifier_forward.4} parent=11 // pred_region
          _
        $region52: #{bert_classifier_forward.4} parent=11 // pred_fallthru
          _
        // Predicated region
        $region53: #{bert_classifier_forward.4} parent=11 // pred_check
          %p426 = pneg %p308
        $region54: #{bert_classifier_forward.4} parent=11 // pred_check_branch
          %428 = sbr.rel (%p426) target = $region56
        $region55: #{bert_classifier_forward.4} parent=11 // pred_region
          _
        $region56: #{bert_classifier_forward.4} parent=11 // pred_fallthru
          _
        // Predicated region
        $region57: #{bert_classifier_forward.4} parent=11 // pred_check
          %p429 = pneg %p329
        $region58: #{bert_classifier_forward.4} parent=11 // pred_check_branch
          %431 = sbr.rel (%p429) target = $region60
        $region59: #{bert_classifier_forward.4} parent=11 // pred_region
          _
        $region60: #{bert_classifier_forward.4} parent=11 // pred_fallthru
          _
      $region12: #{bert_classifier_forward.4} parent=5 // pred_fallthru
        _
      %p432 = scmp.lt.s32.totalorder %s25, 2
      // Predicated region
      $region61: #{bert_classifier_forward.4} parent=5 // pred_check
        %p433 = pneg %p432
      $region62: #{bert_classifier_forward.4} parent=5 // pred_check_branch
        %435 = sbr.rel (%p433) target = $region64
      $region63: #{bert_classifier_forward.4} parent=5 // pred_region
        // Predicated region
        $region65: #{bert_classifier_forward.4} parent=63 // pred_check
          %p436 = pneg %p45
        $region66: #{bert_classifier_forward.4} parent=63 // pred_check_branch
          %438 = sbr.rel (%p436) target = $region68
        $region67: #{bert_classifier_forward.4} parent=63 // pred_region
          %p439 = scmp.lt.s32.totalorder %s25, 1
          %s440 = scalar_select %p439, %s25, 1
          %s441 = smul.addr %s440, 8
          %s442 = scalar_lea.vmem %s0, %s441
        $region68: #{bert_classifier_forward.4} parent=63 // pred_fallthru
          _
        // Predicated region
        $region69: #{bert_classifier_forward.4} parent=63 // pred_check
          %p443 = pneg %p71
        $region70: #{bert_classifier_forward.4} parent=63 // pred_check_branch
          %445 = sbr.rel (%p443) target = $region72
        $region71: #{bert_classifier_forward.4} parent=63 // pred_region
          %p446 = scmp.lt.s32.totalorder %s25, 1
          %s447 = scalar_select %p446, %s25, 1
          %s448 = scalar_lea.vmem %s1, %s447
        $region72: #{bert_classifier_forward.4} parent=63 // pred_fallthru
          _
      $region64: #{bert_classifier_forward.4} parent=5 // pred_fallthru
        _
      %p449 = scmp.le.s32.totalorder 1, %s25
      %p450 = scmp.lt.s32.totalorder %s25, 3
      %p451 = pnand %p449, %p450
      %p452 = pneg %p451
      // Predicated region
      $region73: #{bert_classifier_forward.4} parent=5 // pred_check
        _
      $region74: #{bert_classifier_forward.4} parent=5 // pred_check_branch
        %454 = sbr.rel (%p451) target = $region76
      $region75: #{bert_classifier_forward.4} parent=5 // pred_region
        %s455 = ssub.s32 %s25, 1
        %p456 = scmp.lt.s32.totalorder %s30, 1
        %s457 = scalar_select %p456, %s30, 1
        %s458 = smul.addr %s457, 8
        %s459 = scalar_lea.vmem %s0, %s458
        %p460 = pneg %p51
        %p461 = pneg %p48
        %p462 = scmp.lt.s32.totalorder %s30, 1
        %s463 = scalar_select %p462, %s30, 1
        %s464 = scalar_lea.vmem %s1, %s463
        %p465 = pneg %p77
        %p466 = pneg %p74
        %p467 = pneg %p98
        %p468 = pneg %p95
        %p469 = pneg %p119
        %p470 = pneg %p116
        %p471 = pneg %p140
        %p472 = pneg %p137
        %p473 = pneg %p161
        %p474 = pneg %p158
        %p475 = pneg %p182
        %p476 = pneg %p179
        %p477 = pneg %p203
        %p478 = pneg %p200
        %p479 = pneg %p224
        %p480 = pneg %p221
        %p481 = pneg %p245
        %p482 = pneg %p242
        %p483 = pneg %p266
        %p484 = pneg %p263
        %p485 = pneg %p287
        %p486 = pneg %p284
        %p487 = pneg %p308
        %p488 = pneg %p305
        %p489 = pneg %p329
        %p490 = pneg %p326
        %p491 = pneg %p355
        %p492 = pneg %p352
        %p493 = scmp.lt.s32.totalorder %s30, 1
        %s494 = scalar_select %p493, %s30, 1
        %s495 = smul.addr %s494, 8
        %s496 = scalar_lea.vmem %s14, %s495
        %p497 = pneg %p381
        %p498 = pneg %p378
        %s499 = sand.u32 %s368, 1
        %s500 = scalar_lea.sflag [#allocation3], %s499
        %s501 = sand.u32 %s368, 1
        %s502 = smul.addr %s501, 32
        %s503 = scalar_lea.vmem [#allocation2], %s502
        %p504 = scmp.lt.s32.totalorder %s30, 1
        %s505 = scalar_select %p504, %s30, 1
        %s506 = smul.addr %s505, 8
        %s507 = scalar_lea.vmem %s0, %s506
        %p508 = scmp.lt.s32.totalorder %s30, 1
        %s509 = scalar_select %p508, %s30, 1
        %s510 = scalar_lea.vmem %s1, %s509
        %p511 = scmp.lt.s32.totalorder %s30, 1
        %s512 = scalar_select %p511, %s30, 1
        %s513 = smul.addr %s512, 8
        %s514 = scalar_lea.vmem %s14, %s513
        %v516 = vld [vmem:[%s507] sm:$0xff]
        %v517 = vld [vmem:[%s510] sm:$0x1]
        %v518 = vpack.c.bf16 %v516, %v516
        %v519 = vld [vmem:[%s2] sm:$0xf]
        %v520 = vld [vmem:[%s2 + $0x4] sm:$0xf]
        %v521 = vld [vmem:[%s2 + $0x8] sm:$0xf]
        %v522 = vld [vmem:[%s2 + $0xc] sm:$0xf]
        %v523 = vld [vmem:[%s3] sm:$0x1]
        %v525 = vlaneseq
        %v526 = vshrl.u32 %v525, 7
        %v527 = vsub.s32 0, %v526
        %v528 = vrot.slane %v523, %v527
        %v534 = vunpack.c.l.b16 %v519
        %v535 = vunpack.c.l.b16 %v520
        %v536 = vunpack.c.l.b16 %v521
        %v537 = vunpack.c.l.b16 %v522
        %v538 = vpack.c.b16 %v535, %v534
        %v539 = vpack.c.b16 %v537, %v536
        %vm542 = vcmask 261120
        %v544 = vsel %vm542, %v518, 0
        %546 = vmatprep.subr.bf16.mxu0 0
        %547 = vmatpush1.bf16.msra.mxu0 %v538
        %548 = vmatprep.subr.bf16.mxu0 0
        %549 = vmatpush1.bf16.msra.mxu0 %v539
        %550 = vmatprep.subr.bf16.mxu0 0
        %551 = vmatpush1.bf16.msra.mxu0 0
        %552 = vmatprep.subr.bf16.mxu0 0
        %553 = vmatpush1.bf16.msra.mxu0 0
        %554 = vmatprep.subr.bf16.mxu0 0
        %555 = vmatpush1.bf16.msra.mxu0 0
        %556 = vmatprep.subr.bf16.mxu0 0
        %557 = vmatpush1.bf16.msra.mxu0 0
        %558 = vmatprep.subr.bf16.mxu0 0
        %559 = vmatpush1.bf16.msra.mxu0 0
        %560 = vmatprep.subr.bf16.mxu0 0
        %561 = vmatpush1.bf16.msra.mxu0 0
        %562 = vmatprep.subr.bf16.mxu0 0
        %563 = vmatpush1.bf16.msra.mxu0 0
        %564 = vmatprep.subr.bf16.mxu0 0
        %565 = vmatpush1.bf16.msra.mxu0 0
        %566 = vmatprep.subr.bf16.mxu0 0
        %567 = vmatpush1.bf16.msra.mxu0 0
        %568 = vmatprep.subr.bf16.mxu0 0
        %569 = vmatpush1.bf16.msra.mxu0 0
        %570 = vmatprep.subr.bf16.mxu0 0
        %571 = vmatpush1.bf16.msra.mxu0 0
        %572 = vmatprep.subr.bf16.mxu0 0
        %573 = vmatpush1.bf16.msra.mxu0 0
        %574 = vmatprep.subr.bf16.mxu0 0
        %575 = vmatpush1.bf16.msra.mxu0 0
        %576 = vmatprep.subr.bf16.mxu0 0
        %577 = vmatpush1.bf16.msra.mxu0 0
        %578 = vmatprep.mubr.bf16.mxu0 0
        %579 = vmatmul.mubr.bf16.gmra.mrb[0].mxu0 %v544
        %v580 = vpop.f32.mrb[0].mxu0
        %v581 = vadd.f32 %v528, %v580
        %v582 = vpop.f32.mrb[0].mxu0
        %v583 = vpop.f32.mrb[0].mxu0
        %v584 = vpop.f32.mrb[0].mxu0
        %585 = vdwg.mxu0
        %v586 = vpack.c.bf16 %v581, %v581
        %588 = vrot.lane.b32.xlu0 %v586, 96
        %v589 = vpop.permute.xlu0 %588
        %vm590 = vcmask 64512
        %v592 = vsel %vm590, %v586, 0
        %v595 = vsel %vm590, %v589, 0
        %597 = vmatprep.subr.bf16.mxu0 0
        %598 = vmatpush1.bf16.xpose.msra.mxu0 %v595
        %599 = vmatprep.subr.bf16.mxu0 0
        %600 = vmatpush1.bf16.xpose.msra.mxu0 0
        %601 = vmatprep.subr.bf16.mxu0 0
        %602 = vmatpush1.bf16.xpose.msra.mxu0 0
        %603 = vmatprep.subr.bf16.mxu0 0
        %604 = vmatpush1.bf16.xpose.msra.mxu0 0
        %605 = vmatprep.subr.bf16.mxu0 0
        %606 = vmatpush1.bf16.xpose.msra.mxu0 0
        %607 = vmatprep.subr.bf16.mxu0 0
        %608 = vmatpush1.bf16.xpose.msra.mxu0 0
        %609 = vmatprep.subr.bf16.mxu0 0
        %610 = vmatpush1.bf16.xpose.msra.mxu0 0
        %611 = vmatprep.subr.bf16.mxu0 0
        %612 = vmatpush1.bf16.xpose.msra.mxu0 0
        %613 = vmatprep.subr.bf16.mxu0 0
        %614 = vmatpush1.bf16.xpose.msra.mxu0 0
        %615 = vmatprep.subr.bf16.mxu0 0
        %616 = vmatpush1.bf16.xpose.msra.mxu0 0
        %617 = vmatprep.subr.bf16.mxu0 0
        %618 = vmatpush1.bf16.xpose.msra.mxu0 0
        %619 = vmatprep.subr.bf16.mxu0 0
        %620 = vmatpush1.bf16.xpose.msra.mxu0 0
        %621 = vmatprep.subr.bf16.mxu0 0
        %622 = vmatpush1.bf16.xpose.msra.mxu0 0
        %623 = vmatprep.subr.bf16.mxu0 0
        %624 = vmatpush1.bf16.xpose.msra.mxu0 0
        %625 = vmatprep.subr.bf16.mxu0 0
        %626 = vmatpush1.bf16.xpose.msra.mxu0 0
        %627 = vmatprep.subr.bf16.mxu0 0
        %628 = vmatpush1.bf16.xpose.msra.mxu0 0
        %629 = vmatprep.mubr.bf16.mxu0 0
        %630 = vmatmul.mubr.bf16.gmra.mrb[0].mxu0 %v592
        %v631 = vpop.f32.mrb[0].mxu0
        %v632 = vadd.f32 0.0, %v631
        %v633 = vpop.f32.mrb[0].mxu0
        %v634 = vpop.f32.mrb[0].mxu0
        %v635 = vpop.f32.mrb[0].mxu0
        %636 = vdwg.mxu0
        %v637 = vmul.f32 %v632, 0.35355338
        %v639 = vlaneseq
        %v640 = vshrl.u32 %v639, 7
        %v641 = vsub.s32 0, %v640
        %v642 = vrot.slane %v517, %v641
        %v644 = vadd.f32 %v637, %v642
        %v645 = vsel %vm590, %v644, -inf
        %646 = vmax.xlane.f32.xlu0 %v645
        %v647 = vpop.xlane.xlu0 %646
        %v648 = vsub.f32 %v644, %v647
        %v649 = vmul.f32 %v648, 1.442695
        %v650 = vpow.pop %v649
        %v651 = vsel %vm590, %v650, 0.0
        %652 = vadd.xlane.f32.xlu0 %v651
        %v653 = vpop.xlane.xlu0 %652
        %v654 = vrcp.pop %v653
        %v655 = vmul.f32 %v650, %v654
        %656 = vst.msk [vmem:[%s503] sm:$0xff] %vm590, %v655
        %v657 = vpack.c.bf16 %v655, %v655
        %658 = vrot.lane.b32.xlu0 %v586, 64
        %v659 = vpop.permute.xlu0 %658
        %v661 = vsel %vm590, %v657, 0
        %vm663 = vcmask 1043456
        %v665 = vsel %vm663, %v659, 0
        %667 = vmatprep.subr.bf16.mxu0 0
        %668 = vmatpush1.bf16.msra.mxu0 %v665
        %669 = vmatprep.subr.bf16.mxu0 0
        %670 = vmatpush1.bf16.msra.mxu0 0
        %671 = vmatprep.subr.bf16.mxu0 0
        %672 = vmatpush1.bf16.msra.mxu0 0
        %673 = vmatprep.subr.bf16.mxu0 0
        %674 = vmatpush1.bf16.msra.mxu0 0
        %675 = vmatprep.subr.bf16.mxu0 0
        %676 = vmatpush1.bf16.msra.mxu0 0
        %677 = vmatprep.subr.bf16.mxu0 0
        %678 = vmatpush1.bf16.msra.mxu0 0
        %679 = vmatprep.subr.bf16.mxu0 0
        %680 = vmatpush1.bf16.msra.mxu0 0
        %681 = vmatprep.subr.bf16.mxu0 0
        %682 = vmatpush1.bf16.msra.mxu0 0
        %683 = vmatprep.subr.bf16.mxu0 0
        %684 = vmatpush1.bf16.msra.mxu0 0
        %685 = vmatprep.subr.bf16.mxu0 0
        %686 = vmatpush1.bf16.msra.mxu0 0
        %687 = vmatprep.subr.bf16.mxu0 0
        %688 = vmatpush1.bf16.msra.mxu0 0
        %689 = vmatprep.subr.bf16.mxu0 0
        %690 = vmatpush1.bf16.msra.mxu0 0
        %691 = vmatprep.subr.bf16.mxu0 0
        %692 = vmatpush1.bf16.msra.mxu0 0
        %693 = vmatprep.subr.bf16.mxu0 0
        %694 = vmatpush1.bf16.msra.mxu0 0
        %695 = vmatprep.subr.bf16.mxu0 0
        %696 = vmatpush1.bf16.msra.mxu0 0
        %697 = vmatprep.subr.bf16.mxu0 0
        %698 = vmatpush1.bf16.msra.mxu0 0
        %699 = vmatprep.mubr.bf16.mxu0 0
        %700 = vmatmul.mubr.bf16.gmra.mrb[0].mxu0 %v661
        %v701 = vpop.f32.mrb[0].mxu0
        %v702 = vadd.f32 0.0, %v701
        %v703 = vpop.f32.mrb[0].mxu0
        %v704 = vpop.f32.mrb[0].mxu0
        %v705 = vpop.f32.mrb[0].mxu0
        %706 = vdwg.mxu0
        %707 = vrot.lane.b32.xlu0 %v586, 120
        %v708 = vpop.permute.xlu0 %707
        %709 = vrot.lane.b32.xlu0 %v586, 88
        %v710 = vpop.permute.xlu0 %709
        %v712 = vsel %vm590, %v708, 0
        %v715 = vsel %vm590, %v710, 0
        %717 = vmatprep.subr.bf16.mxu0 0
        %718 = vmatpush1.bf16.xpose.msra.mxu0 %v715
        %719 = vmatprep.subr.bf16.mxu0 0
        %720 = vmatpush1.bf16.xpose.msra.mxu0 0
        %721 = vmatprep.subr.bf16.mxu0 0
        %722 = vmatpush1.bf16.xpose.msra.mxu0 0
        %723 = vmatprep.subr.bf16.mxu0 0
        %724 = vmatpush1.bf16.xpose.msra.mxu0 0
        %725 = vmatprep.subr.bf16.mxu0 0
        %726 = vmatpush1.bf16.xpose.msra.mxu0 0
        %727 = vmatprep.subr.bf16.mxu0 0
        %728 = vmatpush1.bf16.xpose.msra.mxu0 0
        %729 = vmatprep.subr.bf16.mxu0 0
        %730 = vmatpush1.bf16.xpose.msra.mxu0 0
        %731 = vmatprep.subr.bf16.mxu0 0
        %732 = vmatpush1.bf16.xpose.msra.mxu0 0
        %733 = vmatprep.subr.bf16.mxu0 0
        %734 = vmatpush1.bf16.xpose.msra.mxu0 0
        %735 = vmatprep.subr.bf16.mxu0 0
        %736 = vmatpush1.bf16.xpose.msra.mxu0 0
        %737 = vmatprep.subr.bf16.mxu0 0
        %738 = vmatpush1.bf16.xpose.msra.mxu0 0
        %739 = vmatprep.subr.bf16.mxu0 0
        %740 = vmatpush1.bf16.xpose.msra.mxu0 0
        %741 = vmatprep.subr.bf16.mxu0 0
        %742 = vmatpush1.bf16.xpose.msra.mxu0 0
        %743 = vmatprep.subr.bf16.mxu0 0
        %744 = vmatpush1.bf16.xpose.msra.mxu0 0
        %745 = vmatprep.subr.bf16.mxu0 0
        %746 = vmatpush1.bf16.xpose.msra.mxu0 0
        %747 = vmatprep.subr.bf16.mxu0 0
        %748 = vmatpush1.bf16.xpose.msra.mxu0 0
        %749 = vmatprep.mubr.bf16.mxu0 0
        %750 = vmatmul.mubr.bf16.gmra.mrb[0].mxu0 %v712
        %v751 = vpop.f32.mrb[0].mxu0
        %v752 = vadd.f32 0.0, %v751
        %v753 = vpop.f32.mrb[0].mxu0
        %v754 = vpop.f32.mrb[0].mxu0
        %v755 = vpop.f32.mrb[0].mxu0
        %756 = vdwg.mxu0
        %v757 = vmul.f32 %v752, 0.35355338
        %v758 = vadd.f32 %v757, %v642
        %v759 = vsel %vm590, %v758, -inf
        %760 = vmax.xlane.f32.xlu0 %v759
        %v761 = vpop.xlane.xlu0 %760
        %v762 = vsub.f32 %v758, %v761
        %v763 = vmul.f32 %v762, 1.442695
        %v764 = vpow.pop %v763
        %v765 = vsel %vm590, %v764, 0.0
        %766 = vadd.xlane.f32.xlu0 %v765
        %v767 = vpop.xlane.xlu0 %766
        %v768 = vrcp.pop %v767
        %v769 = vmul.f32 %v764, %v768
        %s770 = scalar_lea.vmem %s503, 8 [#allocation2]
        %771 = vst.msk [vmem:[%s770] sm:$0xff] %vm590, %v769
        %v772 = vpack.c.bf16 %v769, %v769
        %773 = vrot.lane.b32.xlu0 %v586, 56
        %v774 = vpop.permute.xlu0 %773
        %v776 = vsel %vm590, %v772, 0
        %v779 = vsel %vm663, %v774, 0
        %781 = vmatprep.subr.bf16.mxu0 0
        %782 = vmatpush1.bf16.msra.mxu0 %v779
        %783 = vmatprep.subr.bf16.mxu0 0
        %784 = vmatpush1.bf16.msra.mxu0 0
        %785 = vmatprep.subr.bf16.mxu0 0
        %786 = vmatpush1.bf16.msra.mxu0 0
        %787 = vmatprep.subr.bf16.mxu0 0
        %788 = vmatpush1.bf16.msra.mxu0 0
        %789 = vmatprep.subr.bf16.mxu0 0
        %790 = vmatpush1.bf16.msra.mxu0 0
        %791 = vmatprep.subr.bf16.mxu0 0
        %792 = vmatpush1.bf16.msra.mxu0 0
        %793 = vmatprep.subr.bf16.mxu0 0
        %794 = vmatpush1.bf16.msra.mxu0 0
        %795 = vmatprep.subr.bf16.mxu0 0
        %796 = vmatpush1.bf16.msra.mxu0 0
        %797 = vmatprep.subr.bf16.mxu0 0
        %798 = vmatpush1.bf16.msra.mxu0 0
        %799 = vmatprep.subr.bf16.mxu0 0
        %800 = vmatpush1.bf16.msra.mxu0 0
        %801 = vmatprep.subr.bf16.mxu0 0
        %802 = vmatpush1.bf16.msra.mxu0 0
        %803 = vmatprep.subr.bf16.mxu0 0
        %804 = vmatpush1.bf16.msra.mxu0 0
        %805 = vmatprep.subr.bf16.mxu0 0
        %806 = vmatpush1.bf16.msra.mxu0 0
        %807 = vmatprep.subr.bf16.mxu0 0
        %808 = vmatpush1.bf16.msra.mxu0 0
        %809 = vmatprep.subr.bf16.mxu0 0
        %810 = vmatpush1.bf16.msra.mxu0 0
        %811 = vmatprep.subr.bf16.mxu0 0
        %812 = vmatpush1.bf16.msra.mxu0 0
        %813 = vmatprep.mubr.bf16.mxu0 0
        %814 = vmatmul.mubr.bf16.gmra.mrb[0].mxu0 %v776
        %v815 = vpop.f32.mrb[0].mxu0
        %v816 = vadd.f32 0.0, %v815
        %v817 = vpop.f32.mrb[0].mxu0
        %v818 = vpop.f32.mrb[0].mxu0
        %v819 = vpop.f32.mrb[0].mxu0
        %820 = vdwg.mxu0
        %821 = vrot.lane.b32.xlu0 %v586, 112
        %v822 = vpop.permute.xlu0 %821
        %823 = vrot.lane.b32.xlu0 %v586, 80
        %v824 = vpop.permute.xlu0 %823
        %v826 = vsel %vm590, %v822, 0
        %v829 = vsel %vm590, %v824, 0
        %831 = vmatprep.subr.bf16.mxu0 0
        %832 = vmatpush1.bf16.xpose.msra.mxu0 %v829
        %833 = vmatprep.subr.bf16.mxu0 0
        %834 = vmatpush1.bf16.xpose.msra.mxu0 0
        %835 = vmatprep.subr.bf16.mxu0 0
        %836 = vmatpush1.bf16.xpose.msra.mxu0 0
        %837 = vmatprep.subr.bf16.mxu0 0
        %838 = vmatpush1.bf16.xpose.msra.mxu0 0
        %839 = vmatprep.subr.bf16.mxu0 0
        %840 = vmatpush1.bf16.xpose.msra.mxu0 0
        %841 = vmatprep.subr.bf16.mxu0 0
        %842 = vmatpush1.bf16.xpose.msra.mxu0 0
        %843 = vmatprep.subr.bf16.mxu0 0
        %844 = vmatpush1.bf16.xpose.msra.mxu0 0
        %845 = vmatprep.subr.bf16.mxu0 0
        %846 = vmatpush1.bf16.xpose.msra.mxu0 0
        %847 = vmatprep.subr.bf16.mxu0 0
        %848 = vmatpush1.bf16.xpose.msra.mxu0 0
        %849 = vmatprep.subr.bf16.mxu0 0
        %850 = vmatpush1.bf16.xpose.msra.mxu0 0
        %851 = vmatprep.subr.bf16.mxu0 0
        %852 = vmatpush1.bf16.xpose.msra.mxu0 0
        %853 = vmatprep.subr.bf16.mxu0 0
        %854 = vmatpush1.bf16.xpose.msra.mxu0 0
        %855 = vmatprep.subr.bf16.mxu0 0
        %856 = vmatpush1.bf16.xpose.msra.mxu0 0
        %857 = vmatprep.subr.bf16.mxu0 0
        %858 = vmatpush1.bf16.xpose.msra.mxu0 0
        %859 = vmatprep.subr.bf16.mxu0 0
        %860 = vmatpush1.bf16.xpose.msra.mxu0 0
        %861 = vmatprep.subr.bf16.mxu0 0
        %862 = vmatpush1.bf16.xpose.msra.mxu0 0
        %863 = vmatprep.mubr.bf16.mxu0 0
        %864 = vmatmul.mubr.bf16.gmra.mrb[0].mxu0 %v826
        %v865 = vpop.f32.mrb[0].mxu0
        %v866 = vadd.f32 0.0, %v865
        %v867 = vpop.f32.mrb[0].mxu0
        %v868 = vpop.f32.mrb[0].mxu0
        %v869 = vpop.f32.mrb[0].mxu0
        %870 = vdwg.mxu0
        %v871 = vmul.f32 %v866, 0.35355338
        %v872 = vadd.f32 %v871, %v642
        %v873 = vsel %vm590, %v872, -inf
        %874 = vmax.xlane.f32.xlu0 %v873
        %v875 = vpop.xlane.xlu0 %874
        %v876 = vsub.f32 %v872, %v875
        %v877 = vmul.f32 %v876, 1.442695
        %v878 = vpow.pop %v877
        %v879 = vsel %vm590, %v878, 0.0
        %880 = vadd.xlane.f32.xlu0 %v879
        %v881 = vpop.xlane.xlu0 %880
        %v882 = vrcp.pop %v881
        %v883 = vmul.f32 %v878, %v882
        %s884 = scalar_lea.vmem %s503, 16 [#allocation2]
        %885 = vst.msk [vmem:[%s884] sm:$0xff] %vm590, %v883
        %v886 = vpack.c.bf16 %v883, %v883
        %887 = vrot.lane.b32.xlu0 %v586, 48
        %v888 = vpop.permute.xlu0 %887
        %v890 = vsel %vm590, %v886, 0
        %v893 = vsel %vm663, %v888, 0
        %895 = vmatprep.subr.bf16.mxu0 0
        %896 = vmatpush1.bf16.msra.mxu0 %v893
        %897 = vmatprep.subr.bf16.mxu0 0
        %898 = vmatpush1.bf16.msra.mxu0 0
        %899 = vmatprep.subr.bf16.mxu0 0
        %900 = vmatpush1.bf16.msra.mxu0 0
        %901 = vmatprep.subr.bf16.mxu0 0
        %902 = vmatpush1.bf16.msra.mxu0 0
        %903 = vmatprep.subr.bf16.mxu0 0
        %904 = vmatpush1.bf16.msra.mxu0 0
        %905 = vmatprep.subr.bf16.mxu0 0
        %906 = vmatpush1.bf16.msra.mxu0 0
        %907 = vmatprep.subr.bf16.mxu0 0
        %908 = vmatpush1.bf16.msra.mxu0 0
        %909 = vmatprep.subr.bf16.mxu0 0
        %910 = vmatpush1.bf16.msra.mxu0 0
        %911 = vmatprep.subr.bf16.mxu0 0
        %912 = vmatpush1.bf16.msra.mxu0 0
        %913 = vmatprep.subr.bf16.mxu0 0
        %914 = vmatpush1.bf16.msra.mxu0 0
        %915 = vmatprep.subr.bf16.mxu0 0
        %916 = vmatpush1.bf16.msra.mxu0 0
        %917 = vmatprep.subr.bf16.mxu0 0
        %918 = vmatpush1.bf16.msra.mxu0 0
        %919 = vmatprep.subr.bf16.mxu0 0
        %920 = vmatpush1.bf16.msra.mxu0 0
        %921 = vmatprep.subr.bf16.mxu0 0
        %922 = vmatpush1.bf16.msra.mxu0 0
        %923 = vmatprep.subr.bf16.mxu0 0
        %924 = vmatpush1.bf16.msra.mxu0 0
        %925 = vmatprep.subr.bf16.mxu0 0
        %926 = vmatpush1.bf16.msra.mxu0 0
        %927 = vmatprep.mubr.bf16.mxu0 0
        %928 = vmatmul.mubr.bf16.gmra.mrb[0].mxu0 %v890
        %v929 = vpop.f32.mrb[0].mxu0
        %v930 = vadd.f32 0.0, %v929
        %v931 = vpop.f32.mrb[0].mxu0
        %v932 = vpop.f32.mrb[0].mxu0
        %v933 = vpop.f32.mrb[0].mxu0
        %934 = vdwg.mxu0
        %935 = vrot.lane.b32.xlu0 %v586, 104
        %v936 = vpop.permute.xlu0 %935
        %937 = vrot.lane.b32.xlu0 %v586, 72
        %v938 = vpop.permute.xlu0 %937
        %v940 = vsel %vm590, %v936, 0
        %v943 = vsel %vm590, %v938, 0
        %945 = vmatprep.subr.bf16.mxu0 0
        %946 = vmatpush1.bf16.xpose.msra.mxu0 %v943
        %947 = vmatprep.subr.bf16.mxu0 0
        %948 = vmatpush1.bf16.xpose.msra.mxu0 0
        %949 = vmatprep.subr.bf16.mxu0 0
        %950 = vmatpush1.bf16.xpose.msra.mxu0 0
        %951 = vmatprep.subr.bf16.mxu0 0
        %952 = vmatpush1.bf16.xpose.msra.mxu0 0
        %953 = vmatprep.subr.bf16.mxu0 0
        %954 = vmatpush1.bf16.xpose.msra.mxu0 0
        %955 = vmatprep.subr.bf16.mxu0 0
        %956 = vmatpush1.bf16.xpose.msra.mxu0 0
        %957 = vmatprep.subr.bf16.mxu0 0
        %958 = vmatpush1.bf16.xpose.msra.mxu0 0
        %959 = vmatprep.subr.bf16.mxu0 0
        %960 = vmatpush1.bf16.xpose.msra.mxu0 0
        %961 = vmatprep.subr.bf16.mxu0 0
        %962 = vmatpush1.bf16.xpose.msra.mxu0 0
        %963 = vmatprep.subr.bf16.mxu0 0
        %964 = vmatpush1.bf16.xpose.msra.mxu0 0
        %965 = vmatprep.subr.bf16.mxu0 0
        %966 = vmatpush1.bf16.xpose.msra.mxu0 0
        %967 = vmatprep.subr.bf16.mxu0 0
        %968 = vmatpush1.bf16.xpose.msra.mxu0 0
        %969 = vmatprep.subr.bf16.mxu0 0
        %970 = vmatpush1.bf16.xpose.msra.mxu0 0
        %971 = vmatprep.subr.bf16.mxu0 0
        %972 = vmatpush1.bf16.xpose.msra.mxu0 0
        %973 = vmatprep.subr.bf16.mxu0 0
        %974 = vmatpush1.bf16.xpose.msra.mxu0 0
        %975 = vmatprep.subr.bf16.mxu0 0
        %976 = vmatpush1.bf16.xpose.msra.mxu0 0
        %977 = vmatprep.mubr.bf16.mxu0 0
        %978 = vmatmul.mubr.bf16.gmra.mrb[0].mxu0 %v940
        %v979 = vpop.f32.mrb[0].mxu0
        %v980 = vadd.f32 0.0, %v979
        %v981 = vpop.f32.mrb[0].mxu0
        %v982 = vpop.f32.mrb[0].mxu0
        %v983 = vpop.f32.mrb[0].mxu0
        %984 = vdwg.mxu0
        %v985 = vmul.f32 %v980, 0.35355338
        %v986 = vadd.f32 %v985, %v642
        %v987 = vsel %vm590, %v986, -inf
        %988 = vmax.xlane.f32.xlu0 %v987
        %v989 = vpop.xlane.xlu0 %988
        %v990 = vsub.f32 %v986, %v989
        %v991 = vmul.f32 %v990, 1.442695
        %v992 = vpow.pop %v991
        %v993 = vsel %vm590, %v992, 0.0
        %994 = vadd.xlane.f32.xlu0 %v993
        %v995 = vpop.xlane.xlu0 %994
        %v996 = vrcp.pop %v995
        %v997 = vmul.f32 %v992, %v996
        %s998 = scalar_lea.vmem %s503, 24 [#allocation2]
        %999 = vst.msk [vmem:[%s998] sm:$0xff] %vm590, %v997
        %v1000 = vpack.c.bf16 %v997, %v997
        %1001 = vrot.lane.b32.xlu0 %v586, 40
        %v1002 = vpop.permute.xlu0 %1001
        %v1004 = vsel %vm590, %v1000, 0
        %v1007 = vsel %vm663, %v1002, 0
        %1009 = vmatprep.subr.bf16.mxu0 0
        %1010 = vmatpush1.bf16.msra.mxu0 %v1007
        %1011 = vmatprep.subr.bf16.mxu0 0
        %1012 = vmatpush1.bf16.msra.mxu0 0
        %1013 = vmatprep.subr.bf16.mxu0 0
        %1014 = vmatpush1.bf16.msra.mxu0 0
        %1015 = vmatprep.subr.bf16.mxu0 0
        %1016 = vmatpush1.bf16.msra.mxu0 0
        %1017 = vmatprep.subr.bf16.mxu0 0
        %1018 = vmatpush1.bf16.msra.mxu0 0
        %1019 = vmatprep.subr.bf16.mxu0 0
        %1020 = vmatpush1.bf16.msra.mxu0 0
        %1021 = vmatprep.subr.bf16.mxu0 0
        %1022 = vmatpush1.bf16.msra.mxu0 0
        %1023 = vmatprep.subr.bf16.mxu0 0
        %1024 = vmatpush1.bf16.msra.mxu0 0
        %1025 = vmatprep.subr.bf16.mxu0 0
        %1026 = vmatpush1.bf16.msra.mxu0 0
        %1027 = vmatprep.subr.bf16.mxu0 0
        %1028 = vmatpush1.bf16.msra.mxu0 0
        %1029 = vmatprep.subr.bf16.mxu0 0
        %1030 = vmatpush1.bf16.msra.mxu0 0
        %1031 = vmatprep.subr.bf16.mxu0 0
        %1032 = vmatpush1.bf16.msra.mxu0 0
        %1033 = vmatprep.subr.bf16.mxu0 0
        %1034 = vmatpush1.bf16.msra.mxu0 0
        %1035 = vmatprep.subr.bf16.mxu0 0
        %1036 = vmatpush1.bf16.msra.mxu0 0
        %1037 = vmatprep.subr.bf16.mxu0 0
        %1038 = vmatpush1.bf16.msra.mxu0 0
        %1039 = vmatprep.subr.bf16.mxu0 0
        %1040 = vmatpush1.bf16.msra.mxu0 0
        %1041 = vmatprep.mubr.bf16.mxu0 0
        %1042 = vmatmul.mubr.bf16.gmra.mrb[0].mxu0 %v1004
        %v1043 = vpop.f32.mrb[0].mxu0
        %v1044 = vadd.f32 0.0, %v1043
        %v1045 = vpop.f32.mrb[0].mxu0
        %v1046 = vpop.f32.mrb[0].mxu0
        %v1047 = vpop.f32.mrb[0].mxu0
        %1048 = vdwg.mxu0
        %1050 = vrot.lane.b32.xlu0 %v816, 8
        %v1051 = vpop.permute.xlu0 %1050
        %1054 = vrot.lane.b32.xlu0 %v930, 16
        %v1055 = vpop.permute.xlu0 %1054
        %1058 = vrot.lane.b32.xlu0 %v1044, 24
        %v1059 = vpop.permute.xlu0 %1058
        %v1061 = vsel %vm590, %v702, %v1051
        %vm1062 = vcmask 130048
        %v1063 = vsel %vm1062, %v1061, %v1055
        %vm1064 = vcmask 195584
        %v1065 = vsel %vm1064, %v1063, %v1059
        %v1066 = vpack.c.bf16 %v1065, %v1065
        %v1067 = vld [vmem:[%s4] sm:$0xf]
        %v1068 = vld [vmem:[%s4 + $0x4] sm:$0xf]
        %v1069 = vld [vmem:[%s4 + $0x8] sm:$0xf]
        %v1070 = vld [vmem:[%s4 + $0xc] sm:$0xf]
        %v1071 = vld [vmem:[%s5] sm:$0x1]
        %v1073 = vlaneseq
        %v1074 = vshrl.u32 %v1073, 7
        %v1075 = vsub.s32 0, %v1074
        %v1076 = vrot.slane %v1071, %v1075
        %v1082 = vunpack.c.l.b16 %v1067
        %v1083 = vunpack.c.l.b16 %v1068
        %v1084 = vunpack.c.l.b16 %v1069
        %v1085 = vunpack.c.l.b16 %v1070
        %v1086 = vpack.c.b16 %v1083, %v1082
        %v1087 = vpack.c.b16 %v1085, %v1084
        %v1091 = vsel %vm542, %v1066, 0
        %1093 = vmatprep.subr.bf16.mxu0 0
        %1094 = vmatpush1.bf16.msra.mxu0 %v1086
        %1095 = vmatprep.subr.bf16.mxu0 0
        %1096 = vmatpush1.bf16.msra.mxu0 %v1087
        %1097 = vmatprep.subr.bf16.mxu0 0
        %1098 = vmatpush1.bf16.msra.mxu0 0
        %1099 = vmatprep.subr.bf16.mxu0 0
        %1100 = vmatpush1.bf16.msra.mxu0 0
        %1101 = vmatprep.subr.bf16.mxu0 0
        %1102 = vmatpush1.bf16.msra.mxu0 0
        %1103 = vmatprep.subr.bf16.mxu0 0
        %1104 = vmatpush1.bf16.msra.mxu0 0
        %1105 = vmatprep.subr.bf16.mxu0 0
        %1106 = vmatpush1.bf16.msra.mxu0 0
        %1107 = vmatprep.subr.bf16.mxu0 0
        %1108 = vmatpush1.bf16.msra.mxu0 0
        %1109 = vmatprep.subr.bf16.mxu0 0
        %1110 = vmatpush1.bf16.msra.mxu0 0
        %1111 = vmatprep.subr.bf16.mxu0 0
        %1112 = vmatpush1.bf16.msra.mxu0 0
        %1113 = vmatprep.subr.bf16.mxu0 0
        %1114 = vmatpush1.bf16.msra.mxu0 0
        %1115 = vmatprep.subr.bf16.mxu0 0
        %1116 = vmatpush1.bf16.msra.mxu0 0
        %1117 = vmatprep.subr.bf16.mxu0 0
        %1118 = vmatpush1.bf16.msra.mxu0 0
        %1119 = vmatprep.subr.bf16.mxu0 0
        %1120 = vmatpush1.bf16.msra.mxu0 0
        %1121 = vmatprep.subr.bf16.mxu0 0
        %1122 = vmatpush1.bf16.msra.mxu0 0
        %1123 = vmatprep.subr.bf16.mxu0 0
        %1124 = vmatpush1.bf16.msra.mxu0 0
        %1125 = vmatprep.mubr.bf16.mxu0 0
        %1126 = vmatmul.mubr.bf16.gmra.mrb[0].mxu0 %v1091
        %v1127 = vpop.f32.mrb[0].mxu0
        %v1128 = vadd.f32 %v1076, %v1127
        %v1129 = vpop.f32.mrb[0].mxu0
        %v1130 = vpop.f32.mrb[0].mxu0
        %v1131 = vpop.f32.mrb[0].mxu0
        %1132 = vdwg.mxu0
        %v1133 = vadd.f32 %v1128, %v516
        %v1134 = vld [vmem:[%s6] sm:$0x1]
        %v1135 = vld [vmem:[%s7] sm:$0x1]
        %v1136 = vsel %vm542, %v1133, 0.0
        %1137 = vadd.xlane.f32.xlu0 %v1136
        %v1138 = vpop.xlane.xlu0 %1137
        %v1139 = vrcp.pop 32.0
        %v1140 = vmul.f32 %v1138, %v1139
        %v1141 = vsub.f32 %v1133, %v1140
        %v1142 = vmul.f32 %v1141, %v1141
        %v1143 = vsel %vm542, %v1142, 0.0
        %1144 = vadd.xlane.f32.xlu0 %v1143
        %v1145 = vpop.xlane.xlu0 %1144
        %v1146 = vmul.f32 %v1145, %v1139
        %v1147 = vadd.f32 %v1146, 1e-12
        %v1148 = vrsqrt.pop %v1147
        %v1149 = vmul.f32 %v1141, %v1148
        %v1151 = vlaneseq
        %v1152 = vshrl.u32 %v1151, 7
        %v1153 = vsub.s32 0, %v1152
        %v1154 = vrot.slane %v1134, %v1153
        %v1156 = vmul.f32 %v1149, %v1154
        %v1158 = vlaneseq
        %v1159 = vshrl.u32 %v1158, 7
        %v1160 = vsub.s32 0, %v1159
        %v1161 = vrot.slane %v1135, %v1160
        %v1163 = vadd.f32 %v1156, %v1161
        %v1164 = vpack.c.bf16 %v1163, %v1163
        %v1165 = vld [vmem:[%s8] sm:$0xf]
        %v1166 = vld [vmem:[%s8 + $0x4] sm:$0xf]
        %v1167 = vld [vmem:[%s8 + $0x8] sm:$0xf]
        %v1168 = vld [vmem:[%s8 + $0xc] sm:$0xf]
        %v1169 = vld [vmem:[%s9] sm:$0x1]
        %v1171 = vlaneseq
        %v1172 = vshrl.u32 %v1171, 7
        %v1173 = vsub.s32 0, %v1172
        %v1174 = vrot.slane %v1169, %v1173
        %v1180 = vunpack.c.l.b16 %v1165
        %v1181 = vunpack.c.l.b16 %v1166
        %v1182 = vunpack.c.l.b16 %v1167
        %v1183 = vunpack.c.l.b16 %v1168
        %v1184 = vpack.c.b16 %v1181, %v1180
        %v1185 = vpack.c.b16 %v1183, %v1182
        %v1189 = vsel %vm542, %v1164, 0
        %1191 = vmatprep.subr.bf16.mxu0 0
        %1192 = vmatpush1.bf16.msra.mxu0 %v1184
        %1193 = vmatprep.subr.bf16.mxu0 0
        %1194 = vmatpush1.bf16.msra.mxu0 %v1185
        %1195 = vmatprep.subr.bf16.mxu0 0
        %1196 = vmatpush1.bf16.msra.mxu0 0
        %1197 = vmatprep.subr.bf16.mxu0 0
        %1198 = vmatpush1.bf16.msra.mxu0 0
        %1199 = vmatprep.subr.bf16.mxu0 0
        %1200 = vmatpush1.bf16.msra.mxu0 0
        %1201 = vmatprep.subr.bf16.mxu0 0
        %1202 = vmatpush1.bf16.msra.mxu0 0
        %1203 = vmatprep.subr.bf16.mxu0 0
        %1204 = vmatpush1.bf16.msra.mxu0 0
        %1205 = vmatprep.subr.bf16.mxu0 0
        %1206 = vmatpush1.bf16.msra.mxu0 0
        %1207 = vmatprep.subr.bf16.mxu0 0
        %1208 = vmatpush1.bf16.msra.mxu0 0
        %1209 = vmatprep.subr.bf16.mxu0 0
        %1210 = vmatpush1.bf16.msra.mxu0 0
        %1211 = vmatprep.subr.bf16.mxu0 0
        %1212 = vmatpush1.bf16.msra.mxu0 0
        %1213 = vmatprep.subr.bf16.mxu0 0
        %1214 = vmatpush1.bf16.msra.mxu0 0
        %1215 = vmatprep.subr.bf16.mxu0 0
        %1216 = vmatpush1.bf16.msra.mxu0 0
        %1217 = vmatprep.subr.bf16.mxu0 0
        %1218 = vmatpush1.bf16.msra.mxu0 0
        %1219 = vmatprep.subr.bf16.mxu0 0
        %1220 = vmatpush1.bf16.msra.mxu0 0
        %1221 = vmatprep.subr.bf16.mxu0 0
        %1222 = vmatpush1.bf16.msra.mxu0 0
        %1223 = vmatprep.mubr.bf16.mxu0 0
        %1224 = vmatmul.mubr.bf16.gmra.mrb[0].mxu0 %v1189
        %v1225 = vpop.f32.mrb[0].mxu0
        %v1226 = vadd.f32 %v1174, %v1225
        %v1227 = vpop.f32.mrb[0].mxu0
        %v1228 = vpop.f32.mrb[0].mxu0
        %v1229 = vpop.f32.mrb[0].mxu0
        %1230 = vdwg.mxu0
        %v1231 = vmul.f32 %v1226, 0.5
        %v1232 = vmul.f32 %v1226, 0.044715
        %v1233 = vmul.f32 %v1232, %v1226
        %v1234 = vmul.f32 %v1233, %v1226
        %v1235 = vadd.f32 %v1226, %v1234
        %v1236 = vmul.f32 %v1235, 0.7978846
        %v1237 = vtanh.pop %v1236
        %v1238 = vadd.f32 %v1237, 1.0
        %v1239 = vmul.f32 %v1231, %v1238
        %v1240 = vpack.c.bf16 %v1239, %v1239
        %v1241 = vld [vmem:[%s10] sm:$0xf]
        %v1242 = vld [vmem:[%s10 + $0x4] sm:$0xf]
        %v1243 = vld [vmem:[%s10 + $0x8] sm:$0xf]
        %v1244 = vld [vmem:[%s10 + $0xc] sm:$0xf]
        %v1245 = vld [vmem:[%s10 + $0x10] sm:$0xf]
        %v1246 = vld [vmem:[%s10 + $0x14] sm:$0xf]
        %v1247 = vld [vmem:[%s10 + $0x18] sm:$0xf]
        %v1248 = vld [vmem:[%s10 + $0x1c] sm:$0xf]
        %v1249 = vld [vmem:[%s11] sm:$0x1]
        %v1251 = vlaneseq
        %v1252 = vshrl.u32 %v1251, 7
        %v1253 = vsub.s32 0, %v1252
        %v1254 = vrot.slane %v1249, %v1253
        %v1264 = vunpack.c.l.b16 %v1241
        %v1265 = vunpack.c.l.b16 %v1242
        %v1266 = vunpack.c.l.b16 %v1243
        %v1267 = vunpack.c.l.b16 %v1244
        %v1268 = vunpack.c.l.b16 %v1245
        %v1269 = vunpack.c.l.b16 %v1246
        %v1270 = vunpack.c.l.b16 %v1247
        %v1271 = vunpack.c.l.b16 %v1248
        %v1272 = vpack.c.b16 %v1265, %v1264
        %v1273 = vpack.c.b16 %v1267, %v1266
        %v1274 = vpack.c.b16 %v1269, %v1268
        %v1275 = vpack.c.b16 %v1271, %v1270
        %vm1280 = vcmask 523264
        %v1282 = vsel %vm1280, %v1240, 0
        %1284 = vmatprep.subr.bf16.mxu0 0
        %1285 = vmatpush1.bf16.msra.mxu0 %v1272
        %1286 = vmatprep.subr.bf16.mxu0 0
        %1287 = vmatpush1.bf16.msra.mxu0 %v1273
        %1288 = vmatprep.subr.bf16.mxu0 0
        %1289 = vmatpush1.bf16.msra.mxu0 %v1274
        %1290 = vmatprep.subr.bf16.mxu0 0
        %1291 = vmatpush1.bf16.msra.mxu0 %v1275
        %1292 = vmatprep.subr.bf16.mxu0 0
        %1293 = vmatpush1.bf16.msra.mxu0 0
        %1294 = vmatprep.subr.bf16.mxu0 0
        %1295 = vmatpush1.bf16.msra.mxu0 0
        %1296 = vmatprep.subr.bf16.mxu0 0
        %1297 = vmatpush1.bf16.msra.mxu0 0
        %1298 = vmatprep.subr.bf16.mxu0 0
        %1299 = vmatpush1.bf16.msra.mxu0 0
        %1300 = vmatprep.subr.bf16.mxu0 0
        %1301 = vmatpush1.bf16.msra.mxu0 0
        %1302 = vmatprep.subr.bf16.mxu0 0
        %1303 = vmatpush1.bf16.msra.mxu0 0
        %1304 = vmatprep.subr.bf16.mxu0 0
        %1305 = vmatpush1.bf16.msra.mxu0 0
        %1306 = vmatprep.subr.bf16.mxu0 0
        %1307 = vmatpush1.bf16.msra.mxu0 0
        %1308 = vmatprep.subr.bf16.mxu0 0
        %1309 = vmatpush1.bf16.msra.mxu0 0
        %1310 = vmatprep.subr.bf16.mxu0 0
        %1311 = vmatpush1.bf16.msra.mxu0 0
        %1312 = vmatprep.subr.bf16.mxu0 0
        %1313 = vmatpush1.bf16.msra.mxu0 0
        %1314 = vmatprep.subr.bf16.mxu0 0
        %1315 = vmatpush1.bf16.msra.mxu0 0
        %1316 = vmatprep.mubr.bf16.mxu0 0
        %1317 = vmatmul.mubr.bf16.gmra.mrb[0].mxu0 %v1282
        %v1318 = vpop.f32.mrb[0].mxu0
        %v1319 = vadd.f32 %v1254, %v1318
        %v1320 = vpop.f32.mrb[0].mxu0
        %v1321 = vpop.f32.mrb[0].mxu0
        %v1322 = vpop.f32.mrb[0].mxu0
        %1323 = vdwg.mxu0
        %v1324 = vadd.f32 %v1319, %v1163
        %v1325 = vld [vmem:[%s12] sm:$0x1]
        %v1326 = vld [vmem:[%s13] sm:$0x1]
        %v1327 = vsel %vm542, %v1324, 0.0
        %1328 = vadd.xlane.f32.xlu0 %v1327
        %v1329 = vpop.xlane.xlu0 %1328
        %v1330 = vmul.f32 %v1329, %v1139
        %v1331 = vsub.f32 %v1324, %v1330
        %v1332 = vmul.f32 %v1331, %v1331
        %v1333 = vsel %vm542, %v1332, 0.0
        %1334 = vadd.xlane.f32.xlu0 %v1333
        %v1335 = vpop.xlane.xlu0 %1334
        %v1336 = vmul.f32 %v1335, %v1139
        %v1337 = vadd.f32 %v1336, 1e-12
        %v1338 = vrsqrt.pop %v1337
        %v1339 = vmul.f32 %v1331, %v1338
        %v1341 = vlaneseq
        %v1342 = vshrl.u32 %v1341, 7
        %v1343 = vsub.s32 0, %v1342
        %v1344 = vrot.slane %v1325, %v1343
        %v1346 = vmul.f32 %v1339, %v1344
        %v1348 = vlaneseq
        %v1349 = vshrl.u32 %v1348, 7
        %v1350 = vsub.s32 0, %v1349
        %v1351 = vrot.slane %v1326, %v1350
        %v1353 = vadd.f32 %v1346, %v1351
        %1354 = vst.msk [vmem:[%s514] sm:$0xff] %vm542, %v1353
        %p1355 = scmp.lt.s32.totalorder %s30, 1
        %s1356 = scalar_select %p1355, %s30, 1
        %s1357 = smul.addr %s1356, 8
        %s1358 = scalar_lea.vmem %s14, %s1357
        %s1359 = sand.u32 %s368, 1
        %s1360 = scalar_lea.sflag [#allocation3], %s1359
        %s1361 = sand.u32 %s368, 1
        %s1362 = smul.addr %s1361, 32
        %s1363 = scalar_lea.vmem [#allocation2], %s1362
        // Predicated region
        $region77: #{bert_classifier_forward.4} parent=75 // pred_check
          %p1364 = pneg %p352
        $region78: #{bert_classifier_forward.4} parent=75 // pred_check_branch
          %1366 = sbr.rel (%p1364) target = $region80
        $region79: #{bert_classifier_forward.4} parent=75 // pred_region
          _
        $region80: #{bert_classifier_forward.4} parent=75 // pred_fallthru
          _
        // Predicated region
        $region81: #{bert_classifier_forward.4} parent=75 // pred_check
          %p1367 = pneg %p378
        $region82: #{bert_classifier_forward.4} parent=75 // pred_check_branch
          %1369 = sbr.rel (%p1367) target = $region84
        $region83: #{bert_classifier_forward.4} parent=75 // pred_region
          %s1371 = ssub.s32 512, 512
          %1372 = vsyncadd %s1360, %s1371
          %s1373 = smul.addr %s30, 4
          %s1374 = smul.addr %s1373, 128
          %s1375 = scalar_lea.hbm %s15, %s1374
          %s1376 = sshll.u32 %s1363, 4
          %s1377 = int_to_ptr.vmem [resolvable:$true] %s1376
          %1382 = dma.vmem_to_hbm [thread:$0]  %s1377, 512, %s1375, %s1360, 128, 128, 8
        $region84: #{bert_classifier_forward.4} parent=75 // pred_fallthru
          _
      $region76: #{bert_classifier_forward.4} parent=5 // pred_fallthru
        _
      %p1383 = scmp.le.s32.totalorder 2, %s25
      // Predicated region
      $region85: #{bert_classifier_forward.4} parent=5 // pred_check
        %p1384 = pneg %p1383
      $region86: #{bert_classifier_forward.4} parent=5 // pred_check_branch
        %1386 = sbr.rel (%p1384) target = $region88
      $region87: #{bert_classifier_forward.4} parent=5 // pred_region
        %s1387 = ssub.s32 %s25, 2
        // Predicated region
        $region89: #{bert_classifier_forward.4} parent=87 // pred_check
          %p1388 = pneg %p358
        $region90: #{bert_classifier_forward.4} parent=87 // pred_check_branch
          %1390 = sbr.rel (%p1388) target = $region92
        $region91: #{bert_classifier_forward.4} parent=87 // pred_region
          %p1391 = scmp.lt.s32.totalorder %s31, 1
          %s1392 = scalar_select %p1391, %s31, 1
          %s1393 = smul.addr %s1392, 8
          %s1394 = scalar_lea.vmem %s14, %s1393
        $region92: #{bert_classifier_forward.4} parent=87 // pred_fallthru
          _
        // Predicated region
        $region93: #{bert_classifier_forward.4} parent=87 // pred_check
          %p1395 = pneg %p384
        $region94: #{bert_classifier_forward.4} parent=87 // pred_check_branch
          %1397 = sbr.rel (%p1395) target = $region96
        $region95: #{bert_classifier_forward.4} parent=87 // pred_region
          %s1398 = sand.u32 %s369, 1
          %s1399 = scalar_lea.sflag [#allocation3], %s1398
          %s1400 = sand.u32 %s369, 1
          %s1401 = smul.addr %s1400, 32
          %s1402 = scalar_lea.vmem [#allocation2], %s1401
          %1403 = dma.done %s1399, 512
        $region96: #{bert_classifier_forward.4} parent=87 // pred_fallthru
          _
      $region88: #{bert_classifier_forward.4} parent=5 // pred_fallthru
        _
    $region6: #{bert_classifier_forward.4} parent=1 // loop_footer
      %s29 = sadd.s32 1, %s25
    $region7: #{bert_classifier_forward.4} parent=1 // loop_footer_branch
      %24 = sbr.rel target = $region3
    $region8: #{bert_classifier_forward.4} parent=1 // loop_exit
      _
    %1404 = vsyncpa [#allocation3], 1
    %s1405 = scalar_lea.sflag [#allocation3], 1
    %1406 = vsyncpa %s1405, 1

// kernel: bert_classifier_forward.5
$region0: #{bert_classifier_forward.5}
  #allocation0 [shape = 'u32[]', space=smem, size = 0x4, offset = 0x4, fixed_abs, tag = 'smem constant byte address 0x4 - core index']
  #allocation1 [shape = 'u32[144,128]{1,0:T(1,128)}', space=vmem, size = 0x12000, scoped, tag = 'internal scratch']
  %s0 = inlined_call_operand.vmem [shape: f32[2,8,32], index: 0, kind: input, shape index: {}]
  %s1 = inlined_call_operand.vmem [shape: f32[2,1,8], index: 1, kind: input, shape index: {}]
  %s2 = inlined_call_operand.vmem [shape: bf16[32,96], index: 2, kind: input, shape index: {}]
  %s3 = inlined_call_operand.vmem [shape: f32[1,96], index: 3, kind: input, shape index: {}]
  %s4 = inlined_call_operand.vmem [shape: bf16[32,32], index: 4, kind: input, shape index: {}]
  %s5 = inlined_call_operand.vmem [shape: f32[1,32], index: 5, kind: input, shape index: {}]
  %s6 = inlined_call_operand.vmem [shape: f32[1,32], index: 6, kind: input, shape index: {}]
  %s7 = inlined_call_operand.vmem [shape: f32[1,32], index: 7, kind: input, shape index: {}]
  %s8 = inlined_call_operand.vmem [shape: bf16[32,64], index: 8, kind: input, shape index: {}]
  %s9 = inlined_call_operand.vmem [shape: f32[1,64], index: 9, kind: input, shape index: {}]
  %s10 = inlined_call_operand.vmem [shape: bf16[64,32], index: 10, kind: input, shape index: {}]
  %s11 = inlined_call_operand.vmem [shape: f32[1,32], index: 11, kind: input, shape index: {}]
  %s12 = inlined_call_operand.vmem [shape: f32[1,32], index: 12, kind: input, shape index: {}]
  %s13 = inlined_call_operand.vmem [shape: f32[1,32], index: 13, kind: input, shape index: {}]
  %s14 = inlined_call_operand.vmem [shape: bf16[32,32], index: 14, kind: input, shape index: {}]
  %s15 = inlined_call_operand.vmem [shape: f32[1,32], index: 15, kind: input, shape index: {}]
  %s16 = inlined_call_operand.vmem [shape: bf16[32,2], index: 16, kind: input, shape index: {}]
  %s17 = inlined_call_operand.vmem [shape: f32[1,2], index: 17, kind: input, shape index: {}]
  %s18 = inlined_call_operand.hbm [shape: f32[2,8,32], index: 18, kind: output, shape index: {0}]
  %s19 = inlined_call_operand.hbm [shape: f32[2,4,8,8], index: 19, kind: output, shape index: {1}]
  %s20 = inlined_call_operand.hbm [shape: f32[2,1,2], index: 20, kind: output, shape index: {2}]
  %21 = xla_tuple %s18, %s19, %s20
  %s22 = sld [smem:[#allocation0]]
  $region121: #{bert_classifier_forward.5} parent=0
    _
  %s24 = ssub.s32 1, %s22
  %s25 = scalar_select 0, %s24, %s22
  $region1: #{bert_classifier_forward.5} parent=0
    #allocation2 [shape = 'u8[8192]{0}', space=vmem, size = 0x2000, scoped, tag = 'output window, operand 0']
    #allocation3 [shape = 's32[2]{0}', space=sflag, size = 0x8, scoped, tag = 'scoped memory for bert_classifier_forward.5']
    #allocation4 [shape = 'u8[32768]{0}', space=vmem, size = 0x8000, scoped, tag = 'output window, operand 1']
    #allocation5 [shape = 's32[2]{0}', space=sflag, size = 0x8, scoped, tag = 'scoped memory for bert_classifier_forward.5']
    #allocation6 [shape = 'u8[1024]{0}', space=vmem, size = 0x400, scoped, tag = 'output window, operand 2']
    %26 = vsyncpa [#allocation3], 0
    %s27 = scalar_lea.sflag [#allocation3], 1
    %28 = vsyncpa %s27, 0
    %29 = vsyncpa [#allocation5], 0
    %s30 = scalar_lea.sflag [#allocation5], 1
    %31 = vsyncpa %s30, 0
    loop: start=0, step=1, limit=4
    $region2: #{bert_classifier_forward.5} parent=1 // loop_pre_header
      _
    $region3: #{bert_classifier_forward.5} parent=1 // loop_header
      %s33 = sphi 0, %s37
      %p34 = scmp.ge.s32.totalorder %s33, 4
      %s43 = sphi 0, %s45
      %s46 = sphi 0, %s43
      %s47 = sphi 0, %s46
      %s63 = sphi 0, %s47
      %s69 = sphi 0, %s71
      %s72 = sphi 0, %s69
      %s73 = sphi 0, %s72
      %s89 = sphi 0, %s73
      %s93 = sphi 0, %s93
      %s95 = sphi 0, %s93
      %s96 = sphi 0, %s95
      %s110 = sphi 0, %s96
      %s114 = sphi 0, %s114
      %s116 = sphi 0, %s114
      %s117 = sphi 0, %s116
      %s131 = sphi 0, %s117
      %s135 = sphi 0, %s135
      %s137 = sphi 0, %s135
      %s138 = sphi 0, %s137
      %s152 = sphi 0, %s138
      %s156 = sphi 0, %s156
      %s158 = sphi 0, %s156
      %s159 = sphi 0, %s158
      %s173 = sphi 0, %s159
      %s177 = sphi 0, %s177
      %s179 = sphi 0, %s177
      %s180 = sphi 0, %s179
      %s194 = sphi 0, %s180
      %s198 = sphi 0, %s198
      %s200 = sphi 0, %s198
      %s201 = sphi 0, %s200
      %s215 = sphi 0, %s201
      %s219 = sphi 0, %s219
      %s221 = sphi 0, %s219
      %s222 = sphi 0, %s221
      %s236 = sphi 0, %s222
      %s240 = sphi 0, %s240
      %s242 = sphi 0, %s240
      %s243 = sphi 0, %s242
      %s257 = sphi 0, %s243
      %s261 = sphi 0, %s261
      %s263 = sphi 0, %s261
      %s264 = sphi 0, %s263
      %s278 = sphi 0, %s264
      %s282 = sphi 0, %s282
      %s284 = sphi 0, %s282
      %s285 = sphi 0, %s284
      %s299 = sphi 0, %s285
      %s303 = sphi 0, %s303
      %s305 = sphi 0, %s303
      %s306 = sphi 0, %s305
      %s320 = sphi 0, %s306
      %s324 = sphi 0, %s324
      %s326 = sphi 0, %s324
      %s327 = sphi 0, %s326
      %s341 = sphi 0, %s327
      %s345 = sphi 0, %s345
      %s347 = sphi 0, %s345
      %s348 = sphi 0, %s347
      %s362 = sphi 0, %s348
      %s366 = sphi 0, %s366
      %s368 = sphi 0, %s366
      %s369 = sphi 0, %s368
      %s383 = sphi 0, %s369
      %s387 = sphi 0, %s387
      %s389 = sphi 0, %s387
      %s390 = sphi 0, %s389
      %s404 = sphi 0, %s390
      %s408 = sphi 0, %s408
      %s410 = sphi 0, %s408
      %s411 = sphi 0, %s410
      %s425 = sphi 0, %s411
      %s431 = sphi 0, %s433
      %s434 = sphi 0, %s431
      %s435 = sphi 0, %s434
      %s451 = sphi 0, %s435
      %s457 = sphi 0, %s459
      %s460 = sphi 0, %s457
      %s461 = sphi 0, %s460
      %s477 = sphi 0, %s461
      %s483 = sphi 0, %s485
      %s486 = sphi 0, %s483
      %s487 = sphi 0, %s486
      %s503 = sphi 0, %s487
    $region4: #{bert_classifier_forward.5} parent=1 // loop_header_branch
      %36 = sbr.rel (%p34) target = $region8
    $region5: #{bert_classifier_forward.5} parent=1 // loop_body
      %s38 = ssub.s32 %s33, 1
      %s39 = ssub.s32 %s33, 2
      %s40 = sadd.s32 %s33, 1
      %s41 = ssub.s32 %s33, %s40
      %p42 = scmp.eq.s32.totalorder %s41, 0
      %s44 = sadd.s32 %s43, 1
      %s45 = scalar_select %p42, %s43, %s44
      %p48 = pneg %p42
      %p49 = scmp.eq.s32.totalorder %s33, 1
      %p50 = por %p48, %p49
      %p51 = scmp.ne.s32.totalorder %s43, %s46
      %p52 = scmp.eq.s32.totalorder %s33, 0
      %p53 = por %p51, %p52
      %p54 = scmp.ne.s32.totalorder %s43, %s46
      %p55 = scmp.eq.s32.totalorder %s38, 1
      %p56 = por %p54, %p55
      %p57 = scmp.ne.s32.totalorder %s46, %s47
      %p58 = scmp.eq.s32.totalorder %s38, 0
      %p59 = por %p57, %p58
      %p60 = scmp.ne.s32.totalorder %s46, %s47
      %p61 = scmp.eq.s32.totalorder %s39, 1
      %p62 = por %p60, %p61
      %p64 = scmp.ne.s32.totalorder %s47, %s63
      %p65 = scmp.eq.s32.totalorder %s39, 0
      %p66 = por %p64, %p65
      %s67 = ssub.s32 %s33, %s40
      %p68 = scmp.eq.s32.totalorder %s67, 0
      %s70 = sadd.s32 %s69, 1
      %s71 = scalar_select %p68, %s69, %s70
      %p74 = pneg %p68
      %p75 = scmp.eq.s32.totalorder %s33, 1
      %p76 = por %p74, %p75
      %p77 = scmp.ne.s32.totalorder %s69, %s72
      %p78 = scmp.eq.s32.totalorder %s33, 0
      %p79 = por %p77, %p78
      %p80 = scmp.ne.s32.totalorder %s69, %s72
      %p81 = scmp.eq.s32.totalorder %s38, 1
      %p82 = por %p80, %p81
      %p83 = scmp.ne.s32.totalorder %s72, %s73
      %p84 = scmp.eq.s32.totalorder %s38, 0
      %p85 = por %p83, %p84
      %p86 = scmp.ne.s32.totalorder %s72, %s73
      %p87 = scmp.eq.s32.totalorder %s39, 1
      %p88 = por %p86, %p87
      %p90 = scmp.ne.s32.totalorder %s73, %s89
      %p91 = scmp.eq.s32.totalorder %s39, 0
      %p92 = por %p90, %p91
      %s94 = sadd.s32 %s93, 1
      %p97 = scmp.eq.s32.totalorder %s33, 1
      %p98 = scmp.ne.s32.totalorder %s93, %s95
      %p99 = scmp.eq.s32.totalorder %s33, 0
      %p100 = por %p98, %p99
      %p101 = scmp.ne.s32.totalorder %s93, %s95
      %p102 = scmp.eq.s32.totalorder %s38, 1
      %p103 = por %p101, %p102
      %p104 = scmp.ne.s32.totalorder %s95, %s96
      %p105 = scmp.eq.s32.totalorder %s38, 0
      %p106 = por %p104, %p105
      %p107 = scmp.ne.s32.totalorder %s95, %s96
      %p108 = scmp.eq.s32.totalorder %s39, 1
      %p109 = por %p107, %p108
      %p111 = scmp.ne.s32.totalorder %s96, %s110
      %p112 = scmp.eq.s32.totalorder %s39, 0
      %p113 = por %p111, %p112
      %s115 = sadd.s32 %s114, 1
      %p118 = scmp.eq.s32.totalorder %s33, 1
      %p119 = scmp.ne.s32.totalorder %s114, %s116
      %p120 = scmp.eq.s32.totalorder %s33, 0
      %p121 = por %p119, %p120
      %p122 = scmp.ne.s32.totalorder %s114, %s116
      %p123 = scmp.eq.s32.totalorder %s38, 1
      %p124 = por %p122, %p123
      %p125 = scmp.ne.s32.totalorder %s116, %s117
      %p126 = scmp.eq.s32.totalorder %s38, 0
      %p127 = por %p125, %p126
      %p128 = scmp.ne.s32.totalorder %s116, %s117
      %p129 = scmp.eq.s32.totalorder %s39, 1
      %p130 = por %p128, %p129
      %p132 = scmp.ne.s32.totalorder %s117, %s131
      %p133 = scmp.eq.s32.totalorder %s39, 0
      %p134 = por %p132, %p133
      %s136 = sadd.s32 %s135, 1
      %p139 = scmp.eq.s32.totalorder %s33, 1
      %p140 = scmp.ne.s32.totalorder %s135, %s137
      %p141 = scmp.eq.s32.totalorder %s33, 0
      %p142 = por %p140, %p141
      %p143 = scmp.ne.s32.totalorder %s135, %s137
      %p144 = scmp.eq.s32.totalorder %s38, 1
      %p145 = por %p143, %p144
      %p146 = scmp.ne.s32.totalorder %s137, %s138
      %p147 = scmp.eq.s32.totalorder %s38, 0
      %p148 = por %p146, %p147
      %p149 = scmp.ne.s32.totalorder %s137, %s138
      %p150 = scmp.eq.s32.totalorder %s39, 1
      %p151 = por %p149, %p150
      %p153 = scmp.ne.s32.totalorder %s138, %s152
      %p154 = scmp.eq.s32.totalorder %s39, 0
      %p155 = por %p153, %p154
      %s157 = sadd.s32 %s156, 1
      %p160 = scmp.eq.s32.totalorder %s33, 1
      %p161 = scmp.ne.s32.totalorder %s156, %s158
      %p162 = scmp.eq.s32.totalorder %s33, 0
      %p163 = por %p161, %p162
      %p164 = scmp.ne.s32.totalorder %s156, %s158
      %p165 = scmp.eq.s32.totalorder %s38, 1
      %p166 = por %p164, %p165
      %p167 = scmp.ne.s32.totalorder %s158, %s159
      %p168 = scmp.eq.s32.totalorder %s38, 0
      %p169 = por %p167, %p168
      %p170 = scmp.ne.s32.totalorder %s158, %s159
      %p171 = scmp.eq.s32.totalorder %s39, 1
      %p172 = por %p170, %p171
      %p174 = scmp.ne.s32.totalorder %s159, %s173
      %p175 = scmp.eq.s32.totalorder %s39, 0
      %p176 = por %p174, %p175
      %s178 = sadd.s32 %s177, 1
      %p181 = scmp.eq.s32.totalorder %s33, 1
      %p182 = scmp.ne.s32.totalorder %s177, %s179
      %p183 = scmp.eq.s32.totalorder %s33, 0
      %p184 = por %p182, %p183
      %p185 = scmp.ne.s32.totalorder %s177, %s179
      %p186 = scmp.eq.s32.totalorder %s38, 1
      %p187 = por %p185, %p186
      %p188 = scmp.ne.s32.totalorder %s179, %s180
      %p189 = scmp.eq.s32.totalorder %s38, 0
      %p190 = por %p188, %p189
      %p191 = scmp.ne.s32.totalorder %s179, %s180
      %p192 = scmp.eq.s32.totalorder %s39, 1
      %p193 = por %p191, %p192
      %p195 = scmp.ne.s32.totalorder %s180, %s194
      %p196 = scmp.eq.s32.totalorder %s39, 0
      %p197 = por %p195, %p196
      %s199 = sadd.s32 %s198, 1
      %p202 = scmp.eq.s32.totalorder %s33, 1
      %p203 = scmp.ne.s32.totalorder %s198, %s200
      %p204 = scmp.eq.s32.totalorder %s33, 0
      %p205 = por %p203, %p204
      %p206 = scmp.ne.s32.totalorder %s198, %s200
      %p207 = scmp.eq.s32.totalorder %s38, 1
      %p208 = por %p206, %p207
      %p209 = scmp.ne.s32.totalorder %s200, %s201
      %p210 = scmp.eq.s32.totalorder %s38, 0
      %p211 = por %p209, %p210
      %p212 = scmp.ne.s32.totalorder %s200, %s201
      %p213 = scmp.eq.s32.totalorder %s39, 1
      %p214 = por %p212, %p213
      %p216 = scmp.ne.s32.totalorder %s201, %s215
      %p217 = scmp.eq.s32.totalorder %s39, 0
      %p218 = por %p216, %p217
      %s220 = sadd.s32 %s219, 1
      %p223 = scmp.eq.s32.totalorder %s33, 1
      %p224 = scmp.ne.s32.totalorder %s219, %s221
      %p225 = scmp.eq.s32.totalorder %s33, 0
      %p226 = por %p224, %p225
      %p227 = scmp.ne.s32.totalorder %s219, %s221
      %p228 = scmp.eq.s32.totalorder %s38, 1
      %p229 = por %p227, %p228
      %p230 = scmp.ne.s32.totalorder %s221, %s222
      %p231 = scmp.eq.s32.totalorder %s38, 0
      %p232 = por %p230, %p231
      %p233 = scmp.ne.s32.totalorder %s221, %s222
      %p234 = scmp.eq.s32.totalorder %s39, 1
      %p235 = por %p233, %p234
      %p237 = scmp.ne.s32.totalorder %s222, %s236
      %p238 = scmp.eq.s32.totalorder %s39, 0
      %p239 = por %p237, %p238
      %s241 = sadd.s32 %s240, 1
      %p244 = scmp.eq.s32.totalorder %s33, 1
      %p245 = scmp.ne.s32.totalorder %s240, %s242
      %p246 = scmp.eq.s32.totalorder %s33, 0
      %p247 = por %p245, %p246
      %p248 = scmp.ne.s32.totalorder %s240, %s242
      %p249 = scmp.eq.s32.totalorder %s38, 1
      %p250 = por %p248, %p249
      %p251 = scmp.ne.s32.totalorder %s242, %s243
      %p252 = scmp.eq.s32.totalorder %s38, 0
      %p253 = por %p251, %p252
      %p254 = scmp.ne.s32.totalorder %s242, %s243
      %p255 = scmp.eq.s32.totalorder %s39, 1
      %p256 = por %p254, %p255
      %p258 = scmp.ne.s32.totalorder %s243, %s257
      %p259 = scmp.eq.s32.totalorder %s39, 0
      %p260 = por %p258, %p259
      %s262 = sadd.s32 %s261, 1
      %p265 = scmp.eq.s32.totalorder %s33, 1
      %p266 = scmp.ne.s32.totalorder %s261, %s263
      %p267 = scmp.eq.s32.totalorder %s33, 0
      %p268 = por %p266, %p267
      %p269 = scmp.ne.s32.totalorder %s261, %s263
      %p270 = scmp.eq.s32.totalorder %s38, 1
      %p271 = por %p269, %p270
      %p272 = scmp.ne.s32.totalorder %s263, %s264
      %p273 = scmp.eq.s32.totalorder %s38, 0
      %p274 = por %p272, %p273
      %p275 = scmp.ne.s32.totalorder %s263, %s264
      %p276 = scmp.eq.s32.totalorder %s39, 1
      %p277 = por %p275, %p276
      %p279 = scmp.ne.s32.totalorder %s264, %s278
      %p280 = scmp.eq.s32.totalorder %s39, 0
      %p281 = por %p279, %p280
      %s283 = sadd.s32 %s282, 1
      %p286 = scmp.eq.s32.totalorder %s33, 1
      %p287 = scmp.ne.s32.totalorder %s282, %s284
      %p288 = scmp.eq.s32.totalorder %s33, 0
      %p289 = por %p287, %p288
      %p290 = scmp.ne.s32.totalorder %s282, %s284
      %p291 = scmp.eq.s32.totalorder %s38, 1
      %p292 = por %p290, %p291
      %p293 = scmp.ne.s32.totalorder %s284, %s285
      %p294 = scmp.eq.s32.totalorder %s38, 0
      %p295 = por %p293, %p294
      %p296 = scmp.ne.s32.totalorder %s284, %s285
      %p297 = scmp.eq.s32.totalorder %s39, 1
      %p298 = por %p296, %p297
      %p300 = scmp.ne.s32.totalorder %s285, %s299
      %p301 = scmp.eq.s32.totalorder %s39, 0
      %p302 = por %p300, %p301
      %s304 = sadd.s32 %s303, 1
      %p307 = scmp.eq.s32.totalorder %s33, 1
      %p308 = scmp.ne.s32.totalorder %s303, %s305
      %p309 = scmp.eq.s32.totalorder %s33, 0
      %p310 = por %p308, %p309
      %p311 = scmp.ne.s32.totalorder %s303, %s305
      %p312 = scmp.eq.s32.totalorder %s38, 1
      %p313 = por %p311, %p312
      %p314 = scmp.ne.s32.totalorder %s305, %s306
      %p315 = scmp.eq.s32.totalorder %s38, 0
      %p316 = por %p314, %p315
      %p317 = scmp.ne.s32.totalorder %s305, %s306
      %p318 = scmp.eq.s32.totalorder %s39, 1
      %p319 = por %p317, %p318
      %p321 = scmp.ne.s32.totalorder %s306, %s320
      %p322 = scmp.eq.s32.totalorder %s39, 0
      %p323 = por %p321, %p322
      %s325 = sadd.s32 %s324, 1
      %p328 = scmp.eq.s32.totalorder %s33, 1
      %p329 = scmp.ne.s32.totalorder %s324, %s326
      %p330 = scmp.eq.s32.totalorder %s33, 0
      %p331 = por %p329, %p330
      %p332 = scmp.ne.s32.totalorder %s324, %s326
      %p333 = scmp.eq.s32.totalorder %s38, 1
      %p334 = por %p332, %p333
      %p335 = scmp.ne.s32.totalorder %s326, %s327
      %p336 = scmp.eq.s32.totalorder %s38, 0
      %p337 = por %p335, %p336
      %p338 = scmp.ne.s32.totalorder %s326, %s327
      %p339 = scmp.eq.s32.totalorder %s39, 1
      %p340 = por %p338, %p339
      %p342 = scmp.ne.s32.totalorder %s327, %s341
      %p343 = scmp.eq.s32.totalorder %s39, 0
      %p344 = por %p342, %p343
      %s346 = sadd.s32 %s345, 1
      %p349 = scmp.eq.s32.totalorder %s33, 1
      %p350 = scmp.ne.s32.totalorder %s345, %s347
      %p351 = scmp.eq.s32.totalorder %s33, 0
      %p352 = por %p350, %p351
      %p353 = scmp.ne.s32.totalorder %s345, %s347
      %p354 = scmp.eq.s32.totalorder %s38, 1
      %p355 = por %p353, %p354
      %p356 = scmp.ne.s32.totalorder %s347, %s348
      %p357 = scmp.eq.s32.totalorder %s38, 0
      %p358 = por %p356, %p357
      %p359 = scmp.ne.s32.totalorder %s347, %s348
      %p360 = scmp.eq.s32.totalorder %s39, 1
      %p361 = por %p359, %p360
      %p363 = scmp.ne.s32.totalorder %s348, %s362
      %p364 = scmp.eq.s32.totalorder %s39, 0
      %p365 = por %p363, %p364
      %s367 = sadd.s32 %s366, 1
      %p370 = scmp.eq.s32.totalorder %s33, 1
      %p371 = scmp.ne.s32.totalorder %s366, %s368
      %p372 = scmp.eq.s32.totalorder %s33, 0
      %p373 = por %p371, %p372
      %p374 = scmp.ne.s32.totalorder %s366, %s368
      %p375 = scmp.eq.s32.totalorder %s38, 1
      %p376 = por %p374, %p375
      %p377 = scmp.ne.s32.totalorder %s368, %s369
      %p378 = scmp.eq.s32.totalorder %s38, 0
      %p379 = por %p377, %p378
      %p380 = scmp.ne.s32.totalorder %s368, %s369
      %p381 = scmp.eq.s32.totalorder %s39, 1
      %p382 = por %p380, %p381
      %p384 = scmp.ne.s32.totalorder %s369, %s383
      %p385 = scmp.eq.s32.totalorder %s39, 0
      %p386 = por %p384, %p385
      %s388 = sadd.s32 %s387, 1
      %p391 = scmp.eq.s32.totalorder %s33, 1
      %p392 = scmp.ne.s32.totalorder %s387, %s389
      %p393 = scmp.eq.s32.totalorder %s33, 0
      %p394 = por %p392, %p393
      %p395 = scmp.ne.s32.totalorder %s387, %s389
      %p396 = scmp.eq.s32.totalorder %s38, 1
      %p397 = por %p395, %p396
      %p398 = scmp.ne.s32.totalorder %s389, %s390
      %p399 = scmp.eq.s32.totalorder %s38, 0
      %p400 = por %p398, %p399
      %p401 = scmp.ne.s32.totalorder %s389, %s390
      %p402 = scmp.eq.s32.totalorder %s39, 1
      %p403 = por %p401, %p402
      %p405 = scmp.ne.s32.totalorder %s390, %s404
      %p406 = scmp.eq.s32.totalorder %s39, 0
      %p407 = por %p405, %p406
      %s409 = sadd.s32 %s408, 1
      %p412 = scmp.eq.s32.totalorder %s33, 1
      %p413 = scmp.ne.s32.totalorder %s408, %s410
      %p414 = scmp.eq.s32.totalorder %s33, 0
      %p415 = por %p413, %p414
      %p416 = scmp.ne.s32.totalorder %s408, %s410
      %p417 = scmp.eq.s32.totalorder %s38, 1
      %p418 = por %p416, %p417
      %p419 = scmp.ne.s32.totalorder %s410, %s411
      %p420 = scmp.eq.s32.totalorder %s38, 0
      %p421 = por %p419, %p420
      %p422 = scmp.ne.s32.totalorder %s410, %s411
      %p423 = scmp.eq.s32.totalorder %s39, 1
      %p424 = por %p422, %p423
      %p426 = scmp.ne.s32.totalorder %s411, %s425
      %p427 = scmp.eq.s32.totalorder %s39, 0
      %p428 = por %p426, %p427
      %s429 = ssub.s32 %s33, %s40
      %p430 = scmp.eq.s32.totalorder %s429, 0
      %s432 = sadd.s32 %s431, 1
      %s433 = scalar_select %p430, %s431, %s432
      %p436 = pneg %p430
      %p437 = scmp.eq.s32.totalorder %s33, 1
      %p438 = por %p436, %p437
      %p439 = scmp.ne.s32.totalorder %s431, %s434
      %p440 = scmp.eq.s32.totalorder %s33, 0
      %p441 = por %p439, %p440
      %p442 = scmp.ne.s32.totalorder %s431, %s434
      %p443 = scmp.eq.s32.totalorder %s38, 1
      %p444 = por %p442, %p443
      %p445 = scmp.ne.s32.totalorder %s434, %s435
      %p446 = scmp.eq.s32.totalorder %s38, 0
      %p447 = por %p445, %p446
      %p448 = scmp.ne.s32.totalorder %s434, %s435
      %p449 = scmp.eq.s32.totalorder %s39, 1
      %p450 = por %p448, %p449
      %p452 = scmp.ne.s32.totalorder %s435, %s451
      %p453 = scmp.eq.s32.totalorder %s39, 0
      %p454 = por %p452, %p453
      %s455 = ssub.s32 %s33, %s40
      %p456 = scmp.eq.s32.totalorder %s455, 0
      %s458 = sadd.s32 %s457, 1
      %s459 = scalar_select %p456, %s457, %s458
      %p462 = pneg %p456
      %p463 = scmp.eq.s32.totalorder %s33, 1
      %p464 = por %p462, %p463
      %p465 = scmp.ne.s32.totalorder %s457, %s460
      %p466 = scmp.eq.s32.totalorder %s33, 0
      %p467 = por %p465, %p466
      %p468 = scmp.ne.s32.totalorder %s457, %s460
      %p469 = scmp.eq.s32.totalorder %s38, 1
      %p470 = por %p468, %p469
      %p471 = scmp.ne.s32.totalorder %s460, %s461
      %p472 = scmp.eq.s32.totalorder %s38, 0
      %p473 = por %p471, %p472
      %p474 = scmp.ne.s32.totalorder %s460, %s461
      %p475 = scmp.eq.s32.totalorder %s39, 1
      %p476 = por %p474, %p475
      %p478 = scmp.ne.s32.totalorder %s461, %s477
      %p479 = scmp.eq.s32.totalorder %s39, 0
      %p480 = por %p478, %p479
      %s481 = ssub.s32 %s33, %s40
      %p482 = scmp.eq.s32.totalorder %s481, 0
      %s484 = sadd.s32 %s483, 1
      %s485 = scalar_select %p482, %s483, %s484
      %p488 = pneg %p482
      %p489 = scmp.eq.s32.totalorder %s33, 1
      %p490 = por %p488, %p489
      %p491 = scmp.ne.s32.totalorder %s483, %s486
      %p492 = scmp.eq.s32.totalorder %s33, 0
      %p493 = por %p491, %p492
      %p494 = scmp.ne.s32.totalorder %s483, %s486
      %p495 = scmp.eq.s32.totalorder %s38, 1
      %p496 = por %p494, %p495
      %p497 = scmp.ne.s32.totalorder %s486, %s487
      %p498 = scmp.eq.s32.totalorder %s38, 0
      %p499 = por %p497, %p498
      %p500 = scmp.ne.s32.totalorder %s486, %s487
      %p501 = scmp.eq.s32.totalorder %s39, 1
      %p502 = por %p500, %p501
      %p504 = scmp.ne.s32.totalorder %s487, %s503
      %p505 = scmp.eq.s32.totalorder %s39, 0
      %p506 = por %p504, %p505
      %p507 = scmp.le.s32.totalorder 1, %s33
      %p508 = scmp.lt.s32.totalorder %s33, 3
      %p509 = pnand %p507, %p508
      %p510 = pneg %p509
      // Predicated region
      $region9: #{bert_classifier_forward.5} parent=5 // pred_check
        _
      $region10: #{bert_classifier_forward.5} parent=5 // pred_check_branch
        %512 = sbr.rel (%p509) target = $region12
      $region11: #{bert_classifier_forward.5} parent=5 // pred_region
        %s513 = ssub.s32 %s33, 1
        // Predicated region
        $region13: #{bert_classifier_forward.5} parent=11 // pred_check
          %p514 = pneg %p106
        $region14: #{bert_classifier_forward.5} parent=11 // pred_check_branch
          %516 = sbr.rel (%p514) target = $region16
        $region15: #{bert_classifier_forward.5} parent=11 // pred_region
          _
        $region16: #{bert_classifier_forward.5} parent=11 // pred_fallthru
          _
        // Predicated region
        $region17: #{bert_classifier_forward.5} parent=11 // pred_check
          %p517 = pneg %p127
        $region18: #{bert_classifier_forward.5} parent=11 // pred_check_branch
          %519 = sbr.rel (%p517) target = $region20
        $region19: #{bert_classifier_forward.5} parent=11 // pred_region
          _
        $region20: #{bert_classifier_forward.5} parent=11 // pred_fallthru
          _
        // Predicated region
        $region21: #{bert_classifier_forward.5} parent=11 // pred_check
          %p520 = pneg %p148
        $region22: #{bert_classifier_forward.5} parent=11 // pred_check_branch
          %522 = sbr.rel (%p520) target = $region24
        $region23: #{bert_classifier_forward.5} parent=11 // pred_region
          _
        $region24: #{bert_classifier_forward.5} parent=11 // pred_fallthru
          _
        // Predicated region
        $region25: #{bert_classifier_forward.5} parent=11 // pred_check
          %p523 = pneg %p169
        $region26: #{bert_classifier_forward.5} parent=11 // pred_check_branch
          %525 = sbr.rel (%p523) target = $region28
        $region27: #{bert_classifier_forward.5} parent=11 // pred_region
          _
        $region28: #{bert_classifier_forward.5} parent=11 // pred_fallthru
          _
        // Predicated region
        $region29: #{bert_classifier_forward.5} parent=11 // pred_check
          %p526 = pneg %p190
        $region30: #{bert_classifier_forward.5} parent=11 // pred_check_branch
          %528 = sbr.rel (%p526) target = $region32
        $region31: #{bert_classifier_forward.5} parent=11 // pred_region
          _
        $region32: #{bert_classifier_forward.5} parent=11 // pred_fallthru
          _
        // Predicated region
        $region33: #{bert_classifier_forward.5} parent=11 // pred_check
          %p529 = pneg %p211
        $region34: #{bert_classifier_forward.5} parent=11 // pred_check_branch
          %531 = sbr.rel (%p529) target = $region36
        $region35: #{bert_classifier_forward.5} parent=11 // pred_region
          _
        $region36: #{bert_classifier_forward.5} parent=11 // pred_fallthru
          _
        // Predicated region
        $region37: #{bert_classifier_forward.5} parent=11 // pred_check
          %p532 = pneg %p232
        $region38: #{bert_classifier_forward.5} parent=11 // pred_check_branch
          %534 = sbr.rel (%p532) target = $region40
        $region39: #{bert_classifier_forward.5} parent=11 // pred_region
          _
        $region40: #{bert_classifier_forward.5} parent=11 // pred_fallthru
          _
        // Predicated region
        $region41: #{bert_classifier_forward.5} parent=11 // pred_check
          %p535 = pneg %p253
        $region42: #{bert_classifier_forward.5} parent=11 // pred_check_branch
          %537 = sbr.rel (%p535) target = $region44
        $region43: #{bert_classifier_forward.5} parent=11 // pred_region
          _
        $region44: #{bert_classifier_forward.5} parent=11 // pred_fallthru
          _
        // Predicated region
        $region45: #{bert_classifier_forward.5} parent=11 // pred_check
          %p538 = pneg %p274
        $region46: #{bert_classifier_forward.5} parent=11 // pred_check_branch
          %540 = sbr.rel (%p538) target = $region48
        $region47: #{bert_classifier_forward.5} parent=11 // pred_region
          _
        $region48: #{bert_classifier_forward.5} parent=11 // pred_fallthru
          _
        // Predicated region
        $region49: #{bert_classifier_forward.5} parent=11 // pred_check
          %p541 = pneg %p295
        $region50: #{bert_classifier_forward.5} parent=11 // pred_check_branch
          %543 = sbr.rel (%p541) target = $region52
        $region51: #{bert_classifier_forward.5} parent=11 // pred_region
          _
        $region52: #{bert_classifier_forward.5} parent=11 // pred_fallthru
          _
        // Predicated region
        $region53: #{bert_classifier_forward.5} parent=11 // pred_check
          %p544 = pneg %p316
        $region54: #{bert_classifier_forward.5} parent=11 // pred_check_branch
          %546 = sbr.rel (%p544) target = $region56
        $region55: #{bert_classifier_forward.5} parent=11 // pred_region
          _
        $region56: #{bert_classifier_forward.5} parent=11 // pred_fallthru
          _
        // Predicated region
        $region57: #{bert_classifier_forward.5} parent=11 // pred_check
          %p547 = pneg %p337
        $region58: #{bert_classifier_forward.5} parent=11 // pred_check_branch
          %549 = sbr.rel (%p547) target = $region60
        $region59: #{bert_classifier_forward.5} parent=11 // pred_region
          _
        $region60: #{bert_classifier_forward.5} parent=11 // pred_fallthru
          _
        // Predicated region
        $region61: #{bert_classifier_forward.5} parent=11 // pred_check
          %p550 = pneg %p358
        $region62: #{bert_classifier_forward.5} parent=11 // pred_check_branch
          %552 = sbr.rel (%p550) target = $region64
        $region63: #{bert_classifier_forward.5} parent=11 // pred_region
          _
        $region64: #{bert_classifier_forward.5} parent=11 // pred_fallthru
          _
        // Predicated region
        $region65: #{bert_classifier_forward.5} parent=11 // pred_check
          %p553 = pneg %p379
        $region66: #{bert_classifier_forward.5} parent=11 // pred_check_branch
          %555 = sbr.rel (%p553) target = $region68
        $region67: #{bert_classifier_forward.5} parent=11 // pred_region
          _
        $region68: #{bert_classifier_forward.5} parent=11 // pred_fallthru
          _
        // Predicated region
        $region69: #{bert_classifier_forward.5} parent=11 // pred_check
          %p556 = pneg %p400
        $region70: #{bert_classifier_forward.5} parent=11 // pred_check_branch
          %558 = sbr.rel (%p556) target = $region72
        $region71: #{bert_classifier_forward.5} parent=11 // pred_region
          _
        $region72: #{bert_classifier_forward.5} parent=11 // pred_fallthru
          _
        // Predicated region
        $region73: #{bert_classifier_forward.5} parent=11 // pred_check
          %p559 = pneg %p421
        $region74: #{bert_classifier_forward.5} parent=11 // pred_check_branch
          %561 = sbr.rel (%p559) target = $region76
        $region75: #{bert_classifier_forward.5} parent=11 // pred_region
          _
        $region76: #{bert_classifier_forward.5} parent=11 // pred_fallthru
          _
      $region12: #{bert_classifier_forward.5} parent=5 // pred_fallthru
        _
      %p562 = scmp.lt.s32.totalorder %s33, 2
      // Predicated region
      $region77: #{bert_classifier_forward.5} parent=5 // pred_check
        %p563 = pneg %p562
      $region78: #{bert_classifier_forward.5} parent=5 // pred_check_branch
        %565 = sbr.rel (%p563) target = $region80
      $region79: #{bert_classifier_forward.5} parent=5 // pred_region
        // Predicated region
        $region81: #{bert_classifier_forward.5} parent=79 // pred_check
          %p566 = pneg %p53
        $region82: #{bert_classifier_forward.5} parent=79 // pred_check_branch
          %568 = sbr.rel (%p566) target = $region84
        $region83: #{bert_classifier_forward.5} parent=79 // pred_region
          %p569 = scmp.lt.s32.totalorder %s33, 1
          %s570 = scalar_select %p569, %s33, 1
          %s571 = smul.addr %s570, 8
          %s572 = scalar_lea.vmem %s0, %s571
        $region84: #{bert_classifier_forward.5} parent=79 // pred_fallthru
          _
        // Predicated region
        $region85: #{bert_classifier_forward.5} parent=79 // pred_check
          %p573 = pneg %p79
        $region86: #{bert_classifier_forward.5} parent=79 // pred_check_branch
          %575 = sbr.rel (%p573) target = $region88
        $region87: #{bert_classifier_forward.5} parent=79 // pred_region
          %p576 = scmp.lt.s32.totalorder %s33, 1
          %s577 = scalar_select %p576, %s33, 1
          %s578 = scalar_lea.vmem %s1, %s577
        $region88: #{bert_classifier_forward.5} parent=79 // pred_fallthru
          _
      $region80: #{bert_classifier_forward.5} parent=5 // pred_fallthru
        _
      %p579 = scmp.le.s32.totalorder 1, %s33
      %p580 = scmp.lt.s32.totalorder %s33, 3
      %p581 = pnand %p579, %p580
      %p582 = pneg %p581
      // Predicated region
      $region89: #{bert_classifier_forward.5} parent=5 // pred_check
        _
      $region90: #{bert_classifier_forward.5} parent=5 // pred_check_branch
        %584 = sbr.rel (%p581) target = $region92
      $region91: #{bert_classifier_forward.5} parent=5 // pred_region
        %s585 = ssub.s32 %s33, 1
        %p586 = scmp.lt.s32.totalorder %s38, 1
        %s587 = scalar_select %p586, %s38, 1
        %s588 = smul.addr %s587, 8
        %s589 = scalar_lea.vmem %s0, %s588
        %p590 = pneg %p59
        %p591 = pneg %p56
        %p592 = scmp.lt.s32.totalorder %s38, 1
        %s593 = scalar_select %p592, %s38, 1
        %s594 = scalar_lea.vmem %s1, %s593
        %p595 = pneg %p85
        %p596 = pneg %p82
        %p597 = pneg %p106
        %p598 = pneg %p103
        %p599 = pneg %p127
        %p600 = pneg %p124
        %p601 = pneg %p148
        %p602 = pneg %p145
        %p603 = pneg %p169
        %p604 = pneg %p166
        %p605 = pneg %p190
        %p606 = pneg %p187
        %p607 = pneg %p211
        %p608 = pneg %p208
        %p609 = pneg %p232
        %p610 = pneg %p229
        %p611 = pneg %p253
        %p612 = pneg %p250
        %p613 = pneg %p274
        %p614 = pneg %p271
        %p615 = pneg %p295
        %p616 = pneg %p292
        %p617 = pneg %p316
        %p618 = pneg %p313
        %p619 = pneg %p337
        %p620 = pneg %p334
        %p621 = pneg %p358
        %p622 = pneg %p355
        %p623 = pneg %p379
        %p624 = pneg %p376
        %p625 = pneg %p400
        %p626 = pneg %p397
        %p627 = pneg %p421
        %p628 = pneg %p418
        %p629 = pneg %p447
        %p630 = pneg %p444
        %s631 = sand.u32 %s434, 1
        %s632 = scalar_lea.sflag [#allocation3], %s631
        %s633 = sand.u32 %s434, 1
        %s634 = smul.addr %s633, 8
        %s635 = scalar_lea.vmem [#allocation2], %s634
        %p636 = pneg %p473
        %p637 = pneg %p470
        %s638 = sand.u32 %s38, 1
        %s639 = scalar_lea.sflag [#allocation5], %s638
        %s640 = sand.u32 %s460, 1
        %s641 = smul.addr %s640, 32
        %s642 = scalar_lea.vmem [#allocation4], %s641
        %p643 = pneg %p499
        %p644 = pneg %p496
        %s645 = sand.u32 %s38, 1
        %s646 = scalar_lea.sflag [#allocation5], %s645
        %s647 = sand.u32 %s486, 1
        %s648 = scalar_lea.vmem [#allocation6], %s647
        %p649 = scmp.lt.s32.totalorder %s38, 1
        %s650 = scalar_select %p649, %s38, 1
        %s651 = smul.addr %s650, 8
        %s652 = scalar_lea.vmem %s0, %s651
        %p653 = scmp.lt.s32.totalorder %s38, 1
        %s654 = scalar_select %p653, %s38, 1
        %s655 = scalar_lea.vmem %s1, %s654
        %v657 = vld [vmem:[%s652] sm:$0xff]
        %v658 = vld [vmem:[%s655] sm:$0x1]
        %v659 = vpack.c.bf16 %v657, %v657
        %v660 = vld [vmem:[%s2] sm:$0xf]
        %v661 = vld [vmem:[%s2 + $0x4] sm:$0xf]
        %v662 = vld [vmem:[%s2 + $0x8] sm:$0xf]
        %v663 = vld [vmem:[%s2 + $0xc] sm:$0xf]
        %v664 = vld [vmem:[%s3] sm:$0x1]
        %v666 = vlaneseq
        %v667 = vshrl.u32 %v666, 7
        %v668 = vsub.s32 0, %v667
        %v669 = vrot.slane %v664, %v668
        %v675 = vunpack.c.l.b16 %v660
        %v676 = vunpack.c.l.b16 %v661
        %v677 = vunpack.c.l.b16 %v662
        %v678 = vunpack.c.l.b16 %v663
        %v679 = vpack.c.b16 %v676, %v675
        %v680 = vpack.c.b16 %v678, %v677
        %vm683 = vcmask 261120
        %v685 = vsel %vm683, %v659, 0
        %687 = vmatprep.subr.bf16.mxu0 0
        %688 = vmatpush1.bf16.msra.mxu0 %v679
        %689 = vmatprep.subr.bf16.mxu0 0
        %690 = vmatpush1.bf16.msra.mxu0 %v680
        %691 = vmatprep.subr.bf16.mxu0 0
        %692 = vmatpush1.bf16.msra.mxu0 0
        %693 = vmatprep.subr.bf16.mxu0 0
        %694 = vmatpush1.bf16.msra.mxu0 0
        %695 = vmatprep.subr.bf16.mxu0 0
        %696 = vmatpush1.bf16.msra.mxu0 0
        %697 = vmatprep.subr.bf16.mxu0 0
        %698 = vmatpush1.bf16.msra.mxu0 0
        %699 = vmatprep.subr.bf16.mxu0 0
        %700 = vmatpush1.bf16.msra.mxu0 0
        %701 = vmatprep.subr.bf16.mxu0 0
        %702 = vmatpush1.bf16.msra.mxu0 0
        %703 = vmatprep.subr.bf16.mxu0 0
        %704 = vmatpush1.bf16.msra.mxu0 0
        %705 = vmatprep.subr.bf16.mxu0 0
        %706 = vmatpush1.bf16.msra.mxu0 0
        %707 = vmatprep.subr.bf16.mxu0 0
        %708 = vmatpush1.bf16.msra.mxu0 0
        %709 = vmatprep.subr.bf16.mxu0 0
        %710 = vmatpush1.bf16.msra.mxu0 0
        %711 = vmatprep.subr.bf16.mxu0 0
        %712 = vmatpush1.bf16.msra.mxu0 0
        %713 = vmatprep.subr.bf16.mxu0 0
        %714 = vmatpush1.bf16.msra.mxu0 0
        %715 = vmatprep.subr.bf16.mxu0 0
        %716 = vmatpush1.bf16.msra.mxu0 0
        %717 = vmatprep.subr.bf16.mxu0 0
        %718 = vmatpush1.bf16.msra.mxu0 0
        %719 = vmatprep.mubr.bf16.mxu0 0
        %720 = vmatmul.mubr.bf16.gmra.mrb[0].mxu0 %v685
        %v721 = vpop.f32.mrb[0].mxu0
        %v722 = vadd.f32 %v669, %v721
        %v723 = vpop.f32.mrb[0].mxu0
        %v724 = vpop.f32.mrb[0].mxu0
        %v725 = vpop.f32.mrb[0].mxu0
        %726 = vdwg.mxu0
        %v727 = vpack.c.bf16 %v722, %v722
        %729 = vrot.lane.b32.xlu0 %v727, 96
        %v730 = vpop.permute.xlu0 %729
        %vm731 = vcmask 64512
        %v733 = vsel %vm731, %v727, 0
        %v736 = vsel %vm731, %v730, 0
        %738 = vmatprep.subr.bf16.mxu0 0
        %739 = vmatpush1.bf16.xpose.msra.mxu0 %v736
        %740 = vmatprep.subr.bf16.mxu0 0
        %741 = vmatpush1.bf16.xpose.msra.mxu0 0
        %742 = vmatprep.subr.bf16.mxu0 0
        %743 = vmatpush1.bf16.xpose.msra.mxu0 0
        %744 = vmatprep.subr.bf16.mxu0 0
        %745 = vmatpush1.bf16.xpose.msra.mxu0 0
        %746 = vmatprep.subr.bf16.mxu0 0
        %747 = vmatpush1.bf16.xpose.msra.mxu0 0
        %748 = vmatprep.subr.bf16.mxu0 0
        %749 = vmatpush1.bf16.xpose.msra.mxu0 0
        %750 = vmatprep.subr.bf16.mxu0 0
        %751 = vmatpush1.bf16.xpose.msra.mxu0 0
        %752 = vmatprep.subr.bf16.mxu0 0
        %753 = vmatpush1.bf16.xpose.msra.mxu0 0
        %754 = vmatprep.subr.bf16.mxu0 0
        %755 = vmatpush1.bf16.xpose.msra.mxu0 0
        %756 = vmatprep.subr.bf16.mxu0 0
        %757 = vmatpush1.bf16.xpose.msra.mxu0 0
        %758 = vmatprep.subr.bf16.mxu0 0
        %759 = vmatpush1.bf16.xpose.msra.mxu0 0
        %760 = vmatprep.subr.bf16.mxu0 0
        %761 = vmatpush1.bf16.xpose.msra.mxu0 0
        %762 = vmatprep.subr.bf16.mxu0 0
        %763 = vmatpush1.bf16.xpose.msra.mxu0 0
        %764 = vmatprep.subr.bf16.mxu0 0
        %765 = vmatpush1.bf16.xpose.msra.mxu0 0
        %766 = vmatprep.subr.bf16.mxu0 0
        %767 = vmatpush1.bf16.xpose.msra.mxu0 0
        %768 = vmatprep.subr.bf16.mxu0 0
        %769 = vmatpush1.bf16.xpose.msra.mxu0 0
        %770 = vmatprep.mubr.bf16.mxu0 0
        %771 = vmatmul.mubr.bf16.gmra.mrb[0].mxu0 %v733
        %v772 = vpop.f32.mrb[0].mxu0
        %v773 = vadd.f32 0.0, %v772
        %v774 = vpop.f32.mrb[0].mxu0
        %v775 = vpop.f32.mrb[0].mxu0
        %v776 = vpop.f32.mrb[0].mxu0
        %777 = vdwg.mxu0
        %v778 = vmul.f32 %v773, 0.35355338
        %v780 = vlaneseq
        %v781 = vshrl.u32 %v780, 7
        %v782 = vsub.s32 0, %v781
        %v783 = vrot.slane %v658, %v782
        %v785 = vadd.f32 %v778, %v783
        %v786 = vsel %vm731, %v785, -inf
        %787 = vmax.xlane.f32.xlu0 %v786
        %v788 = vpop.xlane.xlu0 %787
        %v789 = vsub.f32 %v785, %v788
        %v790 = vmul.f32 %v789, 1.442695
        %v791 = vpow.pop %v790
        %v792 = vsel %vm731, %v791, 0.0
        %793 = vadd.xlane.f32.xlu0 %v792
        %v794 = vpop.xlane.xlu0 %793
        %v795 = vrcp.pop %v794
        %v796 = vmul.f32 %v791, %v795
        %797 = vst.msk [vmem:[%s642] sm:$0xff] %vm731, %v796
        %v798 = vpack.c.bf16 %v796, %v796
        %799 = vrot.lane.b32.xlu0 %v727, 64
        %v800 = vpop.permute.xlu0 %799
        %v802 = vsel %vm731, %v798, 0
        %vm804 = vcmask 1043456
        %v806 = vsel %vm804, %v800, 0
        %808 = vmatprep.subr.bf16.mxu0 0
        %809 = vmatpush1.bf16.msra.mxu0 %v806
        %810 = vmatprep.subr.bf16.mxu0 0
        %811 = vmatpush1.bf16.msra.mxu0 0
        %812 = vmatprep.subr.bf16.mxu0 0
        %813 = vmatpush1.bf16.msra.mxu0 0
        %814 = vmatprep.subr.bf16.mxu0 0
        %815 = vmatpush1.bf16.msra.mxu0 0
        %816 = vmatprep.subr.bf16.mxu0 0
        %817 = vmatpush1.bf16.msra.mxu0 0
        %818 = vmatprep.subr.bf16.mxu0 0
        %819 = vmatpush1.bf16.msra.mxu0 0
        %820 = vmatprep.subr.bf16.mxu0 0
        %821 = vmatpush1.bf16.msra.mxu0 0
        %822 = vmatprep.subr.bf16.mxu0 0
        %823 = vmatpush1.bf16.msra.mxu0 0
        %824 = vmatprep.subr.bf16.mxu0 0
        %825 = vmatpush1.bf16.msra.mxu0 0
        %826 = vmatprep.subr.bf16.mxu0 0
        %827 = vmatpush1.bf16.msra.mxu0 0
        %828 = vmatprep.subr.bf16.mxu0 0
        %829 = vmatpush1.bf16.msra.mxu0 0
        %830 = vmatprep.subr.bf16.mxu0 0
        %831 = vmatpush1.bf16.msra.mxu0 0
        %832 = vmatprep.subr.bf16.mxu0 0
        %833 = vmatpush1.bf16.msra.mxu0 0
        %834 = vmatprep.subr.bf16.mxu0 0
        %835 = vmatpush1.bf16.msra.mxu0 0
        %836 = vmatprep.subr.bf16.mxu0 0
        %837 = vmatpush1.bf16.msra.mxu0 0
        %838 = vmatprep.subr.bf16.mxu0 0
        %839 = vmatpush1.bf16.msra.mxu0 0
        %840 = vmatprep.mubr.bf16.mxu0 0
        %841 = vmatmul.mubr.bf16.gmra.mrb[0].mxu0 %v802
        %v842 = vpop.f32.mrb[0].mxu0
        %v843 = vadd.f32 0.0, %v842
        %v844 = vpop.f32.mrb[0].mxu0
        %v845 = vpop.f32.mrb[0].mxu0
        %v846 = vpop.f32.mrb[0].mxu0
        %847 = vdwg.mxu0
        %848 = vrot.lane.b32.xlu0 %v727, 120
        %v849 = vpop.permute.xlu0 %848
        %850 = vrot.lane.b32.xlu0 %v727, 88
        %v851 = vpop.permute.xlu0 %850
        %v853 = vsel %vm731, %v849, 0
        %v856 = vsel %vm731, %v851, 0
        %858 = vmatprep.subr.bf16.mxu0 0
        %859 = vmatpush1.bf16.xpose.msra.mxu0 %v856
        %860 = vmatprep.subr.bf16.mxu0 0
        %861 = vmatpush1.bf16.xpose.msra.mxu0 0
        %862 = vmatprep.subr.bf16.mxu0 0
        %863 = vmatpush1.bf16.xpose.msra.mxu0 0
        %864 = vmatprep.subr.bf16.mxu0 0
        %865 = vmatpush1.bf16.xpose.msra.mxu0 0
        %866 = vmatprep.subr.bf16.mxu0 0
        %867 = vmatpush1.bf16.xpose.msra.mxu0 0
        %868 = vmatprep.subr.bf16.mxu0 0
        %869 = vmatpush1.bf16.xpose.msra.mxu0 0
        %870 = vmatprep.subr.bf16.mxu0 0
        %871 = vmatpush1.bf16.xpose.msra.mxu0 0
        %872 = vmatprep.subr.bf16.mxu0 0
        %873 = vmatpush1.bf16.xpose.msra.mxu0 0
        %874 = vmatprep.subr.bf16.mxu0 0
        %875 = vmatpush1.bf16.xpose.msra.mxu0 0
        %876 = vmatprep.subr.bf16.mxu0 0
        %877 = vmatpush1.bf16.xpose.msra.mxu0 0
        %878 = vmatprep.subr.bf16.mxu0 0
        %879 = vmatpush1.bf16.xpose.msra.mxu0 0
        %880 = vmatprep.subr.bf16.mxu0 0
        %881 = vmatpush1.bf16.xpose.msra.mxu0 0
        %882 = vmatprep.subr.bf16.mxu0 0
        %883 = vmatpush1.bf16.xpose.msra.mxu0 0
        %884 = vmatprep.subr.bf16.mxu0 0
        %885 = vmatpush1.bf16.xpose.msra.mxu0 0
        %886 = vmatprep.subr.bf16.mxu0 0
        %887 = vmatpush1.bf16.xpose.msra.mxu0 0
        %888 = vmatprep.subr.bf16.mxu0 0
        %889 = vmatpush1.bf16.xpose.msra.mxu0 0
        %890 = vmatprep.mubr.bf16.mxu0 0
        %891 = vmatmul.mubr.bf16.gmra.mrb[0].mxu0 %v853
        %v892 = vpop.f32.mrb[0].mxu0
        %v893 = vadd.f32 0.0, %v892
        %v894 = vpop.f32.mrb[0].mxu0
        %v895 = vpop.f32.mrb[0].mxu0
        %v896 = vpop.f32.mrb[0].mxu0
        %897 = vdwg.mxu0
        %v898 = vmul.f32 %v893, 0.35355338
        %v899 = vadd.f32 %v898, %v783
        %v900 = vsel %vm731, %v899, -inf
        %901 = vmax.xlane.f32.xlu0 %v900
        %v902 = vpop.xlane.xlu0 %901
        %v903 = vsub.f32 %v899, %v902
        %v904 = vmul.f32 %v903, 1.442695
        %v905 = vpow.pop %v904
        %v906 = vsel %vm731, %v905, 0.0
        %907 = vadd.xlane.f32.xlu0 %v906
        %v908 = vpop.xlane.xlu0 %907
        %v909 = vrcp.pop %v908
        %v910 = vmul.f32 %v905, %v909
        %s911 = scalar_lea.vmem %s642, 8 [#allocation4]
        %912 = vst.msk [vmem:[%s911] sm:$0xff] %vm731, %v910
        %v913 = vpack.c.bf16 %v910, %v910
        %914 = vrot.lane.b32.xlu0 %v727, 56
        %v915 = vpop.permute.xlu0 %914
        %v917 = vsel %vm731, %v913, 0
        %v920 = vsel %vm804, %v915, 0
        %922 = vmatprep.subr.bf16.mxu0 0
        %923 = vmatpush1.bf16.msra.mxu0 %v920
        %924 = vmatprep.subr.bf16.mxu0 0
        %925 = vmatpush1.bf16.msra.mxu0 0
        %926 = vmatprep.subr.bf16.mxu0 0
        %927 = vmatpush1.bf16.msra.mxu0 0
        %928 = vmatprep.subr.bf16.mxu0 0
        %929 = vmatpush1.bf16.msra.mxu0 0
        %930 = vmatprep.subr.bf16.mxu0 0
        %931 = vmatpush1.bf16.msra.mxu0 0
        %932 = vmatprep.subr.bf16.mxu0 0
        %933 = vmatpush1.bf16.msra.mxu0 0
        %934 = vmatprep.subr.bf16.mxu0 0
        %935 = vmatpush1.bf16.msra.mxu0 0
        %936 = vmatprep.subr.bf16.mxu0 0
        %937 = vmatpush1.bf16.msra.mxu0 0
        %938 = vmatprep.subr.bf16.mxu0 0
        %939 = vmatpush1.bf16.msra.mxu0 0
        %940 = vmatprep.subr.bf16.mxu0 0
        %941 = vmatpush1.bf16.msra.mxu0 0
        %942 = vmatprep.subr.bf16.mxu0 0
        %943 = vmatpush1.bf16.msra.mxu0 0
        %944 = vmatprep.subr.bf16.mxu0 0
        %945 = vmatpush1.bf16.msra.mxu0 0
        %946 = vmatprep.subr.bf16.mxu0 0
        %947 = vmatpush1.bf16.msra.mxu0 0
        %948 = vmatprep.subr.bf16.mxu0 0
        %949 = vmatpush1.bf16.msra.mxu0 0
        %950 = vmatprep.subr.bf16.mxu0 0
        %951 = vmatpush1.bf16.msra.mxu0 0
        %952 = vmatprep.subr.bf16.mxu0 0
        %953 = vmatpush1.bf16.msra.mxu0 0
        %954 = vmatprep.mubr.bf16.mxu0 0
        %955 = vmatmul.mubr.bf16.gmra.mrb[0].mxu0 %v917
        %v956 = vpop.f32.mrb[0].mxu0
        %v957 = vadd.f32 0.0, %v956
        %v958 = vpop.f32.mrb[0].mxu0
        %v959 = vpop.f32.mrb[0].mxu0
        %v960 = vpop.f32.mrb[0].mxu0
        %961 = vdwg.mxu0
        %962 = vrot.lane.b32.xlu0 %v727, 112
        %v963 = vpop.permute.xlu0 %962
        %964 = vrot.lane.b32.xlu0 %v727, 80
        %v965 = vpop.permute.xlu0 %964
        %v967 = vsel %vm731, %v963, 0
        %v970 = vsel %vm731, %v965, 0
        %972 = vmatprep.subr.bf16.mxu0 0
        %973 = vmatpush1.bf16.xpose.msra.mxu0 %v970
        %974 = vmatprep.subr.bf16.mxu0 0
        %975 = vmatpush1.bf16.xpose.msra.mxu0 0
        %976 = vmatprep.subr.bf16.mxu0 0
        %977 = vmatpush1.bf16.xpose.msra.mxu0 0
        %978 = vmatprep.subr.bf16.mxu0 0
        %979 = vmatpush1.bf16.xpose.msra.mxu0 0
        %980 = vmatprep.subr.bf16.mxu0 0
        %981 = vmatpush1.bf16.xpose.msra.mxu0 0
        %982 = vmatprep.subr.bf16.mxu0 0
        %983 = vmatpush1.bf16.xpose.msra.mxu0 0
        %984 = vmatprep.subr.bf16.mxu0 0
        %985 = vmatpush1.bf16.xpose.msra.mxu0 0
        %986 = vmatprep.subr.bf16.mxu0 0
        %987 = vmatpush1.bf16.xpose.msra.mxu0 0
        %988 = vmatprep.subr.bf16.mxu0 0
        %989 = vmatpush1.bf16.xpose.msra.mxu0 0
        %990 = vmatprep.subr.bf16.mxu0 0
        %991 = vmatpush1.bf16.xpose.msra.mxu0 0
        %992 = vmatprep.subr.bf16.mxu0 0
        %993 = vmatpush1.bf16.xpose.msra.mxu0 0
        %994 = vmatprep.subr.bf16.mxu0 0
        %995 = vmatpush1.bf16.xpose.msra.mxu0 0
        %996 = vmatprep.subr.bf16.mxu0 0
        %997 = vmatpush1.bf16.xpose.msra.mxu0 0
        %998 = vmatprep.subr.bf16.mxu0 0
        %999 = vmatpush1.bf16.xpose.msra.mxu0 0
        %1000 = vmatprep.subr.bf16.mxu0 0
        %1001 = vmatpush1.bf16.xpose.msra.mxu0 0
        %1002 = vmatprep.subr.bf16.mxu0 0
        %1003 = vmatpush1.bf16.xpose.msra.mxu0 0
        %1004 = vmatprep.mubr.bf16.mxu0 0
        %1005 = vmatmul.mubr.bf16.gmra.mrb[0].mxu0 %v967
        %v1006 = vpop.f32.mrb[0].mxu0
        %v1007 = vadd.f32 0.0, %v1006
        %v1008 = vpop.f32.mrb[0].mxu0
        %v1009 = vpop.f32.mrb[0].mxu0
        %v1010 = vpop.f32.mrb[0].mxu0
        %1011 = vdwg.mxu0
        %v1012 = vmul.f32 %v1007, 0.35355338
        %v1013 = vadd.f32 %v1012, %v783
        %v1014 = vsel %vm731, %v1013, -inf
        %1015 = vmax.xlane.f32.xlu0 %v1014
        %v1016 = vpop.xlane.xlu0 %1015
        %v1017 = vsub.f32 %v1013, %v1016
        %v1018 = vmul.f32 %v1017, 1.442695
        %v1019 = vpow.pop %v1018
        %v1020 = vsel %vm731, %v1019, 0.0
        %1021 = vadd.xlane.f32.xlu0 %v1020
        %v1022 = vpop.xlane.xlu0 %1021
        %v1023 = vrcp.pop %v1022
        %v1024 = vmul.f32 %v1019, %v1023
        %s1025 = scalar_lea.vmem %s642, 16 [#allocation4]
        %1026 = vst.msk [vmem:[%s1025] sm:$0xff] %vm731, %v1024
        %v1027 = vpack.c.bf16 %v1024, %v1024
        %1028 = vrot.lane.b32.xlu0 %v727, 48
        %v1029 = vpop.permute.xlu0 %1028
        %v1031 = vsel %vm731, %v1027, 0
        %v1034 = vsel %vm804, %v1029, 0
        %1036 = vmatprep.subr.bf16.mxu0 0
        %1037 = vmatpush1.bf16.msra.mxu0 %v1034
        %1038 = vmatprep.subr.bf16.mxu0 0
        %1039 = vmatpush1.bf16.msra.mxu0 0
        %1040 = vmatprep.subr.bf16.mxu0 0
        %1041 = vmatpush1.bf16.msra.mxu0 0
        %1042 = vmatprep.subr.bf16.mxu0 0
        %1043 = vmatpush1.bf16.msra.mxu0 0
        %1044 = vmatprep.subr.bf16.mxu0 0
        %1045 = vmatpush1.bf16.msra.mxu0 0
        %1046 = vmatprep.subr.bf16.mxu0 0
        %1047 = vmatpush1.bf16.msra.mxu0 0
        %1048 = vmatprep.subr.bf16.mxu0 0
        %1049 = vmatpush1.bf16.msra.mxu0 0
        %1050 = vmatprep.subr.bf16.mxu0 0
        %1051 = vmatpush1.bf16.msra.mxu0 0
        %1052 = vmatprep.subr.bf16.mxu0 0
        %1053 = vmatpush1.bf16.msra.mxu0 0
        %1054 = vmatprep.subr.bf16.mxu0 0
        %1055 = vmatpush1.bf16.msra.mxu0 0
        %1056 = vmatprep.subr.bf16.mxu0 0
        %1057 = vmatpush1.bf16.msra.mxu0 0
        %1058 = vmatprep.subr.bf16.mxu0 0
        %1059 = vmatpush1.bf16.msra.mxu0 0
        %1060 = vmatprep.subr.bf16.mxu0 0
        %1061 = vmatpush1.bf16.msra.mxu0 0
        %1062 = vmatprep.subr.bf16.mxu0 0
        %1063 = vmatpush1.bf16.msra.mxu0 0
        %1064 = vmatprep.subr.bf16.mxu0 0
        %1065 = vmatpush1.bf16.msra.mxu0 0
        %1066 = vmatprep.subr.bf16.mxu0 0
        %1067 = vmatpush1.bf16.msra.mxu0 0
        %1068 = vmatprep.mubr.bf16.mxu0 0
        %1069 = vmatmul.mubr.bf16.gmra.mrb[0].mxu0 %v1031
        %v1070 = vpop.f32.mrb[0].mxu0
        %v1071 = vadd.f32 0.0, %v1070
        %v1072 = vpop.f32.mrb[0].mxu0
        %v1073 = vpop.f32.mrb[0].mxu0
        %v1074 = vpop.f32.mrb[0].mxu0
        %1075 = vdwg.mxu0
        %1076 = vrot.lane.b32.xlu0 %v727, 104
        %v1077 = vpop.permute.xlu0 %1076
        %1078 = vrot.lane.b32.xlu0 %v727, 72
        %v1079 = vpop.permute.xlu0 %1078
        %v1081 = vsel %vm731, %v1077, 0
        %v1084 = vsel %vm731, %v1079, 0
        %1086 = vmatprep.subr.bf16.mxu0 0
        %1087 = vmatpush1.bf16.xpose.msra.mxu0 %v1084
        %1088 = vmatprep.subr.bf16.mxu0 0
        %1089 = vmatpush1.bf16.xpose.msra.mxu0 0
        %1090 = vmatprep.subr.bf16.mxu0 0
        %1091 = vmatpush1.bf16.xpose.msra.mxu0 0
        %1092 = vmatprep.subr.bf16.mxu0 0
        %1093 = vmatpush1.bf16.xpose.msra.mxu0 0
        %1094 = vmatprep.subr.bf16.mxu0 0
        %1095 = vmatpush1.bf16.xpose.msra.mxu0 0
        %1096 = vmatprep.subr.bf16.mxu0 0
        %1097 = vmatpush1.bf16.xpose.msra.mxu0 0
        %1098 = vmatprep.subr.bf16.mxu0 0
        %1099 = vmatpush1.bf16.xpose.msra.mxu0 0
        %1100 = vmatprep.subr.bf16.mxu0 0
        %1101 = vmatpush1.bf16.xpose.msra.mxu0 0
        %1102 = vmatprep.subr.bf16.mxu0 0
        %1103 = vmatpush1.bf16.xpose.msra.mxu0 0
        %1104 = vmatprep.subr.bf16.mxu0 0
        %1105 = vmatpush1.bf16.xpose.msra.mxu0 0
        %1106 = vmatprep.subr.bf16.mxu0 0
        %1107 = vmatpush1.bf16.xpose.msra.mxu0 0
        %1108 = vmatprep.subr.bf16.mxu0 0
        %1109 = vmatpush1.bf16.xpose.msra.mxu0 0
        %1110 = vmatprep.subr.bf16.mxu0 0
        %1111 = vmatpush1.bf16.xpose.msra.mxu0 0
        %1112 = vmatprep.subr.bf16.mxu0 0
        %1113 = vmatpush1.bf16.xpose.msra.mxu0 0
        %1114 = vmatprep.subr.bf16.mxu0 0
        %1115 = vmatpush1.bf16.xpose.msra.mxu0 0
        %1116 = vmatprep.subr.bf16.mxu0 0
        %1117 = vmatpush1.bf16.xpose.msra.mxu0 0
        %1118 = vmatprep.mubr.bf16.mxu0 0
        %1119 = vmatmul.mubr.bf16.gmra.mrb[0].mxu0 %v1081
        %v1120 = vpop.f32.mrb[0].mxu0
        %v1121 = vadd.f32 0.0, %v1120
        %v1122 = vpop.f32.mrb[0].mxu0
        %v1123 = vpop.f32.mrb[0].mxu0
        %v1124 = vpop.f32.mrb[0].mxu0
        %1125 = vdwg.mxu0
        %v1126 = vmul.f32 %v1121, 0.35355338
        %v1127 = vadd.f32 %v1126, %v783
        %v1128 = vsel %vm731, %v1127, -inf
        %1129 = vmax.xlane.f32.xlu0 %v1128
        %v1130 = vpop.xlane.xlu0 %1129
        %v1131 = vsub.f32 %v1127, %v1130
        %v1132 = vmul.f32 %v1131, 1.442695
        %v1133 = vpow.pop %v1132
        %v1134 = vsel %vm731, %v1133, 0.0
        %1135 = vadd.xlane.f32.xlu0 %v1134
        %v1136 = vpop.xlane.xlu0 %1135
        %v1137 = vrcp.pop %v1136
        %v1138 = vmul.f32 %v1133, %v1137
        %s1139 = scalar_lea.vmem %s642, 24 [#allocation4]
        %1140 = vst.msk [vmem:[%s1139] sm:$0xff] %vm731, %v1138
        %v1141 = vpack.c.bf16 %v1138, %v1138
        %1142 = vrot.lane.b32.xlu0 %v727, 40
        %v1143 = vpop.permute.xlu0 %1142
        %v1145 = vsel %vm731, %v1141, 0
        %v1148 = vsel %vm804, %v1143, 0
        %1150 = vmatprep.subr.bf16.mxu0 0
        %1151 = vmatpush1.bf16.msra.mxu0 %v1148
        %1152 = vmatprep.subr.bf16.mxu0 0
        %1153 = vmatpush1.bf16.msra.mxu0 0
        %1154 = vmatprep.subr.bf16.mxu0 0
        %1155 = vmatpush1.bf16.msra.mxu0 0
        %1156 = vmatprep.subr.bf16.mxu0 0
        %1157 = vmatpush1.bf16.msra.mxu0 0
        %1158 = vmatprep.subr.bf16.mxu0 0
        %1159 = vmatpush1.bf16.msra.mxu0 0
        %1160 = vmatprep.subr.bf16.mxu0 0
        %1161 = vmatpush1.bf16.msra.mxu0 0
        %1162 = vmatprep.subr.bf16.mxu0 0
        %1163 = vmatpush1.bf16.msra.mxu0 0
        %1164 = vmatprep.subr.bf16.mxu0 0
        %1165 = vmatpush1.bf16.msra.mxu0 0
        %1166 = vmatprep.subr.bf16.mxu0 0
        %1167 = vmatpush1.bf16.msra.mxu0 0
        %1168 = vmatprep.subr.bf16.mxu0 0
        %1169 = vmatpush1.bf16.msra.mxu0 0
        %1170 = vmatprep.subr.bf16.mxu0 0
        %1171 = vmatpush1.bf16.msra.mxu0 0
        %1172 = vmatprep.subr.bf16.mxu0 0
        %1173 = vmatpush1.bf16.msra.mxu0 0
        %1174 = vmatprep.subr.bf16.mxu0 0
        %1175 = vmatpush1.bf16.msra.mxu0 0
        %1176 = vmatprep.subr.bf16.mxu0 0
        %1177 = vmatpush1.bf16.msra.mxu0 0
        %1178 = vmatprep.subr.bf16.mxu0 0
        %1179 = vmatpush1.bf16.msra.mxu0 0
        %1180 = vmatprep.subr.bf16.mxu0 0
        %1181 = vmatpush1.bf16.msra.mxu0 0
        %1182 = vmatprep.mubr.bf16.mxu0 0
        %1183 = vmatmul.mubr.bf16.gmra.mrb[0].mxu0 %v1145
        %v1184 = vpop.f32.mrb[0].mxu0
        %v1185 = vadd.f32 0.0, %v1184
        %v1186 = vpop.f32.mrb[0].mxu0
        %v1187 = vpop.f32.mrb[0].mxu0
        %v1188 = vpop.f32.mrb[0].mxu0
        %1189 = vdwg.mxu0
        %1191 = vrot.lane.b32.xlu0 %v957, 8
        %v1192 = vpop.permute.xlu0 %1191
        %1195 = vrot.lane.b32.xlu0 %v1071, 16
        %v1196 = vpop.permute.xlu0 %1195
        %1199 = vrot.lane.b32.xlu0 %v1185, 24
        %v1200 = vpop.permute.xlu0 %1199
        %v1202 = vsel %vm731, %v843, %v1192
        %vm1203 = vcmask 130048
        %v1204 = vsel %vm1203, %v1202, %v1196
        %vm1205 = vcmask 195584
        %v1206 = vsel %vm1205, %v1204, %v1200
        %v1207 = vpack.c.bf16 %v1206, %v1206
        %v1208 = vld [vmem:[%s4] sm:$0xf]
        %v1209 = vld [vmem:[%s4 + $0x4] sm:$0xf]
        %v1210 = vld [vmem:[%s4 + $0x8] sm:$0xf]
        %v1211 = vld [vmem:[%s4 + $0xc] sm:$0xf]
        %v1212 = vld [vmem:[%s5] sm:$0x1]
        %v1214 = vlaneseq
        %v1215 = vshrl.u32 %v1214, 7
        %v1216 = vsub.s32 0, %v1215
        %v1217 = vrot.slane %v1212, %v1216
        %v1223 = vunpack.c.l.b16 %v1208
        %v1224 = vunpack.c.l.b16 %v1209
        %v1225 = vunpack.c.l.b16 %v1210
        %v1226 = vunpack.c.l.b16 %v1211
        %v1227 = vpack.c.b16 %v1224, %v1223
        %v1228 = vpack.c.b16 %v1226, %v1225
        %v1232 = vsel %vm683, %v1207, 0
        %1234 = vmatprep.subr.bf16.mxu0 0
        %1235 = vmatpush1.bf16.msra.mxu0 %v1227
        %1236 = vmatprep.subr.bf16.mxu0 0
        %1237 = vmatpush1.bf16.msra.mxu0 %v1228
        %1238 = vmatprep.subr.bf16.mxu0 0
        %1239 = vmatpush1.bf16.msra.mxu0 0
        %1240 = vmatprep.subr.bf16.mxu0 0
        %1241 = vmatpush1.bf16.msra.mxu0 0
        %1242 = vmatprep.subr.bf16.mxu0 0
        %1243 = vmatpush1.bf16.msra.mxu0 0
        %1244 = vmatprep.subr.bf16.mxu0 0
        %1245 = vmatpush1.bf16.msra.mxu0 0
        %1246 = vmatprep.subr.bf16.mxu0 0
        %1247 = vmatpush1.bf16.msra.mxu0 0
        %1248 = vmatprep.subr.bf16.mxu0 0
        %1249 = vmatpush1.bf16.msra.mxu0 0
        %1250 = vmatprep.subr.bf16.mxu0 0
        %1251 = vmatpush1.bf16.msra.mxu0 0
        %1252 = vmatprep.subr.bf16.mxu0 0
        %1253 = vmatpush1.bf16.msra.mxu0 0
        %1254 = vmatprep.subr.bf16.mxu0 0
        %1255 = vmatpush1.bf16.msra.mxu0 0
        %1256 = vmatprep.subr.bf16.mxu0 0
        %1257 = vmatpush1.bf16.msra.mxu0 0
        %1258 = vmatprep.subr.bf16.mxu0 0
        %1259 = vmatpush1.bf16.msra.mxu0 0
        %1260 = vmatprep.subr.bf16.mxu0 0
        %1261 = vmatpush1.bf16.msra.mxu0 0
        %1262 = vmatprep.subr.bf16.mxu0 0
        %1263 = vmatpush1.bf16.msra.mxu0 0
        %1264 = vmatprep.subr.bf16.mxu0 0
        %1265 = vmatpush1.bf16.msra.mxu0 0
        %1266 = vmatprep.mubr.bf16.mxu0 0
        %1267 = vmatmul.mubr.bf16.gmra.mrb[0].mxu0 %v1232
        %v1268 = vpop.f32.mrb[0].mxu0
        %v1269 = vadd.f32 %v1217, %v1268
        %v1270 = vpop.f32.mrb[0].mxu0
        %v1271 = vpop.f32.mrb[0].mxu0
        %v1272 = vpop.f32.mrb[0].mxu0
        %1273 = vdwg.mxu0
        %v1274 = vadd.f32 %v1269, %v657
        %v1275 = vld [vmem:[%s6] sm:$0x1]
        %v1276 = vld [vmem:[%s7] sm:$0x1]
        %v1277 = vsel %vm683, %v1274, 0.0
        %1278 = vadd.xlane.f32.xlu0 %v1277
        %v1279 = vpop.xlane.xlu0 %1278
        %v1280 = vrcp.pop 32.0
        %v1281 = vmul.f32 %v1279, %v1280
        %v1282 = vsub.f32 %v1274, %v1281
        %v1283 = vmul.f32 %v1282, %v1282
        %v1284 = vsel %vm683, %v1283, 0.0
        %1285 = vadd.xlane.f32.xlu0 %v1284
        %v1286 = vpop.xlane.xlu0 %1285
        %v1287 = vmul.f32 %v1286, %v1280
        %v1288 = vadd.f32 %v1287, 1e-12
        %v1289 = vrsqrt.pop %v1288
        %v1290 = vmul.f32 %v1282, %v1289
        %v1292 = vlaneseq
        %v1293 = vshrl.u32 %v1292, 7
        %v1294 = vsub.s32 0, %v1293
        %v1295 = vrot.slane %v1275, %v1294
        %v1297 = vmul.f32 %v1290, %v1295
        %v1299 = vlaneseq
        %v1300 = vshrl.u32 %v1299, 7
        %v1301 = vsub.s32 0, %v1300
        %v1302 = vrot.slane %v1276, %v1301
        %v1304 = vadd.f32 %v1297, %v1302
        %v1305 = vpack.c.bf16 %v1304, %v1304
        %v1306 = vld [vmem:[%s8] sm:$0xf]
        %v1307 = vld [vmem:[%s8 + $0x4] sm:$0xf]
        %v1308 = vld [vmem:[%s8 + $0x8] sm:$0xf]
        %v1309 = vld [vmem:[%s8 + $0xc] sm:$0xf]
        %v1310 = vld [vmem:[%s9] sm:$0x1]
        %v1312 = vlaneseq
        %v1313 = vshrl.u32 %v1312, 7
        %v1314 = vsub.s32 0, %v1313
        %v1315 = vrot.slane %v1310, %v1314
        %v1321 = vunpack.c.l.b16 %v1306
        %v1322 = vunpack.c.l.b16 %v1307
        %v1323 = vunpack.c.l.b16 %v1308
        %v1324 = vunpack.c.l.b16 %v1309
        %v1325 = vpack.c.b16 %v1322, %v1321
        %v1326 = vpack.c.b16 %v1324, %v1323
        %v1330 = vsel %vm683, %v1305, 0
        %1332 = vmatprep.subr.bf16.mxu0 0
        %1333 = vmatpush1.bf16.msra.mxu0 %v1325
        %1334 = vmatprep.subr.bf16.mxu0 0
        %1335 = vmatpush1.bf16.msra.mxu0 %v1326
        %1336 = vmatprep.subr.bf16.mxu0 0
        %1337 = vmatpush1.bf16.msra.mxu0 0
        %1338 = vmatprep.subr.bf16.mxu0 0
        %1339 = vmatpush1.bf16.msra.mxu0 0
        %1340 = vmatprep.subr.bf16.mxu0 0
        %1341 = vmatpush1.bf16.msra.mxu0 0
        %1342 = vmatprep.subr.bf16.mxu0 0
        %1343 = vmatpush1.bf16.msra.mxu0 0
        %1344 = vmatprep.subr.bf16.mxu0 0
        %1345 = vmatpush1.bf16.msra.mxu0 0
        %1346 = vmatprep.subr.bf16.mxu0 0
        %1347 = vmatpush1.bf16.msra.mxu0 0
        %1348 = vmatprep.subr.bf16.mxu0 0
        %1349 = vmatpush1.bf16.msra.mxu0 0
        %1350 = vmatprep.subr.bf16.mxu0 0
        %1351 = vmatpush1.bf16.msra.mxu0 0
        %1352 = vmatprep.subr.bf16.mxu0 0
        %1353 = vmatpush1.bf16.msra.mxu0 0
        %1354 = vmatprep.subr.bf16.mxu0 0
        %1355 = vmatpush1.bf16.msra.mxu0 0
        %1356 = vmatprep.subr.bf16.mxu0 0
        %1357 = vmatpush1.bf16.msra.mxu0 0
        %1358 = vmatprep.subr.bf16.mxu0 0
        %1359 = vmatpush1.bf16.msra.mxu0 0
        %1360 = vmatprep.subr.bf16.mxu0 0
        %1361 = vmatpush1.bf16.msra.mxu0 0
        %1362 = vmatprep.subr.bf16.mxu0 0
        %1363 = vmatpush1.bf16.msra.mxu0 0
        %1364 = vmatprep.mubr.bf16.mxu0 0
        %1365 = vmatmul.mubr.bf16.gmra.mrb[0].mxu0 %v1330
        %v1366 = vpop.f32.mrb[0].mxu0
        %v1367 = vadd.f32 %v1315, %v1366
        %v1368 = vpop.f32.mrb[0].mxu0
        %v1369 = vpop.f32.mrb[0].mxu0
        %v1370 = vpop.f32.mrb[0].mxu0
        %1371 = vdwg.mxu0
        %v1372 = vmul.f32 %v1367, 0.5
        %v1373 = vmul.f32 %v1367, 0.044715
        %v1374 = vmul.f32 %v1373, %v1367
        %v1375 = vmul.f32 %v1374, %v1367
        %v1376 = vadd.f32 %v1367, %v1375
        %v1377 = vmul.f32 %v1376, 0.7978846
        %v1378 = vtanh.pop %v1377
        %v1379 = vadd.f32 %v1378, 1.0
        %v1380 = vmul.f32 %v1372, %v1379
        %v1381 = vpack.c.bf16 %v1380, %v1380
        %v1382 = vld [vmem:[%s10] sm:$0xf]
        %v1383 = vld [vmem:[%s10 + $0x4] sm:$0xf]
        %v1384 = vld [vmem:[%s10 + $0x8] sm:$0xf]
        %v1385 = vld [vmem:[%s10 + $0xc] sm:$0xf]
        %v1386 = vld [vmem:[%s10 + $0x10] sm:$0xf]
        %v1387 = vld [vmem:[%s10 + $0x14] sm:$0xf]
        %v1388 = vld [vmem:[%s10 + $0x18] sm:$0xf]
        %v1389 = vld [vmem:[%s10 + $0x1c] sm:$0xf]
        %v1390 = vld [vmem:[%s11] sm:$0x1]
        %v1392 = vlaneseq
        %v1393 = vshrl.u32 %v1392, 7
        %v1394 = vsub.s32 0, %v1393
        %v1395 = vrot.slane %v1390, %v1394
        %v1405 = vunpack.c.l.b16 %v1382
        %v1406 = vunpack.c.l.b16 %v1383
        %v1407 = vunpack.c.l.b16 %v1384
        %v1408 = vunpack.c.l.b16 %v1385
        %v1409 = vunpack.c.l.b16 %v1386
        %v1410 = vunpack.c.l.b16 %v1387
        %v1411 = vunpack.c.l.b16 %v1388
        %v1412 = vunpack.c.l.b16 %v1389
        %v1413 = vpack.c.b16 %v1406, %v1405
        %v1414 = vpack.c.b16 %v1408, %v1407
        %v1415 = vpack.c.b16 %v1410, %v1409
        %v1416 = vpack.c.b16 %v1412, %v1411
        %vm1421 = vcmask 523264
        %v1423 = vsel %vm1421, %v1381, 0
        %1425 = vmatprep.subr.bf16.mxu0 0
        %1426 = vmatpush1.bf16.msra.mxu0 %v1413
        %1427 = vmatprep.subr.bf16.mxu0 0
        %1428 = vmatpush1.bf16.msra.mxu0 %v1414
        %1429 = vmatprep.subr.bf16.mxu0 0
        %1430 = vmatpush1.bf16.msra.mxu0 %v1415
        %1431 = vmatprep.subr.bf16.mxu0 0
        %1432 = vmatpush1.bf16.msra.mxu0 %v1416
        %1433 = vmatprep.subr.bf16.mxu0 0
        %1434 = vmatpush1.bf16.msra.mxu0 0
        %1435 = vmatprep.subr.bf16.mxu0 0
        %1436 = vmatpush1.bf16.msra.mxu0 0
        %1437 = vmatprep.subr.bf16.mxu0 0
        %1438 = vmatpush1.bf16.msra.mxu0 0
        %1439 = vmatprep.subr.bf16.mxu0 0
        %1440 = vmatpush1.bf16.msra.mxu0 0
        %1441 = vmatprep.subr.bf16.mxu0 0
        %1442 = vmatpush1.bf16.msra.mxu0 0
        %1443 = vmatprep.subr.bf16.mxu0 0
        %1444 = vmatpush1.bf16.msra.mxu0 0
        %1445 = vmatprep.subr.bf16.mxu0 0
        %1446 = vmatpush1.bf16.msra.mxu0 0
        %1447 = vmatprep.subr.bf16.mxu0 0
        %1448 = vmatpush1.bf16.msra.mxu0 0
        %1449 = vmatprep.subr.bf16.mxu0 0
        %1450 = vmatpush1.bf16.msra.mxu0 0
        %1451 = vmatprep.subr.bf16.mxu0 0
        %1452 = vmatpush1.bf16.msra.mxu0 0
        %1453 = vmatprep.subr.bf16.mxu0 0
        %1454 = vmatpush1.bf16.msra.mxu0 0
        %1455 = vmatprep.subr.bf16.mxu0 0
        %1456 = vmatpush1.bf16.msra.mxu0 0
        %1457 = vmatprep.mubr.bf16.mxu0 0
        %1458 = vmatmul.mubr.bf16.gmra.mrb[0].mxu0 %v1423
        %v1459 = vpop.f32.mrb[0].mxu0
        %v1460 = vadd.f32 %v1395, %v1459
        %v1461 = vpop.f32.mrb[0].mxu0
        %v1462 = vpop.f32.mrb[0].mxu0
        %v1463 = vpop.f32.mrb[0].mxu0
        %1464 = vdwg.mxu0
        %v1465 = vadd.f32 %v1460, %v1304
        %v1466 = vld [vmem:[%s12] sm:$0x1]
        %v1467 = vld [vmem:[%s13] sm:$0x1]
        %v1468 = vsel %vm683, %v1465, 0.0
        %1469 = vadd.xlane.f32.xlu0 %v1468
        %v1470 = vpop.xlane.xlu0 %1469
        %v1471 = vmul.f32 %v1470, %v1280
        %v1472 = vsub.f32 %v1465, %v1471
        %v1473 = vmul.f32 %v1472, %v1472
        %v1474 = vsel %vm683, %v1473, 0.0
        %1475 = vadd.xlane.f32.xlu0 %v1474
        %v1476 = vpop.xlane.xlu0 %1475
        %v1477 = vmul.f32 %v1476, %v1280
        %v1478 = vadd.f32 %v1477, 1e-12
        %v1479 = vrsqrt.pop %v1478
        %v1480 = vmul.f32 %v1472, %v1479
        %v1482 = vlaneseq
        %v1483 = vshrl.u32 %v1482, 7
        %v1484 = vsub.s32 0, %v1483
        %v1485 = vrot.slane %v1466, %v1484
        %v1487 = vmul.f32 %v1480, %v1485
        %v1489 = vlaneseq
        %v1490 = vshrl.u32 %v1489, 7
        %v1491 = vsub.s32 0, %v1490
        %v1492 = vrot.slane %v1467, %v1491
        %v1494 = vadd.f32 %v1487, %v1492
        %1495 = vst.msk [vmem:[%s635] sm:$0xff] %vm683, %v1494
        %v1496 = vpack.c.bf16 %v1494, %v1494
        %v1497 = vld [vmem:[%s14] sm:$0xf]
        %v1498 = vld [vmem:[%s14 + $0x4] sm:$0xf]
        %v1499 = vld [vmem:[%s14 + $0x8] sm:$0xf]
        %v1500 = vld [vmem:[%s14 + $0xc] sm:$0xf]
        %v1501 = vld [vmem:[%s15] sm:$0x1]
        %v1506 = vunpack.c.l.b16 %v1497
        %v1507 = vunpack.c.l.b16 %v1498
        %v1508 = vunpack.c.l.b16 %v1499
        %v1509 = vunpack.c.l.b16 %v1500
        %v1510 = vpack.c.b16 %v1507, %v1506
        %v1511 = vpack.c.b16 %v1509, %v1508
        %v1515 = vsel %vm683, %v1496, 0
        %1517 = vmatprep.subr.bf16.mxu0 0
        %1518 = vmatpush1.bf16.msra.mxu0 %v1510
        %1519 = vmatprep.subr.bf16.mxu0 0
        %1520 = vmatpush1.bf16.msra.mxu0 %v1511
        %1521 = vmatprep.subr.bf16.mxu0 0
        %1522 = vmatpush1.bf16.msra.mxu0 0
        %1523 = vmatprep.subr.bf16.mxu0 0
        %1524 = vmatpush1.bf16.msra.mxu0 0
        %1525 = vmatprep.subr.bf16.mxu0 0
        %1526 = vmatpush1.bf16.msra.mxu0 0
        %1527 = vmatprep.subr.bf16.mxu0 0
        %1528 = vmatpush1.bf16.msra.mxu0 0
        %1529 = vmatprep.subr.bf16.mxu0 0
        %1530 = vmatpush1.bf16.msra.mxu0 0
        %1531 = vmatprep.subr.bf16.mxu0 0
        %1532 = vmatpush1.bf16.msra.mxu0 0
        %1533 = vmatprep.subr.bf16.mxu0 0
        %1534 = vmatpush1.bf16.msra.mxu0 0
        %1535 = vmatprep.subr.bf16.mxu0 0
        %1536 = vmatpush1.bf16.msra.mxu0 0
        %1537 = vmatprep.subr.bf16.mxu0 0
        %1538 = vmatpush1.bf16.msra.mxu0 0
        %1539 = vmatprep.subr.bf16.mxu0 0
        %1540 = vmatpush1.bf16.msra.mxu0 0
        %1541 = vmatprep.subr.bf16.mxu0 0
        %1542 = vmatpush1.bf16.msra.mxu0 0
        %1543 = vmatprep.subr.bf16.mxu0 0
        %1544 = vmatpush1.bf16.msra.mxu0 0
        %1545 = vmatprep.subr.bf16.mxu0 0
        %1546 = vmatpush1.bf16.msra.mxu0 0
        %1547 = vmatprep.subr.bf16.mxu0 0
        %1548 = vmatpush1.bf16.msra.mxu0 0
        %1549 = vmatprep.mubr.bf16.mxu0 0
        %1550 = vmatmul.mubr.bf16.gmra.mrb[0].mxu0 %v1515
        %v1551 = vpop.f32.mrb[0].mxu0
        %v1552 = vadd.f32 %v1501, %v1551
        %v1553 = vpop.f32.mrb[0].mxu0
        %v1554 = vpop.f32.mrb[0].mxu0
        %v1555 = vpop.f32.mrb[0].mxu0
        %1556 = vdwg.mxu0
        %v1557 = vtanh.pop %v1552
        %v1558 = vpack.c.bf16 %v1557, %v1557
        %v1559 = vld [vmem:[%s16] sm:$0xf]
        %v1560 = vld [vmem:[%s16 + $0x4] sm:$0xf]
        %v1561 = vld [vmem:[%s16 + $0x8] sm:$0xf]
        %v1562 = vld [vmem:[%s16 + $0xc] sm:$0xf]
        %v1563 = vld [vmem:[%s17] sm:$0x1]
        %v1568 = vunpack.c.l.b16 %v1559
        %v1569 = vunpack.c.l.b16 %v1560
        %v1570 = vunpack.c.l.b16 %v1561
        %v1571 = vunpack.c.l.b16 %v1562
        %v1572 = vpack.c.b16 %v1569, %v1568
        %v1573 = vpack.c.b16 %v1571, %v1570
        %v1577 = vsel %vm683, %v1558, 0
        %1579 = vmatprep.subr.bf16.mxu0 0
        %1580 = vmatpush1.bf16.msra.mxu0 %v1572
        %1581 = vmatprep.subr.bf16.mxu0 0
        %1582 = vmatpush1.bf16.msra.mxu0 %v1573
        %1583 = vmatprep.subr.bf16.mxu0 0
        %1584 = vmatpush1.bf16.msra.mxu0 0
        %1585 = vmatprep.subr.bf16.mxu0 0
        %1586 = vmatpush1.bf16.msra.mxu0 0
        %1587 = vmatprep.subr.bf16.mxu0 0
        %1588 = vmatpush1.bf16.msra.mxu0 0
        %1589 = vmatprep.subr.bf16.mxu0 0
        %1590 = vmatpush1.bf16.msra.mxu0 0
        %1591 = vmatprep.subr.bf16.mxu0 0
        %1592 = vmatpush1.bf16.msra.mxu0 0
        %1593 = vmatprep.subr.bf16.mxu0 0
        %1594 = vmatpush1.bf16.msra.mxu0 0
        %1595 = vmatprep.subr.bf16.mxu0 0
        %1596 = vmatpush1.bf16.msra.mxu0 0
        %1597 = vmatprep.subr.bf16.mxu0 0
        %1598 = vmatpush1.bf16.msra.mxu0 0
        %1599 = vmatprep.subr.bf16.mxu0 0
        %1600 = vmatpush1.bf16.msra.mxu0 0
        %1601 = vmatprep.subr.bf16.mxu0 0
        %1602 = vmatpush1.bf16.msra.mxu0 0
        %1603 = vmatprep.subr.bf16.mxu0 0
        %1604 = vmatpush1.bf16.msra.mxu0 0
        %1605 = vmatprep.subr.bf16.mxu0 0
        %1606 = vmatpush1.bf16.msra.mxu0 0
        %1607 = vmatprep.subr.bf16.mxu0 0
        %1608 = vmatpush1.bf16.msra.mxu0 0
        %1609 = vmatprep.subr.bf16.mxu0 0
        %1610 = vmatpush1.bf16.msra.mxu0 0
        %1611 = vmatprep.mubr.bf16.mxu0 0
        %1612 = vmatmul.mubr.bf16.gmra.mrb[0].mxu0 %v1577
        %v1613 = vpop.f32.mrb[0].mxu0
        %v1614 = vadd.f32 %v1563, %v1613
        %v1615 = vpop.f32.mrb[0].mxu0
        %v1616 = vpop.f32.mrb[0].mxu0
        %v1617 = vpop.f32.mrb[0].mxu0
        %1618 = vdwg.mxu0
        %vm1619 = vcmask 8192
        %1620 = vst.msk [vmem:[%s648] sm:$0x1] %vm1619, %v1614
        %s1621 = sand.u32 %s434, 1
        %s1622 = scalar_lea.sflag [#allocation3], %s1621
        %s1623 = sand.u32 %s434, 1
        %s1624 = smul.addr %s1623, 8
        %s1625 = scalar_lea.vmem [#allocation2], %s1624
        %s1626 = sand.u32 %s38, 1
        %s1627 = scalar_lea.sflag [#allocation5], %s1626
        %s1628 = sand.u32 %s460, 1
        %s1629 = smul.addr %s1628, 32
        %s1630 = scalar_lea.vmem [#allocation4], %s1629
        %s1631 = sand.u32 %s38, 1
        %s1632 = scalar_lea.sflag [#allocation5], %s1631
        %s1633 = sand.u32 %s486, 1
        %s1634 = scalar_lea.vmem [#allocation6], %s1633
        // Predicated region
        $region93: #{bert_classifier_forward.5} parent=91 // pred_check
          %p1635 = pneg %p444
        $region94: #{bert_classifier_forward.5} parent=91 // pred_check_branch
          %1637 = sbr.rel (%p1635) target = $region96
        $region95: #{bert_classifier_forward.5} parent=91 // pred_region
          %s1639 = ssub.s32 128, 128
          %1640 = vsyncadd %s1622, %s1639
          %s1641 = smul.addr %s38, 128
          %s1642 = scalar_lea.hbm %s18, %s1641
          %s1644 = sshll.u32 %s1625, 4
          %s1645 = int_to_ptr.vmem [resolvable:$true] %s1644
          %1647 = dma.vmem_to_hbm [thread:$0]  %s1645, 128, %s1642, %s1622
        $region96: #{bert_classifier_forward.5} parent=91 // pred_fallthru
          _
        // Predicated region
        $region97: #{bert_classifier_forward.5} parent=91 // pred_check
          %p1648 = pneg %p470
        $region98: #{bert_classifier_forward.5} parent=91 // pred_check_branch
          %1650 = sbr.rel (%p1648) target = $region100
        $region99: #{bert_classifier_forward.5} parent=91 // pred_region
          %s1652 = ssub.s32 512, 512
          %1653 = vsyncadd %s1627, %s1652
          %s1654 = smul.addr %s38, 4
          %s1655 = smul.addr %s1654, 128
          %s1656 = scalar_lea.hbm %s19, %s1655
          %s1657 = sshll.u32 %s1630, 4
          %s1658 = int_to_ptr.vmem [resolvable:$true] %s1657
          %1663 = dma.vmem_to_hbm [thread:$0]  %s1658, 512, %s1656, %s1627, 128, 128, 8
        $region100: #{bert_classifier_forward.5} parent=91 // pred_fallthru
          _
        // Predicated region
        $region101: #{bert_classifier_forward.5} parent=91 // pred_check
          %p1664 = pneg %p496
        $region102: #{bert_classifier_forward.5} parent=91 // pred_check_branch
          %1666 = sbr.rel (%p1664) target = $region104
        $region103: #{bert_classifier_forward.5} parent=91 // pred_region
          %s1668 = ssub.s32 16, 16
          %1669 = vsyncadd %s1632, %s1668
          %s1670 = smul.addr %s38, 16
          %s1671 = scalar_lea.hbm %s20, %s1670
          %s1673 = sshll.u32 %s1634, 4
          %s1674 = int_to_ptr.vmem [resolvable:$true] %s1673
          %1676 = dma.vmem_to_hbm [thread:$0]  %s1674, 16, %s1671, %s1632
        $region104: #{bert_classifier_forward.5} parent=91 // pred_fallthru
          _
      $region92: #{bert_classifier_forward.5} parent=5 // pred_fallthru
        _
      %p1677 = scmp.le.s32.totalorder 2, %s33
      // Predicated region
      $region105: #{bert_classifier_forward.5} parent=5 // pred_check
        %p1678 = pneg %p1677
      $region106: #{bert_classifier_forward.5} parent=5 // pred_check_branch
        %1680 = sbr.rel (%p1678) target = $region108
      $region107: #{bert_classifier_forward.5} parent=5 // pred_region
        %s1681 = ssub.s32 %s33, 2
        // Predicated region
        $region109: #{bert_classifier_forward.5} parent=107 // pred_check
          %p1682 = pneg %p450
        $region110: #{bert_classifier_forward.5} parent=107 // pred_check_branch
          %1684 = sbr.rel (%p1682) target = $region112
        $region111: #{bert_classifier_forward.5} parent=107 // pred_region
          %s1685 = sand.u32 %s435, 1
          %s1686 = scalar_lea.sflag [#allocation3], %s1685
          %s1687 = sand.u32 %s435, 1
          %s1688 = smul.addr %s1687, 8
          %s1689 = scalar_lea.vmem [#allocation2], %s1688
          %1690 = dma.done %s1686, 128
        $region112: #{bert_classifier_forward.5} parent=107 // pred_fallthru
          _
        // Predicated region
        $region113: #{bert_classifier_forward.5} parent=107 // pred_check
          %p1691 = pneg %p476
        $region114: #{bert_classifier_forward.5} parent=107 // pred_check_branch
          %1693 = sbr.rel (%p1691) target = $region116
        $region115: #{bert_classifier_forward.5} parent=107 // pred_region
          %s1694 = sand.u32 %s39, 1
          %s1695 = scalar_lea.sflag [#allocation5], %s1694
          %s1696 = sand.u32 %s461, 1
          %s1697 = smul.addr %s1696, 32
          %s1698 = scalar_lea.vmem [#allocation4], %s1697
          %1699 = dma.done %s1695, 512
        $region116: #{bert_classifier_forward.5} parent=107 // pred_fallthru
          _
        // Predicated region
        $region117: #{bert_classifier_forward.5} parent=107 // pred_check
          %p1700 = pneg %p502
        $region118: #{bert_classifier_forward.5} parent=107 // pred_check_branch
          %1702 = sbr.rel (%p1700) target = $region120
        $region119: #{bert_classifier_forward.5} parent=107 // pred_region
          %s1703 = sand.u32 %s39, 1
          %s1704 = scalar_lea.sflag [#allocation5], %s1703
          %s1705 = sand.u32 %s487, 1
          %s1706 = scalar_lea.vmem [#allocation6], %s1705
          %1707 = dma.done %s1704, 16
        $region120: #{bert_classifier_forward.5} parent=107 // pred_fallthru
          _
      $region108: #{bert_classifier_forward.5} parent=5 // pred_fallthru
        _
    $region6: #{bert_classifier_forward.5} parent=1 // loop_footer
      %s37 = sadd.s32 1, %s33
    $region7: #{bert_classifier_forward.5} parent=1 // loop_footer_branch
      %32 = sbr.rel target = $region3
    $region8: #{bert_classifier_forward.5} parent=1 // loop_exit
      _
    %1708 = vsyncpa [#allocation3], 1
    %s1709 = scalar_lea.sflag [#allocation3], 1
    %1710 = vsyncpa %s1709, 1
    %1711 = vsyncpa [#allocation5], 1
    %s1712 = scalar_lea.sflag [#allocation5], 1
    %1713 = vsyncpa %s1712, 1

</llo_original>
